<compile_context>
chip_gen: v7x
topology: tpu7x:2x2x1
jax: 0.10.0
libtpu: 0.0.40
codegen_flags: <defaults>
</compile_context>

<pallas_src>
import functools

import jax
import jax.numpy as jnp
from jax.experimental import pallas as pl
from jax.experimental.pallas import tpu as pltpu

_MM_DTYPE = jnp.bfloat16      # MXU operand dtype (accumulation is always f32)
_LN_EPS = 1e-5


def _window_attn_kernel(x_ref, gamma_ref, beta_ref, wqkv_ref, bqkv_ref,
                        wo_ref, bo_ref, o_ref, *, num_heads):
    rw, ws, C = x_ref.shape          # rw = row_block*ws image rows, ws window columns
    R = rw // ws                     # windows in this block
    S = ws * ws                      # tokens per window
    N = rw * ws                      # tokens in this block (= R * S)
    H = num_heads
    hd = C // H

    # ---- LayerNorm over C for every token (f32, VPU).
    #      (rw, ws, C) -> (N, C) is a free leading-dim merge (ws == sublane count). ----
    x = x_ref[...].reshape(N, C).astype(jnp.float32)
    mu = jnp.mean(x, axis=-1, keepdims=True)
    var = jnp.mean(jnp.square(x - mu), axis=-1, keepdims=True)
    xn = (x - mu) * jax.lax.rsqrt(var + _LN_EPS) * gamma_ref[...] + beta_ref[...]

    # ---- fused QKV projection for the whole block: (N, C) @ (C, 3C), bf16 MXU / f32 acc.
    #      The 1/sqrt(hd) query scale is pre-folded into wqkv/bqkv by the wrapper. ----
    qkv = jnp.dot(xn.astype(_MM_DTYPE), wqkv_ref[...],
                  preferred_element_type=jnp.float32) + bqkv_ref[...]      # (N, 3C) f32

    # ---- (window, head)-batched attention: fold heads into the batch axis once. ----
    def split_heads(base):
        heads = [qkv[:, base + h * hd: base + (h + 1) * hd] for h in range(H)]
        return jnp.stack(heads, axis=0).reshape(H * R, S, hd)             # (H*R, S, hd)

    qb = split_heads(0 * C)
    kb = split_heads(1 * C)
    vb = split_heads(2 * C)

    s = jnp.einsum('bqd,bkd->bqk', qb.astype(_MM_DTYPE), kb.astype(_MM_DTYPE),
                   preferred_element_type=jnp.float32)                    # (H*R, S, S)
    s = s - jnp.max(s, axis=-1, keepdims=True)
    p = jnp.exp(s)
    p = p * pl.reciprocal(jnp.sum(p, axis=-1, keepdims=True), approx=True)
    ob = jnp.einsum('bqk,bkd->bqd', p.astype(_MM_DTYPE), vb.astype(_MM_DTYPE),
                    preferred_element_type=jnp.float32)                    # (H*R, S, hd)

    # ---- merge heads and apply ONE fused output projection over all tokens. ----
    ob = ob.reshape(H, N, hd)
    attn = jnp.concatenate([ob[h] for h in range(H)], axis=-1)             # (N, C)
    y = jnp.dot(attn.astype(_MM_DTYPE), wo_ref[...],
                preferred_element_type=jnp.float32) + bo_ref[...]          # (N, C)
    o_ref[...] = y.reshape(rw, ws, C).astype(o_ref.dtype)


def _pick_row_block(num_window_rows, target_windows=32):
    """Largest divisor of num_window_rows with at most `target_windows` windows per step."""
    best = 1
    for r in range(1, num_window_rows + 1):
        if num_window_rows % r == 0 and r <= target_windows:
            best = r
    return best


def _prepare_kernel_params(params, num_heads):
    """Pre-cast matmul weights to bf16 and fold the 1/sqrt(hd) query scale into W_q / b_q."""
    C = params["wo_t"].shape[0]
    hd = C // num_heads
    scale = 1.0 / float(hd) ** 0.5
    col_scale = jnp.concatenate([jnp.full((C,), scale, jnp.float32),
                                 jnp.ones((2 * C,), jnp.float32)])
    return {
        "ln_gamma": params["ln_gamma"].astype(jnp.float32),
        "ln_beta": params["ln_beta"].astype(jnp.float32),
        "wqkv_t": (params["wqkv_t"] * col_scale[None, :]).astype(_MM_DTYPE),
        "bqkv": (params["bqkv"] * col_scale[None, :]).astype(jnp.float32),
        "wo_t": params["wo_t"].astype(_MM_DTYPE),
        "bo": params["bo"].astype(jnp.float32),
    }


def window_attention_pallas(x_img, kparams, *, num_heads, window_size, row_block):
    """x_img: (B*Hp, Wp, C) padded image rows; returns the same shape."""
    BHp, Wp, C = x_img.shape
    ws = window_size
    rw = row_block * ws
    nw = Wp // ws
    kernel = functools.partial(_window_attn_kernel, num_heads=num_heads)
    return pl.pallas_call(
        kernel,
        out_shape=jax.ShapeDtypeStruct((BHp, Wp, C), x_img.dtype),
        grid=(BHp // rw, nw),
        in_specs=[
            pl.BlockSpec((rw, ws, C), lambda i, j: (i, j, 0)),   # row-block x window-col tile
            pl.BlockSpec((1, C), lambda i, j: (0, 0)),           # ln gamma (f32)
            pl.BlockSpec((1, C), lambda i, j: (0, 0)),           # ln beta  (f32)
            pl.BlockSpec((C, 3 * C), lambda i, j: (0, 0)),       # Wqkv^T (bf16, q pre-scaled)
            pl.BlockSpec((1, 3 * C), lambda i, j: (0, 0)),       # bqkv   (f32,  q pre-scaled)
            pl.BlockSpec((C, C), lambda i, j: (0, 0)),           # Wo^T   (bf16)
            pl.BlockSpec((1, C), lambda i, j: (0, 0)),           # bo     (f32)
        ],
        out_specs=pl.BlockSpec((rw, ws, C), lambda i, j: (i, j, 0)),
        compiler_params=pltpu.CompilerParams(
            dimension_semantics=("parallel", "parallel"),
            vmem_limit_bytes=48 * 1024 * 1024),
    )(x_img, kparams["ln_gamma"], kparams["ln_beta"], kparams["wqkv_t"],
      kparams["bqkv"], kparams["wo_t"], kparams["bo"])


def attention_branch_forward(x, h, w, params, num_heads=4, window_size=8):
    """Mirrors AttentionBranch.forward(x, h, w). x: (B, h*w, C)."""
    B, L, C = x.shape
    assert L == h * w and C % num_heads == 0
    ws = window_size
    xi = x.reshape(B, h, w, C)
    pad_h = (-h) % ws
    pad_w = (-w) % ws
    if pad_h or pad_w:
        # zero padding, no attention mask — matches the PyTorch module exactly.
        xi = jnp.pad(xi, ((0, 0), (0, pad_h), (0, pad_w), (0, 0)))
    Hp, Wp = h + pad_h, w + pad_w
    nh = Hp // ws

    # Window partition is expressed entirely by the 2-D grid / BlockSpec on this
    # (B*Hp, Wp, C) view — the reshape below is free (no HBM transpose).
    x_img = xi.reshape(B * Hp, Wp, C)
    row_block = _pick_row_block(B * nh)
    kparams = _prepare_kernel_params(params, num_heads)

    y_img = window_attention_pallas(x_img, kparams, num_heads=num_heads,
                                    window_size=ws, row_block=row_block)

    y = y_img.reshape(B, Hp, Wp, C)
    if pad_h or pad_w:
        y = y[:, :h, :w, :]
    return y.reshape(B, h * w, C)


def reference_attention_branch(x, h, w, params, num_heads=4, window_size=8):
    """Pure-JAX f32 reference of the full module (transpose-based window partition)."""
    B, L, C = x.shape
    ws = window_size
    xi = x.reshape(B, h, w, C)
    pad_h = (-h) % ws
    pad_w = (-w) % ws
    if pad_h or pad_w:
        xi = jnp.pad(xi, ((0, 0), (0, pad_h), (0, pad_w), (0, 0)))
    Hp, Wp = h + pad_h, w + pad_w
    nh, nw = Hp // ws, Wp // ws
    xw = xi.reshape(B, nh, ws, nw, ws, C).transpose(0, 1, 3, 2, 4, 5)
    xw = xw.reshape(-1, ws * ws, C)

    gamma = params["ln_gamma"][0]
    beta = params["ln_beta"][0]
    mu = xw.mean(-1, keepdims=True)
    var = ((xw - mu) ** 2).mean(-1, keepdims=True)
    xn = (xw - mu) / jnp.sqrt(var + _LN_EPS) * gamma + beta
    qkv = xn @ params["wqkv_t"] + params["bqkv"][0]
    NW, S, _ = xw.shape
    hd = C // num_heads
    q, k, v = jnp.split(qkv, 3, axis=-1)
    q = q.reshape(NW, S, num_heads, hd).transpose(0, 2, 1, 3)
    k = k.reshape(NW, S, num_heads, hd).transpose(0, 2, 1, 3)
    v = v.reshape(NW, S, num_heads, hd).transpose(0, 2, 1, 3)
    s = jnp.einsum("nhqd,nhkd->nhqk", q, k) / jnp.sqrt(hd)
    p = jax.nn.softmax(s, axis=-1)
    o = jnp.einsum("nhqk,nhkd->nhqd", p, v).transpose(0, 2, 1, 3).reshape(NW, S, C)
    yw = o @ params["wo_t"] + params["bo"][0]

    y = yw.reshape(B, nh, nw, ws, ws, C).transpose(0, 1, 3, 2, 4, 5).reshape(B, Hp, Wp, C)
    if pad_h or pad_w:
        y = y[:, :h, :w, :]
    return y.reshape(B, h * w, C)


def make_params(key, dim):
    """Synthetic parameters matching nn.LayerNorm(dim) + nn.MultiheadAttention(dim)."""
    k1, k2, k3, k4 = jax.random.split(key, 4)
    in_proj_w = jax.random.normal(k1, (3 * dim, dim), jnp.float32) * 0.05   # (3C, C)
    in_proj_b = jax.random.normal(k2, (3 * dim,), jnp.float32) * 0.02
    out_proj_w = jax.random.normal(k3, (dim, dim), jnp.float32) * 0.05      # (C, C)
    out_proj_b = jax.random.normal(k4, (dim,), jnp.float32) * 0.02
    return {
        "ln_gamma": jnp.ones((1, dim), jnp.float32),
        "ln_beta": jnp.zeros((1, dim), jnp.float32),
        "wqkv_t": in_proj_w.T,                        # (C, 3C): y = x @ W^T + b
        "bqkv": in_proj_b.reshape(1, 3 * dim),
        "wo_t": out_proj_w.T,                         # (C, C)
        "bo": out_proj_b.reshape(1, dim),
    }


if __name__ == "__main__":
    dim, num_heads, window_size = 32, 4, 8
    B, h, w = 2, 12, 12                               # exercises the padding path (Hp=Wp=16)

    key = jax.random.PRNGKey(0)
    kx, kx2, kp = jax.random.split(key, 3)
    x = jax.random.normal(kx, (B, h * w, dim), jnp.float32)
    params = make_params(kp, dim)

    out = attention_branch_forward(x, h, w, params,
                                   num_heads=num_heads, window_size=window_size)
    out = jax.block_until_ready(out)
    assert out.shape == (B, h * w, dim)

    # Validate against a pure-f32 reference of the full module.  Tolerance covers the
    # bf16 MXU operands and the approximate softmax reciprocal used in the kernel.
    ref = reference_attention_branch(x, h, w, params,
                                     num_heads=num_heads, window_size=window_size)
    assert jnp.allclose(out, ref, atol=2e-2, rtol=2e-2), "mismatch vs reference (padded)"

    # Also exercise the no-padding path.
    h2 = w2 = 16
    x2 = jax.random.normal(kx2, (B, h2 * w2, dim), jnp.float32)
    out2 = attention_branch_forward(x2, h2, w2, params,
                                    num_heads=num_heads, window_size=window_size)
    out2 = jax.block_until_ready(out2)
    ref2 = reference_attention_branch(x2, h2, w2, params,
                                      num_heads=num_heads, window_size=window_size)
    assert jnp.allclose(out2, ref2, atol=2e-2, rtol=2e-2), "mismatch vs reference (unpadded)"

    print("KERNEL_OK")
</pallas_src>

<mosaic_0001>
module attributes {stable_mosaic.version = 11 : i64} {
  func.func @_window_attn_kernel(%arg0: i32, %arg1: i32, %arg2: memref<32x8x32xf32, #tpu.memory_space<vmem>>, %arg3: memref<1x32xf32, #tpu.memory_space<vmem>>, %arg4: memref<1x32xf32, #tpu.memory_space<vmem>>, %arg5: memref<32x96xbf16, #tpu.memory_space<vmem>>, %arg6: memref<1x96xf32, #tpu.memory_space<vmem>>, %arg7: memref<32x32xbf16, #tpu.memory_space<vmem>>, %arg8: memref<1x32xf32, #tpu.memory_space<vmem>>, %arg9: memref<32x8x32xf32, #tpu.memory_space<vmem>>) attributes {dimension_semantics = [#tpu.dimension_semantics<parallel>, #tpu.dimension_semantics<parallel>], iteration_bounds = array<i64: 1, 2>, scalar_prefetch = 0 : i64, scratch_operands = 0 : i64, tpu.core_type = #tpu.core_type<tc>, window_params = [{transform_indices = @transform_0, window_bounds = array<i64: 32, 8, 32>}, {pipeline_mode = #tpu.pipeline_mode<synchronous>, transform_indices = @transform_1, window_bounds = array<i64: 1, 32>}, {pipeline_mode = #tpu.pipeline_mode<synchronous>, transform_indices = @transform_2, window_bounds = array<i64: 1, 32>}, {pipeline_mode = #tpu.pipeline_mode<synchronous>, transform_indices = @transform_3, window_bounds = array<i64: 32, 96>}, {pipeline_mode = #tpu.pipeline_mode<synchronous>, transform_indices = @transform_4, window_bounds = array<i64: 1, 96>}, {pipeline_mode = #tpu.pipeline_mode<synchronous>, transform_indices = @transform_5, window_bounds = array<i64: 32, 32>}, {pipeline_mode = #tpu.pipeline_mode<synchronous>, transform_indices = @transform_6, window_bounds = array<i64: 1, 32>}, {transform_indices = @transform_7, window_bounds = array<i64: 32, 8, 32>}]} {
    %c0 = arith.constant 0 : index
    %c0_0 = arith.constant 0 : index
    %c0_1 = arith.constant 0 : index
    %0 = vector.load %arg2[%c0, %c0_0, %c0_1] : memref<32x8x32xf32, #tpu.memory_space<vmem>>, vector<32x8x32xf32>
    %1 = vector.shape_cast %0 : vector<32x8x32xf32> to vector<256x32xf32>
    %cst = arith.constant dense<0.000000e+00> : vector<256xf32>
    %2 = vector.multi_reduction <add>, %1, %cst [1] : vector<256x32xf32> to vector<256xf32>
    %3 = vector.shape_cast %2 : vector<256xf32> to vector<256x1xf32>
    %cst_2 = arith.constant 3.200000e+01 : f32
    %4 = vector.broadcast %cst_2 : f32 to vector<256x1xf32>
    %5 = arith.divf %3, %4 : vector<256x1xf32>
    %6 = vector.broadcast %5 : vector<256x1xf32> to vector<256x32xf32>
    %7 = arith.subf %1, %6 : vector<256x32xf32>
    %8 = arith.mulf %7, %7 : vector<256x32xf32>
    %cst_3 = arith.constant dense<0.000000e+00> : vector<256xf32>
    %9 = vector.multi_reduction <add>, %8, %cst_3 [1] : vector<256x32xf32> to vector<256xf32>
    %10 = vector.shape_cast %9 : vector<256xf32> to vector<256x1xf32>
    %cst_4 = arith.constant 3.200000e+01 : f32
    %11 = vector.broadcast %cst_4 : f32 to vector<256x1xf32>
    %12 = arith.divf %10, %11 : vector<256x1xf32>
    %13 = vector.broadcast %5 : vector<256x1xf32> to vector<256x32xf32>
    %14 = arith.subf %1, %13 : vector<256x32xf32>
    %cst_5 = arith.constant 9.99999974E-6 : f32
    %15 = vector.broadcast %cst_5 : f32 to vector<256x1xf32>
    %16 = arith.addf %12, %15 : vector<256x1xf32>
    %17 = math.rsqrt %16 : vector<256x1xf32>
    %18 = vector.broadcast %17 : vector<256x1xf32> to vector<256x32xf32>
    %19 = arith.mulf %14, %18 : vector<256x32xf32>
    %c0_6 = arith.constant 0 : index
    %c0_7 = arith.constant 0 : index
    %20 = vector.load %arg3[%c0_6, %c0_7] : memref<1x32xf32, #tpu.memory_space<vmem>>, vector<1x32xf32>
    %21 = vector.broadcast %20 : vector<1x32xf32> to vector<256x32xf32>
    %22 = arith.mulf %19, %21 : vector<256x32xf32>
    %c0_8 = arith.constant 0 : index
    %c0_9 = arith.constant 0 : index
    %23 = vector.load %arg4[%c0_8, %c0_9] : memref<1x32xf32, #tpu.memory_space<vmem>>, vector<1x32xf32>
    %24 = vector.broadcast %23 : vector<1x32xf32> to vector<256x32xf32>
    %25 = arith.addf %22, %24 : vector<256x32xf32>
    %26 = arith.truncf %25 : vector<256x32xf32> to vector<256x32xbf16>
    %c0_10 = arith.constant 0 : index
    %c0_11 = arith.constant 0 : index
    %27 = vector.load %arg5[%c0_10, %c0_11] : memref<32x96xbf16, #tpu.memory_space<vmem>>, vector<32x96xbf16>
    %cst_12 = arith.constant dense<0.000000e+00> : vector<256x96xf32>
    %28 = tpu.matmul %26, %27, %cst_12 {dimension_numbers = #tpu.dot_dimension_numbers<[1], [0], [0], [1], [0, 0, 1, 1], [], []>} : vector<256x32xbf16>, vector<32x96xbf16>, vector<256x96xf32> -> vector<256x96xf32>
    %c0_13 = arith.constant 0 : index
    %c0_14 = arith.constant 0 : index
    %29 = vector.load %arg6[%c0_13, %c0_14] : memref<1x96xf32, #tpu.memory_space<vmem>>, vector<1x96xf32>
    %30 = vector.broadcast %29 : vector<1x96xf32> to vector<256x96xf32>
    %31 = arith.addf %28, %30 : vector<256x96xf32>
    %32 = vector.extract_strided_slice %31 {offsets = [0, 0], sizes = [256, 8], strides = [1, 1]} : vector<256x96xf32> to vector<256x8xf32>
    %33 = vector.extract_strided_slice %31 {offsets = [0, 8], sizes = [256, 8], strides = [1, 1]} : vector<256x96xf32> to vector<256x8xf32>
    %34 = vector.extract_strided_slice %31 {offsets = [0, 16], sizes = [256, 8], strides = [1, 1]} : vector<256x96xf32> to vector<256x8xf32>
    %35 = vector.extract_strided_slice %31 {offsets = [0, 24], sizes = [256, 8], strides = [1, 1]} : vector<256x96xf32> to vector<256x8xf32>
    %36 = vector.shape_cast %32 : vector<256x8xf32> to vector<1x256x8xf32>
    %37 = vector.shape_cast %33 : vector<256x8xf32> to vector<1x256x8xf32>
    %38 = vector.shape_cast %34 : vector<256x8xf32> to vector<1x256x8xf32>
    %39 = vector.shape_cast %35 : vector<256x8xf32> to vector<1x256x8xf32>
    %40 = tpu.concatenate %36, %37, %38, %39 in 0 : vector<1x256x8xf32>, vector<1x256x8xf32>, vector<1x256x8xf32>, vector<1x256x8xf32> -> vector<4x256x8xf32>
    %41 = vector.shape_cast %40 : vector<4x256x8xf32> to vector<16x64x8xf32>
    %42 = vector.extract_strided_slice %31 {offsets = [0, 32], sizes = [256, 8], strides = [1, 1]} : vector<256x96xf32> to vector<256x8xf32>
    %43 = vector.extract_strided_slice %31 {offsets = [0, 40], sizes = [256, 8], strides = [1, 1]} : vector<256x96xf32> to vector<256x8xf32>
    %44 = vector.extract_strided_slice %31 {offsets = [0, 48], sizes = [256, 8], strides = [1, 1]} : vector<256x96xf32> to vector<256x8xf32>
    %45 = vector.extract_strided_slice %31 {offsets = [0, 56], sizes = [256, 8], strides = [1, 1]} : vector<256x96xf32> to vector<256x8xf32>
    %46 = vector.shape_cast %42 : vector<256x8xf32> to vector<1x256x8xf32>
    %47 = vector.shape_cast %43 : vector<256x8xf32> to vector<1x256x8xf32>
    %48 = vector.shape_cast %44 : vector<256x8xf32> to vector<1x256x8xf32>
    %49 = vector.shape_cast %45 : vector<256x8xf32> to vector<1x256x8xf32>
    %50 = tpu.concatenate %46, %47, %48, %49 in 0 : vector<1x256x8xf32>, vector<1x256x8xf32>, vector<1x256x8xf32>, vector<1x256x8xf32> -> vector<4x256x8xf32>
    %51 = vector.shape_cast %50 : vector<4x256x8xf32> to vector<16x64x8xf32>
    %52 = vector.extract_strided_slice %31 {offsets = [0, 64], sizes = [256, 8], strides = [1, 1]} : vector<256x96xf32> to vector<256x8xf32>
    %53 = vector.extract_strided_slice %31 {offsets = [0, 72], sizes = [256, 8], strides = [1, 1]} : vector<256x96xf32> to vector<256x8xf32>
    %54 = vector.extract_strided_slice %31 {offsets = [0, 80], sizes = [256, 8], strides = [1, 1]} : vector<256x96xf32> to vector<256x8xf32>
    %55 = vector.extract_strided_slice %31 {offsets = [0, 88], sizes = [256, 8], strides = [1, 1]} : vector<256x96xf32> to vector<256x8xf32>
    %56 = vector.shape_cast %52 : vector<256x8xf32> to vector<1x256x8xf32>
    %57 = vector.shape_cast %53 : vector<256x8xf32> to vector<1x256x8xf32>
    %58 = vector.shape_cast %54 : vector<256x8xf32> to vector<1x256x8xf32>
    %59 = vector.shape_cast %55 : vector<256x8xf32> to vector<1x256x8xf32>
    %60 = tpu.concatenate %56, %57, %58, %59 in 0 : vector<1x256x8xf32>, vector<1x256x8xf32>, vector<1x256x8xf32>, vector<1x256x8xf32> -> vector<4x256x8xf32>
    %61 = vector.shape_cast %60 : vector<4x256x8xf32> to vector<16x64x8xf32>
    %62 = arith.truncf %41 : vector<16x64x8xf32> to vector<16x64x8xbf16>
    %63 = arith.truncf %51 : vector<16x64x8xf32> to vector<16x64x8xbf16>
    "tpu.trace_start"() <{level = 10 : i32, message = "bqd,bkd->bqk"}> : () -> ()
    %cst_15 = arith.constant dense<0.000000e+00> : vector<16x64x64xf32>
    %64 = tpu.matmul %62, %63, %cst_15 {dimension_numbers = #tpu.dot_dimension_numbers<[2], [2], [1], [1], [0, 0, 0, 1, 1, 1], [0], [0]>} : vector<16x64x8xbf16>, vector<16x64x8xbf16>, vector<16x64x64xf32> -> vector<16x64x64xf32>
    "tpu.trace_stop"() : () -> ()
    %cst_16 = arith.constant dense<0xFF800000> : vector<16x64xf32>
    %65 = vector.multi_reduction <maximumf>, %64, %cst_16 [2] : vector<16x64x64xf32> to vector<16x64xf32>
    %66 = vector.shape_cast %65 : vector<16x64xf32> to vector<16x64x1xf32>
    %67 = vector.broadcast %66 : vector<16x64x1xf32> to vector<16x64x64xf32>
    %68 = arith.subf %64, %67 : vector<16x64x64xf32>
    %69 = math.exp %68 : vector<16x64x64xf32>
    %cst_17 = arith.constant dense<0.000000e+00> : vector<16x64xf32>
    %70 = vector.multi_reduction <add>, %69, %cst_17 [2] : vector<16x64x64xf32> to vector<16x64xf32>
    %71 = vector.shape_cast %70 : vector<16x64xf32> to vector<16x64x1xf32>
    %72 = tpu.reciprocal %71 {approx = true} : vector<16x64x1xf32> -> vector<16x64x1xf32>
    %73 = vector.broadcast %72 : vector<16x64x1xf32> to vector<16x64x64xf32>
    %74 = arith.mulf %69, %73 : vector<16x64x64xf32>
    %75 = arith.truncf %74 : vector<16x64x64xf32> to vector<16x64x64xbf16>
    %76 = arith.truncf %61 : vector<16x64x8xf32> to vector<16x64x8xbf16>
    "tpu.trace_start"() <{level = 10 : i32, message = "bqk,bkd->bqd"}> : () -> ()
    %cst_18 = arith.constant dense<0.000000e+00> : vector<16x64x8xf32>
    %77 = tpu.matmul %75, %76, %cst_18 {dimension_numbers = #tpu.dot_dimension_numbers<[2], [1], [1], [2], [0, 0, 0, 1, 1, 2], [0], [0]>} : vector<16x64x64xbf16>, vector<16x64x8xbf16>, vector<16x64x8xf32> -> vector<16x64x8xf32>
    "tpu.trace_stop"() : () -> ()
    %78 = vector.shape_cast %77 : vector<16x64x8xf32> to vector<4x256x8xf32>
    %79 = vector.extract_strided_slice %78 {offsets = [0, 0, 0], sizes = [1, 256, 8], strides = [1, 1, 1]} : vector<4x256x8xf32> to vector<1x256x8xf32>
    %80 = vector.shape_cast %79 : vector<1x256x8xf32> to vector<256x8xf32>
    %81 = vector.extract_strided_slice %78 {offsets = [1, 0, 0], sizes = [1, 256, 8], strides = [1, 1, 1]} : vector<4x256x8xf32> to vector<1x256x8xf32>
    %82 = vector.shape_cast %81 : vector<1x256x8xf32> to vector<256x8xf32>
    %83 = vector.extract_strided_slice %78 {offsets = [2, 0, 0], sizes = [1, 256, 8], strides = [1, 1, 1]} : vector<4x256x8xf32> to vector<1x256x8xf32>
    %84 = vector.shape_cast %83 : vector<1x256x8xf32> to vector<256x8xf32>
    %85 = vector.extract_strided_slice %78 {offsets = [3, 0, 0], sizes = [1, 256, 8], strides = [1, 1, 1]} : vector<4x256x8xf32> to vector<1x256x8xf32>
    %86 = vector.shape_cast %85 : vector<1x256x8xf32> to vector<256x8xf32>
    %87 = tpu.concatenate %80, %82, %84, %86 in 1 : vector<256x8xf32>, vector<256x8xf32>, vector<256x8xf32>, vector<256x8xf32> -> vector<256x32xf32>
    %88 = arith.truncf %87 : vector<256x32xf32> to vector<256x32xbf16>
    %c0_19 = arith.constant 0 : index
    %c0_20 = arith.constant 0 : index
    %89 = vector.load %arg7[%c0_19, %c0_20] : memref<32x32xbf16, #tpu.memory_space<vmem>>, vector<32x32xbf16>
    %cst_21 = arith.constant dense<0.000000e+00> : vector<256x32xf32>
    %90 = tpu.matmul %88, %89, %cst_21 {dimension_numbers = #tpu.dot_dimension_numbers<[1], [0], [0], [1], [0, 0, 1, 1], [], []>} : vector<256x32xbf16>, vector<32x32xbf16>, vector<256x32xf32> -> vector<256x32xf32>
    %c0_22 = arith.constant 0 : index
    %c0_23 = arith.constant 0 : index
    %91 = vector.load %arg8[%c0_22, %c0_23] : memref<1x32xf32, #tpu.memory_space<vmem>>, vector<1x32xf32>
    %92 = vector.broadcast %91 : vector<1x32xf32> to vector<256x32xf32>
    %93 = arith.addf %90, %92 : vector<256x32xf32>
    %94 = vector.shape_cast %93 : vector<256x32xf32> to vector<32x8x32xf32>
    %c0_24 = arith.constant 0 : index
    %c0_25 = arith.constant 0 : index
    %c0_26 = arith.constant 0 : index
    %95 = vector.load %arg9[%c0_24, %c0_25, %c0_26] : memref<32x8x32xf32, #tpu.memory_space<vmem>>, vector<32x8x32xf32>
    tpu.vector_store %arg9[%c0_24, %c0_25, %c0_26], %94 {strides = array<i32>} : memref<32x8x32xf32, #tpu.memory_space<vmem>>, vector<32x8x32xf32>,
    return
  }
  func.func @transform_0(%arg0: i32, %arg1: i32) -> (i32, i32, i32) {
    %c0_i32 = arith.constant 0 : i32
    %c0_i32_0 = arith.constant 0 : i32
    return %arg0, %arg1, %c0_i32 : i32, i32, i32
  }
  func.func @transform_1(%arg0: i32, %arg1: i32) -> (i32, i32) {
    %c0_i32 = arith.constant 0 : i32
    %c0_i32_0 = arith.constant 0 : i32
    %c0_i32_1 = arith.constant 0 : i32
    return %c0_i32, %c0_i32_0 : i32, i32
  }
  func.func @transform_2(%arg0: i32, %arg1: i32) -> (i32, i32) {
    %c0_i32 = arith.constant 0 : i32
    %c0_i32_0 = arith.constant 0 : i32
    %c0_i32_1 = arith.constant 0 : i32
    return %c0_i32, %c0_i32_0 : i32, i32
  }
  func.func @transform_3(%arg0: i32, %arg1: i32) -> (i32, i32) {
    %c0_i32 = arith.constant 0 : i32
    %c0_i32_0 = arith.constant 0 : i32
    %c0_i32_1 = arith.constant 0 : i32
    return %c0_i32, %c0_i32_0 : i32, i32
  }
  func.func @transform_4(%arg0: i32, %arg1: i32) -> (i32, i32) {
    %c0_i32 = arith.constant 0 : i32
    %c0_i32_0 = arith.constant 0 : i32
    %c0_i32_1 = arith.constant 0 : i32
    return %c0_i32, %c0_i32_0 : i32, i32
  }
  func.func @transform_5(%arg0: i32, %arg1: i32) -> (i32, i32) {
    %c0_i32 = arith.constant 0 : i32
    %c0_i32_0 = arith.constant 0 : i32
    %c0_i32_1 = arith.constant 0 : i32
    return %c0_i32, %c0_i32_0 : i32, i32
  }
  func.func @transform_6(%arg0: i32, %arg1: i32) -> (i32, i32) {
    %c0_i32 = arith.constant 0 : i32
    %c0_i32_0 = arith.constant 0 : i32
    %c0_i32_1 = arith.constant 0 : i32
    return %c0_i32, %c0_i32_0 : i32, i32
  }
  func.func @transform_7(%arg0: i32, %arg1: i32) -> (i32, i32, i32) {
    %c0_i32 = arith.constant 0 : i32
    %c0_i32_0 = arith.constant 0 : i32
    return %arg0, %arg1, %c0_i32 : i32, i32, i32
  }
}

</mosaic_0001>

<llo_original>
// kernel: tpu_custom_call.1
$region0: #{tpu_custom_call.1}
  #allocation0 [shape = 'u32[]', space=smem, size = 0x4, offset = 0x4, fixed_abs, tag = 'smem constant byte address 0x4 - core index']
  #allocation1 [shape = 'u32[144,128]{1,0:T(1,128)}', space=vmem, size = 0x12000, scoped, tag = 'internal scratch']
  %s0 = inlined_call_operand.hbm [shape: f32[32,16,32], index: 0, kind: input, shape index: {}]
  %s1 = inlined_call_operand.vmem [shape: f32[1,32], index: 1, kind: input, shape index: {}]
  %s2 = inlined_call_operand.vmem [shape: f32[1,32], index: 2, kind: input, shape index: {}]
  %s3 = inlined_call_operand.hbm [shape: bf16[32,96], index: 3, kind: input, shape index: {}]
  %s4 = inlined_call_operand.hbm [shape: f32[1,96], index: 4, kind: input, shape index: {}]
  %s5 = inlined_call_operand.vmem [shape: bf16[32,32], index: 5, kind: input, shape index: {}]
  %s6 = inlined_call_operand.vmem [shape: f32[1,32], index: 6, kind: input, shape index: {}]
  %s7 = inlined_call_operand.hbm [shape: f32[32,16,32], index: 7, kind: output, shape index: {}]
  %s8 = sld [smem:[#allocation0]]
  $region73: #{tpu_custom_call.1} parent=0
    _
  %s10 = ssub.s32 1, %s8
  %s11 = scalar_select 0, %s10, %s8
  $region1: #{tpu_custom_call.1} parent=0
    #allocation2 [shape = 'u8[262144]{0}', space=vmem, size = 0x40000, scoped, tag = 'input window, operand 0']
    #allocation3 [shape = 's32[2]{0}', space=sflag, size = 0x8, scoped, tag = 'scoped memory for tpu_custom_call.1']
    #allocation4 [shape = 's32[2]{0}', space=sflag, size = 0x8, scoped, tag = 'scoped memory for tpu_custom_call.1']
    #allocation5 [shape = 'u8[8192]{0}', space=vmem, size = 0x2000, scoped, tag = 'input window, operand 3, single buffered']
    #allocation6 [shape = 's32[1]{0}', space=sflag, size = 0x4, scoped, tag = 'scoped memory for tpu_custom_call.1']
    #allocation7 [shape = 'u8[512]{0}', space=vmem, size = 0x400, scoped, tag = 'input window, operand 4, single buffered']
    #allocation8 [shape = 'u8[262144]{0}', space=vmem, size = 0x40000, scoped, tag = 'output window, operand 0']
    %12 = vsyncpa [#allocation3], 0
    %s13 = scalar_lea.sflag [#allocation3], 1
    %14 = vsyncpa %s13, 0
    %15 = vsyncpa [#allocation6], 0
    %16 = vsyncpa [#allocation4], 0
    %s17 = scalar_lea.sflag [#allocation4], 1
    %18 = vsyncpa %s17, 0
    loop: start=0, step=1, limit=4
    $region2: #{tpu_custom_call.1} parent=1 // loop_pre_header
      _
    $region3: #{tpu_custom_call.1} parent=1 // loop_header
      %s20 = sphi 0, %s24
      %p21 = scmp.ge.s32.totalorder %s20, 4
      %s27 = sphi 0, %s39
      %s28 = sphi 0, %s35
      %s29 = sphi 0, %s27
      %s30 = sphi 0, %s28
      %s31 = sphi 0, %s29
      %s32 = sphi 0, %s30
      %s44 = sphi 0, %s46
      %s47 = sphi 0, %s44
      %s48 = sphi 0, %s47
      %s64 = sphi 0, %s48
      %s68 = sphi 0, %s68
      %s70 = sphi 0, %s68
      %s71 = sphi 0, %s70
      %s85 = sphi 0, %s71
      %s89 = sphi 0, %s89
      %s91 = sphi 0, %s89
      %s92 = sphi 0, %s91
      %s106 = sphi 0, %s92
      %s110 = sphi 0, %s110
      %s112 = sphi 0, %s110
      %s113 = sphi 0, %s112
      %s127 = sphi 0, %s113
      %s131 = sphi 0, %s131
      %s133 = sphi 0, %s131
      %s134 = sphi 0, %s133
      %s148 = sphi 0, %s134
      %s152 = sphi 0, %s152
      %s154 = sphi 0, %s152
      %s155 = sphi 0, %s154
      %s169 = sphi 0, %s155
      %s173 = sphi 0, %s173
      %s175 = sphi 0, %s173
      %s176 = sphi 0, %s175
      %s190 = sphi 0, %s176
      %s198 = sphi 0, %s200
      %s201 = sphi 0, %s198
      %s202 = sphi 0, %s201
      %s218 = sphi 0, %s202
    $region4: #{tpu_custom_call.1} parent=1 // loop_header_branch
      %23 = sbr.rel (%p21) target = $region8
    $region5: #{tpu_custom_call.1} parent=1 // loop_body
      %s25 = ssub.s32 %s20, 1
      %s26 = ssub.s32 %s20, 2
      %s33 = sadd.s32 1, %s28
      %p34 = scmp.ge.s32.totalorder %s33, 2
      %s35 = scalar_select %p34, 0, %s33
      %s36 = sadd.s32 1, %s27
      %s37 = scalar_select %p34, %s36, %s27
      %p38 = scmp.ge.s32.totalorder %s37, 1
      %s39 = scalar_select %p38, 0, %s37
      %s40 = ssub.s32 %s27, %s39
      %s41 = ssub.s32 %s28, %s35
      %s42 = sor.u32 %s40, %s41
      %p43 = scmp.eq.s32.totalorder %s42, 0
      %s45 = sadd.s32 %s44, 1
      %s46 = scalar_select %p43, %s44, %s45
      %p49 = pneg %p43
      %p50 = scmp.eq.s32.totalorder %s20, 1
      %p51 = por %p49, %p50
      %p52 = scmp.ne.s32.totalorder %s44, %s47
      %p53 = scmp.eq.s32.totalorder %s20, 0
      %p54 = por %p52, %p53
      %p55 = scmp.ne.s32.totalorder %s44, %s47
      %p56 = scmp.eq.s32.totalorder %s25, 1
      %p57 = por %p55, %p56
      %p58 = scmp.ne.s32.totalorder %s47, %s48
      %p59 = scmp.eq.s32.totalorder %s25, 0
      %p60 = por %p58, %p59
      %p61 = scmp.ne.s32.totalorder %s47, %s48
      %p62 = scmp.eq.s32.totalorder %s26, 1
      %p63 = por %p61, %p62
      %p65 = scmp.ne.s32.totalorder %s48, %s64
      %p66 = scmp.eq.s32.totalorder %s26, 0
      %p67 = por %p65, %p66
      %s69 = sadd.s32 %s68, 1
      %p72 = scmp.eq.s32.totalorder %s20, 1
      %p73 = scmp.ne.s32.totalorder %s68, %s70
      %p74 = scmp.eq.s32.totalorder %s20, 0
      %p75 = por %p73, %p74
      %p76 = scmp.ne.s32.totalorder %s68, %s70
      %p77 = scmp.eq.s32.totalorder %s25, 1
      %p78 = por %p76, %p77
      %p79 = scmp.ne.s32.totalorder %s70, %s71
      %p80 = scmp.eq.s32.totalorder %s25, 0
      %p81 = por %p79, %p80
      %p82 = scmp.ne.s32.totalorder %s70, %s71
      %p83 = scmp.eq.s32.totalorder %s26, 1
      %p84 = por %p82, %p83
      %p86 = scmp.ne.s32.totalorder %s71, %s85
      %p87 = scmp.eq.s32.totalorder %s26, 0
      %p88 = por %p86, %p87
      %s90 = sadd.s32 %s89, 1
      %p93 = scmp.eq.s32.totalorder %s20, 1
      %p94 = scmp.ne.s32.totalorder %s89, %s91
      %p95 = scmp.eq.s32.totalorder %s20, 0
      %p96 = por %p94, %p95
      %p97 = scmp.ne.s32.totalorder %s89, %s91
      %p98 = scmp.eq.s32.totalorder %s25, 1
      %p99 = por %p97, %p98
      %p100 = scmp.ne.s32.totalorder %s91, %s92
      %p101 = scmp.eq.s32.totalorder %s25, 0
      %p102 = por %p100, %p101
      %p103 = scmp.ne.s32.totalorder %s91, %s92
      %p104 = scmp.eq.s32.totalorder %s26, 1
      %p105 = por %p103, %p104
      %p107 = scmp.ne.s32.totalorder %s92, %s106
      %p108 = scmp.eq.s32.totalorder %s26, 0
      %p109 = por %p107, %p108
      %s111 = sadd.s32 %s110, 1
      %p114 = scmp.eq.s32.totalorder %s20, 1
      %p115 = scmp.ne.s32.totalorder %s110, %s112
      %p116 = scmp.eq.s32.totalorder %s20, 0
      %p117 = por %p115, %p116
      %p118 = scmp.ne.s32.totalorder %s110, %s112
      %p119 = scmp.eq.s32.totalorder %s25, 1
      %p120 = por %p118, %p119
      %p121 = scmp.ne.s32.totalorder %s112, %s113
      %p122 = scmp.eq.s32.totalorder %s25, 0
      %p123 = por %p121, %p122
      %p124 = scmp.ne.s32.totalorder %s112, %s113
      %p125 = scmp.eq.s32.totalorder %s26, 1
      %p126 = por %p124, %p125
      %p128 = scmp.ne.s32.totalorder %s113, %s127
      %p129 = scmp.eq.s32.totalorder %s26, 0
      %p130 = por %p128, %p129
      %s132 = sadd.s32 %s131, 1
      %p135 = scmp.eq.s32.totalorder %s20, 1
      %p136 = scmp.ne.s32.totalorder %s131, %s133
      %p137 = scmp.eq.s32.totalorder %s20, 0
      %p138 = por %p136, %p137
      %p139 = scmp.ne.s32.totalorder %s131, %s133
      %p140 = scmp.eq.s32.totalorder %s25, 1
      %p141 = por %p139, %p140
      %p142 = scmp.ne.s32.totalorder %s133, %s134
      %p143 = scmp.eq.s32.totalorder %s25, 0
      %p144 = por %p142, %p143
      %p145 = scmp.ne.s32.totalorder %s133, %s134
      %p146 = scmp.eq.s32.totalorder %s26, 1
      %p147 = por %p145, %p146
      %p149 = scmp.ne.s32.totalorder %s134, %s148
      %p150 = scmp.eq.s32.totalorder %s26, 0
      %p151 = por %p149, %p150
      %s153 = sadd.s32 %s152, 1
      %p156 = scmp.eq.s32.totalorder %s20, 1
      %p157 = scmp.ne.s32.totalorder %s152, %s154
      %p158 = scmp.eq.s32.totalorder %s20, 0
      %p159 = por %p157, %p158
      %p160 = scmp.ne.s32.totalorder %s152, %s154
      %p161 = scmp.eq.s32.totalorder %s25, 1
      %p162 = por %p160, %p161
      %p163 = scmp.ne.s32.totalorder %s154, %s155
      %p164 = scmp.eq.s32.totalorder %s25, 0
      %p165 = por %p163, %p164
      %p166 = scmp.ne.s32.totalorder %s154, %s155
      %p167 = scmp.eq.s32.totalorder %s26, 1
      %p168 = por %p166, %p167
      %p170 = scmp.ne.s32.totalorder %s155, %s169
      %p171 = scmp.eq.s32.totalorder %s26, 0
      %p172 = por %p170, %p171
      %s174 = sadd.s32 %s173, 1
      %p177 = scmp.eq.s32.totalorder %s20, 1
      %p178 = scmp.ne.s32.totalorder %s173, %s175
      %p179 = scmp.eq.s32.totalorder %s20, 0
      %p180 = por %p178, %p179
      %p181 = scmp.ne.s32.totalorder %s173, %s175
      %p182 = scmp.eq.s32.totalorder %s25, 1
      %p183 = por %p181, %p182
      %p184 = scmp.ne.s32.totalorder %s175, %s176
      %p185 = scmp.eq.s32.totalorder %s25, 0
      %p186 = por %p184, %p185
      %p187 = scmp.ne.s32.totalorder %s175, %s176
      %p188 = scmp.eq.s32.totalorder %s26, 1
      %p189 = por %p187, %p188
      %p191 = scmp.ne.s32.totalorder %s176, %s190
      %p192 = scmp.eq.s32.totalorder %s26, 0
      %p193 = por %p191, %p192
      %s194 = ssub.s32 %s27, %s39
      %s195 = ssub.s32 %s28, %s35
      %s196 = sor.u32 %s194, %s195
      %p197 = scmp.eq.s32.totalorder %s196, 0
      %s199 = sadd.s32 %s198, 1
      %s200 = scalar_select %p197, %s198, %s199
      %p203 = pneg %p197
      %p204 = scmp.eq.s32.totalorder %s20, 1
      %p205 = por %p203, %p204
      %p206 = scmp.ne.s32.totalorder %s198, %s201
      %p207 = scmp.eq.s32.totalorder %s20, 0
      %p208 = por %p206, %p207
      %p209 = scmp.ne.s32.totalorder %s198, %s201
      %p210 = scmp.eq.s32.totalorder %s25, 1
      %p211 = por %p209, %p210
      %p212 = scmp.ne.s32.totalorder %s201, %s202
      %p213 = scmp.eq.s32.totalorder %s25, 0
      %p214 = por %p212, %p213
      %p215 = scmp.ne.s32.totalorder %s201, %s202
      %p216 = scmp.eq.s32.totalorder %s26, 1
      %p217 = por %p215, %p216
      %p219 = scmp.ne.s32.totalorder %s202, %s218
      %p220 = scmp.eq.s32.totalorder %s26, 0
      %p221 = por %p219, %p220
      %p222 = scmp.le.s32.totalorder 1, %s20
      %p223 = scmp.lt.s32.totalorder %s20, 3
      %p224 = pnand %p222, %p223
      %p225 = pneg %p224
      // Predicated region
      $region9: #{tpu_custom_call.1} parent=5 // pred_check
        _
      $region10: #{tpu_custom_call.1} parent=5 // pred_check_branch
        %227 = sbr.rel (%p224) target = $region12
      $region11: #{tpu_custom_call.1} parent=5 // pred_region
        %s228 = ssub.s32 %s20, 1
        // Predicated region
        $region13: #{tpu_custom_call.1} parent=11 // pred_check
          %p229 = pneg %p81
        $region14: #{tpu_custom_call.1} parent=11 // pred_check_branch
          %231 = sbr.rel (%p229) target = $region16
        $region15: #{tpu_custom_call.1} parent=11 // pred_region
          _
        $region16: #{tpu_custom_call.1} parent=11 // pred_fallthru
          _
        // Predicated region
        $region17: #{tpu_custom_call.1} parent=11 // pred_check
          %p232 = pneg %p102
        $region18: #{tpu_custom_call.1} parent=11 // pred_check_branch
          %234 = sbr.rel (%p232) target = $region20
        $region19: #{tpu_custom_call.1} parent=11 // pred_region
          _
        $region20: #{tpu_custom_call.1} parent=11 // pred_fallthru
          _
        // Predicated region
        $region21: #{tpu_custom_call.1} parent=11 // pred_check
          %p235 = pneg %p123
        $region22: #{tpu_custom_call.1} parent=11 // pred_check_branch
          %237 = sbr.rel (%p235) target = $region24
        $region23: #{tpu_custom_call.1} parent=11 // pred_region
          %s239 = ssub.s32 256, 256
          %240 = vsyncadd [#allocation6], %s239
          %s241 = sshll.u32 [#allocation5], 4
          %s242 = int_to_ptr.vmem [resolvable:$true] %s241
          %247 = dma.hbm_to_vmem [thread:$0]  %s3, 256, %s242, [#allocation6], 64, 64, 4
        $region24: #{tpu_custom_call.1} parent=11 // pred_fallthru
          _
        // Predicated region
        $region25: #{tpu_custom_call.1} parent=11 // pred_check
          %p248 = pneg %p144
        $region26: #{tpu_custom_call.1} parent=11 // pred_check_branch
          %250 = sbr.rel (%p248) target = $region28
        $region27: #{tpu_custom_call.1} parent=11 // pred_region
          %s252 = ssub.s32 16, 16
          %253 = vsyncadd [#allocation6], %s252
          %s255 = sshll.u32 [#allocation7], 4
          %s256 = int_to_ptr.vmem [resolvable:$true] %s255
          %258 = dma.hbm_to_vmem [thread:$0]  %s4, 16, %s256, [#allocation6]
        $region28: #{tpu_custom_call.1} parent=11 // pred_fallthru
          _
        // Predicated region
        $region29: #{tpu_custom_call.1} parent=11 // pred_check
          %p259 = pneg %p165
        $region30: #{tpu_custom_call.1} parent=11 // pred_check_branch
          %261 = sbr.rel (%p259) target = $region32
        $region31: #{tpu_custom_call.1} parent=11 // pred_region
          _
        $region32: #{tpu_custom_call.1} parent=11 // pred_fallthru
          _
        // Predicated region
        $region33: #{tpu_custom_call.1} parent=11 // pred_check
          %p262 = pneg %p186
        $region34: #{tpu_custom_call.1} parent=11 // pred_check_branch
          %264 = sbr.rel (%p262) target = $region36
        $region35: #{tpu_custom_call.1} parent=11 // pred_region
          _
        $region36: #{tpu_custom_call.1} parent=11 // pred_fallthru
          _
      $region12: #{tpu_custom_call.1} parent=5 // pred_fallthru
        _
      %p265 = scmp.lt.s32.totalorder %s20, 2
      // Predicated region
      $region37: #{tpu_custom_call.1} parent=5 // pred_check
        %p266 = pneg %p265
      $region38: #{tpu_custom_call.1} parent=5 // pred_check_branch
        %268 = sbr.rel (%p266) target = $region40
      $region39: #{tpu_custom_call.1} parent=5 // pred_region
        // Predicated region
        $region41: #{tpu_custom_call.1} parent=39 // pred_check
          %p269 = pneg %p54
        $region42: #{tpu_custom_call.1} parent=39 // pred_check_branch
          %271 = sbr.rel (%p269) target = $region44
        $region43: #{tpu_custom_call.1} parent=39 // pred_region
          %s272 = sand.u32 %s44, 1
          %s273 = scalar_lea.sflag [#allocation3], %s272
          %s274 = sand.u32 %s44, 1
          %s275 = smul.addr %s274, 256
          %s276 = scalar_lea.vmem [#allocation2], %s275
          %s277 = smul.u32 32, %s27
          %s279 = ssub.s32 4096, 4096
          %280 = vsyncadd %s273, %s279
          %s281 = smul.addr %s277, 2
          %s282 = sadd.s32 %s28, %s281
          %s283 = smul.addr %s282, 128
          %s284 = scalar_lea.hbm %s0, %s283
          %s285 = sshll.u32 %s276, 4
          %s286 = int_to_ptr.vmem [resolvable:$true] %s285
          %291 = dma.hbm_to_vmem [thread:$0]  %s284, 4096, %s286, %s273, 256, 128, 8
        $region44: #{tpu_custom_call.1} parent=39 // pred_fallthru
          _
      $region40: #{tpu_custom_call.1} parent=5 // pred_fallthru
        _
      %p292 = scmp.le.s32.totalorder 1, %s20
      %p293 = scmp.lt.s32.totalorder %s20, 3
      %p294 = pnand %p292, %p293
      %p295 = pneg %p294
      // Predicated region
      $region45: #{tpu_custom_call.1} parent=5 // pred_check
        _
      $region46: #{tpu_custom_call.1} parent=5 // pred_check_branch
        %297 = sbr.rel (%p294) target = $region48
      $region47: #{tpu_custom_call.1} parent=5 // pred_region
        %s298 = ssub.s32 %s20, 1
        %s299 = sand.u32 %s47, 1
        %s300 = scalar_lea.sflag [#allocation3], %s299
        %s301 = sand.u32 %s47, 1
        %s302 = smul.addr %s301, 256
        %s303 = scalar_lea.vmem [#allocation2], %s302
        // Predicated region
        $region49: #{tpu_custom_call.1} parent=47 // pred_check
          %p304 = pneg %p60
        $region50: #{tpu_custom_call.1} parent=47 // pred_check_branch
          %306 = sbr.rel (%p304) target = $region52
        $region51: #{tpu_custom_call.1} parent=47 // pred_region
          %307 = dma.done %s300, 4096
        $region52: #{tpu_custom_call.1} parent=47 // pred_fallthru
          _
        // Predicated region
        $region53: #{tpu_custom_call.1} parent=47 // pred_check
          %p308 = pneg %p123
        $region54: #{tpu_custom_call.1} parent=47 // pred_check_branch
          %310 = sbr.rel (%p308) target = $region56
        $region55: #{tpu_custom_call.1} parent=47 // pred_region
          %311 = dma.done [#allocation6], 256
        $region56: #{tpu_custom_call.1} parent=47 // pred_fallthru
          _
        // Predicated region
        $region57: #{tpu_custom_call.1} parent=47 // pred_check
          %p312 = pneg %p144
        $region58: #{tpu_custom_call.1} parent=47 // pred_check_branch
          %314 = sbr.rel (%p312) target = $region60
        $region59: #{tpu_custom_call.1} parent=47 // pred_region
          %315 = dma.done [#allocation6], 16
        $region60: #{tpu_custom_call.1} parent=47 // pred_fallthru
          _
        %s316 = sand.u32 %s47, 1
        %s317 = scalar_lea.sflag [#allocation3], %s316
        %s318 = sand.u32 %s47, 1
        %s319 = smul.addr %s318, 256
        %s320 = scalar_lea.vmem [#allocation2], %s319
        %p321 = pneg %p60
        %p322 = pneg %p57
        %p323 = pneg %p81
        %p324 = pneg %p78
        %p325 = pneg %p102
        %p326 = pneg %p99
        %p327 = pneg %p123
        %p328 = pneg %p120
        %p329 = pneg %p144
        %p330 = pneg %p141
        %p331 = pneg %p165
        %p332 = pneg %p162
        %p333 = pneg %p186
        %p334 = pneg %p183
        %p335 = pneg %p214
        %p336 = pneg %p211
        %s337 = sand.u32 %s201, 1
        %s338 = scalar_lea.sflag [#allocation4], %s337
        %s339 = sand.u32 %s201, 1
        %s340 = smul.addr %s339, 256
        %s341 = scalar_lea.vmem [#allocation8], %s340
        %s342 = smul.u32 32, %s29
        %s343 = smul.u32 32, %s29
        %v345 = vld [vmem:[%s303] sm:$0xff]
        %v346 = vld [vmem:[%s303 + $0x8] sm:$0xff]
        %v347 = vld [vmem:[%s303 + $0x10] sm:$0xff]
        %v348 = vld [vmem:[%s303 + $0x18] sm:$0xff]
        %v349 = vld [vmem:[%s303 + $0x20] sm:$0xff]
        %v350 = vld [vmem:[%s303 + $0x28] sm:$0xff]
        %v351 = vld [vmem:[%s303 + $0x30] sm:$0xff]
        %v352 = vld [vmem:[%s303 + $0x38] sm:$0xff]
        %v353 = vld [vmem:[%s303 + $0x40] sm:$0xff]
        %v354 = vld [vmem:[%s303 + $0x48] sm:$0xff]
        %v355 = vld [vmem:[%s303 + $0x50] sm:$0xff]
        %v356 = vld [vmem:[%s303 + $0x58] sm:$0xff]
        %v357 = vld [vmem:[%s303 + $0x60] sm:$0xff]
        %v358 = vld [vmem:[%s303 + $0x68] sm:$0xff]
        %v359 = vld [vmem:[%s303 + $0x70] sm:$0xff]
        %v360 = vld [vmem:[%s303 + $0x78] sm:$0xff]
        %v361 = vld [vmem:[%s303 + $0x80] sm:$0xff]
        %v362 = vld [vmem:[%s303 + $0x88] sm:$0xff]
        %v363 = vld [vmem:[%s303 + $0x90] sm:$0xff]
        %v364 = vld [vmem:[%s303 + $0x98] sm:$0xff]
        %v365 = vld [vmem:[%s303 + $0xa0] sm:$0xff]
        %v366 = vld [vmem:[%s303 + $0xa8] sm:$0xff]
        %v367 = vld [vmem:[%s303 + $0xb0] sm:$0xff]
        %v368 = vld [vmem:[%s303 + $0xb8] sm:$0xff]
        %v369 = vld [vmem:[%s303 + $0xc0] sm:$0xff]
        %v370 = vld [vmem:[%s303 + $0xc8] sm:$0xff]
        %v371 = vld [vmem:[%s303 + $0xd0] sm:$0xff]
        %v372 = vld [vmem:[%s303 + $0xd8] sm:$0xff]
        %v373 = vld [vmem:[%s303 + $0xe0] sm:$0xff]
        %v374 = vld [vmem:[%s303 + $0xe8] sm:$0xff]
        %v375 = vld [vmem:[%s303 + $0xf0] sm:$0xff]
        %v376 = vld [vmem:[%s303 + $0xf8] sm:$0xff]
        %vm377 = vcmask 261120
        %v378 = vsel %vm377, %v345, 0.0
        %379 = vadd.xlane.f32.xlu0 %v378
        %v380 = vpop.xlane.xlu0 %379
        %v381 = vsel %vm377, %v346, 0.0
        %382 = vadd.xlane.f32.xlu0 %v381
        %v383 = vpop.xlane.xlu0 %382
        %v384 = vsel %vm377, %v347, 0.0
        %385 = vadd.xlane.f32.xlu0 %v384
        %v386 = vpop.xlane.xlu0 %385
        %v387 = vsel %vm377, %v348, 0.0
        %388 = vadd.xlane.f32.xlu0 %v387
        %v389 = vpop.xlane.xlu0 %388
        %v390 = vsel %vm377, %v349, 0.0
        %391 = vadd.xlane.f32.xlu0 %v390
        %v392 = vpop.xlane.xlu0 %391
        %v393 = vsel %vm377, %v350, 0.0
        %394 = vadd.xlane.f32.xlu0 %v393
        %v395 = vpop.xlane.xlu0 %394
        %v396 = vsel %vm377, %v351, 0.0
        %397 = vadd.xlane.f32.xlu0 %v396
        %v398 = vpop.xlane.xlu0 %397
        %v399 = vsel %vm377, %v352, 0.0
        %400 = vadd.xlane.f32.xlu0 %v399
        %v401 = vpop.xlane.xlu0 %400
        %v402 = vsel %vm377, %v353, 0.0
        %403 = vadd.xlane.f32.xlu0 %v402
        %v404 = vpop.xlane.xlu0 %403
        %v405 = vsel %vm377, %v354, 0.0
        %406 = vadd.xlane.f32.xlu0 %v405
        %v407 = vpop.xlane.xlu0 %406
        %v408 = vsel %vm377, %v355, 0.0
        %409 = vadd.xlane.f32.xlu0 %v408
        %v410 = vpop.xlane.xlu0 %409
        %v411 = vsel %vm377, %v356, 0.0
        %412 = vadd.xlane.f32.xlu0 %v411
        %v413 = vpop.xlane.xlu0 %412
        %v414 = vsel %vm377, %v357, 0.0
        %415 = vadd.xlane.f32.xlu0 %v414
        %v416 = vpop.xlane.xlu0 %415
        %v417 = vsel %vm377, %v358, 0.0
        %418 = vadd.xlane.f32.xlu0 %v417
        %v419 = vpop.xlane.xlu0 %418
        %v420 = vsel %vm377, %v359, 0.0
        %421 = vadd.xlane.f32.xlu0 %v420
        %v422 = vpop.xlane.xlu0 %421
        %v423 = vsel %vm377, %v360, 0.0
        %424 = vadd.xlane.f32.xlu0 %v423
        %v425 = vpop.xlane.xlu0 %424
        %v426 = vsel %vm377, %v361, 0.0
        %427 = vadd.xlane.f32.xlu0 %v426
        %v428 = vpop.xlane.xlu0 %427
        %v429 = vsel %vm377, %v362, 0.0
        %430 = vadd.xlane.f32.xlu0 %v429
        %v431 = vpop.xlane.xlu0 %430
        %v432 = vsel %vm377, %v363, 0.0
        %433 = vadd.xlane.f32.xlu0 %v432
        %v434 = vpop.xlane.xlu0 %433
        %v435 = vsel %vm377, %v364, 0.0
        %436 = vadd.xlane.f32.xlu0 %v435
        %v437 = vpop.xlane.xlu0 %436
        %v438 = vsel %vm377, %v365, 0.0
        %439 = vadd.xlane.f32.xlu0 %v438
        %v440 = vpop.xlane.xlu0 %439
        %v441 = vsel %vm377, %v366, 0.0
        %442 = vadd.xlane.f32.xlu0 %v441
        %v443 = vpop.xlane.xlu0 %442
        %v444 = vsel %vm377, %v367, 0.0
        %445 = vadd.xlane.f32.xlu0 %v444
        %v446 = vpop.xlane.xlu0 %445
        %v447 = vsel %vm377, %v368, 0.0
        %448 = vadd.xlane.f32.xlu0 %v447
        %v449 = vpop.xlane.xlu0 %448
        %v450 = vsel %vm377, %v369, 0.0
        %451 = vadd.xlane.f32.xlu0 %v450
        %v452 = vpop.xlane.xlu0 %451
        %v453 = vsel %vm377, %v370, 0.0
        %454 = vadd.xlane.f32.xlu0 %v453
        %v455 = vpop.xlane.xlu0 %454
        %v456 = vsel %vm377, %v371, 0.0
        %457 = vadd.xlane.f32.xlu0 %v456
        %v458 = vpop.xlane.xlu0 %457
        %v459 = vsel %vm377, %v372, 0.0
        %460 = vadd.xlane.f32.xlu0 %v459
        %v461 = vpop.xlane.xlu0 %460
        %v462 = vsel %vm377, %v373, 0.0
        %463 = vadd.xlane.f32.xlu0 %v462
        %v464 = vpop.xlane.xlu0 %463
        %v465 = vsel %vm377, %v374, 0.0
        %466 = vadd.xlane.f32.xlu0 %v465
        %v467 = vpop.xlane.xlu0 %466
        %v468 = vsel %vm377, %v375, 0.0
        %469 = vadd.xlane.f32.xlu0 %v468
        %v470 = vpop.xlane.xlu0 %469
        %v471 = vsel %vm377, %v376, 0.0
        %472 = vadd.xlane.f32.xlu0 %v471
        %v473 = vpop.xlane.xlu0 %472
        %v474 = vrcp.pop 32.0
        %v475 = vmul.f32 %v380, %v474
        %v476 = vmul.f32 %v383, %v474
        %v477 = vmul.f32 %v386, %v474
        %v478 = vmul.f32 %v389, %v474
        %v479 = vmul.f32 %v392, %v474
        %v480 = vmul.f32 %v395, %v474
        %v481 = vmul.f32 %v398, %v474
        %v482 = vmul.f32 %v401, %v474
        %v483 = vmul.f32 %v404, %v474
        %v484 = vmul.f32 %v407, %v474
        %v485 = vmul.f32 %v410, %v474
        %v486 = vmul.f32 %v413, %v474
        %v487 = vmul.f32 %v416, %v474
        %v488 = vmul.f32 %v419, %v474
        %v489 = vmul.f32 %v422, %v474
        %v490 = vmul.f32 %v425, %v474
        %v491 = vmul.f32 %v428, %v474
        %v492 = vmul.f32 %v431, %v474
        %v493 = vmul.f32 %v434, %v474
        %v494 = vmul.f32 %v437, %v474
        %v495 = vmul.f32 %v440, %v474
        %v496 = vmul.f32 %v443, %v474
        %v497 = vmul.f32 %v446, %v474
        %v498 = vmul.f32 %v449, %v474
        %v499 = vmul.f32 %v452, %v474
        %v500 = vmul.f32 %v455, %v474
        %v501 = vmul.f32 %v458, %v474
        %v502 = vmul.f32 %v461, %v474
        %v503 = vmul.f32 %v464, %v474
        %v504 = vmul.f32 %v467, %v474
        %v505 = vmul.f32 %v470, %v474
        %v506 = vmul.f32 %v473, %v474
        %v507 = vsub.f32 %v345, %v475
        %v508 = vsub.f32 %v346, %v476
        %v509 = vsub.f32 %v347, %v477
        %v510 = vsub.f32 %v348, %v478
        %v511 = vsub.f32 %v349, %v479
        %v512 = vsub.f32 %v350, %v480
        %v513 = vsub.f32 %v351, %v481
        %v514 = vsub.f32 %v352, %v482
        %v515 = vsub.f32 %v353, %v483
        %v516 = vsub.f32 %v354, %v484
        %v517 = vsub.f32 %v355, %v485
        %v518 = vsub.f32 %v356, %v486
        %v519 = vsub.f32 %v357, %v487
        %v520 = vsub.f32 %v358, %v488
        %v521 = vsub.f32 %v359, %v489
        %v522 = vsub.f32 %v360, %v490
        %v523 = vsub.f32 %v361, %v491
        %v524 = vsub.f32 %v362, %v492
        %v525 = vsub.f32 %v363, %v493
        %v526 = vsub.f32 %v364, %v494
        %v527 = vsub.f32 %v365, %v495
        %v528 = vsub.f32 %v366, %v496
        %v529 = vsub.f32 %v367, %v497
        %v530 = vsub.f32 %v368, %v498
        %v531 = vsub.f32 %v369, %v499
        %v532 = vsub.f32 %v370, %v500
        %v533 = vsub.f32 %v371, %v501
        %v534 = vsub.f32 %v372, %v502
        %v535 = vsub.f32 %v373, %v503
        %v536 = vsub.f32 %v374, %v504
        %v537 = vsub.f32 %v375, %v505
        %v538 = vsub.f32 %v376, %v506
        %v539 = vmul.f32 %v507, %v507
        %v540 = vmul.f32 %v508, %v508
        %v541 = vmul.f32 %v509, %v509
        %v542 = vmul.f32 %v510, %v510
        %v543 = vmul.f32 %v511, %v511
        %v544 = vmul.f32 %v512, %v512
        %v545 = vmul.f32 %v513, %v513
        %v546 = vmul.f32 %v514, %v514
        %v547 = vmul.f32 %v515, %v515
        %v548 = vmul.f32 %v516, %v516
        %v549 = vmul.f32 %v517, %v517
        %v550 = vmul.f32 %v518, %v518
        %v551 = vmul.f32 %v519, %v519
        %v552 = vmul.f32 %v520, %v520
        %v553 = vmul.f32 %v521, %v521
        %v554 = vmul.f32 %v522, %v522
        %v555 = vmul.f32 %v523, %v523
        %v556 = vmul.f32 %v524, %v524
        %v557 = vmul.f32 %v525, %v525
        %v558 = vmul.f32 %v526, %v526
        %v559 = vmul.f32 %v527, %v527
        %v560 = vmul.f32 %v528, %v528
        %v561 = vmul.f32 %v529, %v529
        %v562 = vmul.f32 %v530, %v530
        %v563 = vmul.f32 %v531, %v531
        %v564 = vmul.f32 %v532, %v532
        %v565 = vmul.f32 %v533, %v533
        %v566 = vmul.f32 %v534, %v534
        %v567 = vmul.f32 %v535, %v535
        %v568 = vmul.f32 %v536, %v536
        %v569 = vmul.f32 %v537, %v537
        %v570 = vmul.f32 %v538, %v538
        %v571 = vsel %vm377, %v539, 0.0
        %572 = vadd.xlane.f32.xlu0 %v571
        %v573 = vpop.xlane.xlu0 %572
        %v574 = vsel %vm377, %v540, 0.0
        %575 = vadd.xlane.f32.xlu0 %v574
        %v576 = vpop.xlane.xlu0 %575
        %v577 = vsel %vm377, %v541, 0.0
        %578 = vadd.xlane.f32.xlu0 %v577
        %v579 = vpop.xlane.xlu0 %578
        %v580 = vsel %vm377, %v542, 0.0
        %581 = vadd.xlane.f32.xlu0 %v580
        %v582 = vpop.xlane.xlu0 %581
        %v583 = vsel %vm377, %v543, 0.0
        %584 = vadd.xlane.f32.xlu0 %v583
        %v585 = vpop.xlane.xlu0 %584
        %v586 = vsel %vm377, %v544, 0.0
        %587 = vadd.xlane.f32.xlu0 %v586
        %v588 = vpop.xlane.xlu0 %587
        %v589 = vsel %vm377, %v545, 0.0
        %590 = vadd.xlane.f32.xlu0 %v589
        %v591 = vpop.xlane.xlu0 %590
        %v592 = vsel %vm377, %v546, 0.0
        %593 = vadd.xlane.f32.xlu0 %v592
        %v594 = vpop.xlane.xlu0 %593
        %v595 = vsel %vm377, %v547, 0.0
        %596 = vadd.xlane.f32.xlu0 %v595
        %v597 = vpop.xlane.xlu0 %596
        %v598 = vsel %vm377, %v548, 0.0
        %599 = vadd.xlane.f32.xlu0 %v598
        %v600 = vpop.xlane.xlu0 %599
        %v601 = vsel %vm377, %v549, 0.0
        %602 = vadd.xlane.f32.xlu0 %v601
        %v603 = vpop.xlane.xlu0 %602
        %v604 = vsel %vm377, %v550, 0.0
        %605 = vadd.xlane.f32.xlu0 %v604
        %v606 = vpop.xlane.xlu0 %605
        %v607 = vsel %vm377, %v551, 0.0
        %608 = vadd.xlane.f32.xlu0 %v607
        %v609 = vpop.xlane.xlu0 %608
        %v610 = vsel %vm377, %v552, 0.0
        %611 = vadd.xlane.f32.xlu0 %v610
        %v612 = vpop.xlane.xlu0 %611
        %v613 = vsel %vm377, %v553, 0.0
        %614 = vadd.xlane.f32.xlu0 %v613
        %v615 = vpop.xlane.xlu0 %614
        %v616 = vsel %vm377, %v554, 0.0
        %617 = vadd.xlane.f32.xlu0 %v616
        %v618 = vpop.xlane.xlu0 %617
        %v619 = vsel %vm377, %v555, 0.0
        %620 = vadd.xlane.f32.xlu0 %v619
        %v621 = vpop.xlane.xlu0 %620
        %v622 = vsel %vm377, %v556, 0.0
        %623 = vadd.xlane.f32.xlu0 %v622
        %v624 = vpop.xlane.xlu0 %623
        %v625 = vsel %vm377, %v557, 0.0
        %626 = vadd.xlane.f32.xlu0 %v625
        %v627 = vpop.xlane.xlu0 %626
        %v628 = vsel %vm377, %v558, 0.0
        %629 = vadd.xlane.f32.xlu0 %v628
        %v630 = vpop.xlane.xlu0 %629
        %v631 = vsel %vm377, %v559, 0.0
        %632 = vadd.xlane.f32.xlu0 %v631
        %v633 = vpop.xlane.xlu0 %632
        %v634 = vsel %vm377, %v560, 0.0
        %635 = vadd.xlane.f32.xlu0 %v634
        %v636 = vpop.xlane.xlu0 %635
        %v637 = vsel %vm377, %v561, 0.0
        %638 = vadd.xlane.f32.xlu0 %v637
        %v639 = vpop.xlane.xlu0 %638
        %v640 = vsel %vm377, %v562, 0.0
        %641 = vadd.xlane.f32.xlu0 %v640
        %v642 = vpop.xlane.xlu0 %641
        %v643 = vsel %vm377, %v563, 0.0
        %644 = vadd.xlane.f32.xlu0 %v643
        %v645 = vpop.xlane.xlu0 %644
        %v646 = vsel %vm377, %v564, 0.0
        %647 = vadd.xlane.f32.xlu0 %v646
        %v648 = vpop.xlane.xlu0 %647
        %v649 = vsel %vm377, %v565, 0.0
        %650 = vadd.xlane.f32.xlu0 %v649
        %v651 = vpop.xlane.xlu0 %650
        %v652 = vsel %vm377, %v566, 0.0
        %653 = vadd.xlane.f32.xlu0 %v652
        %v654 = vpop.xlane.xlu0 %653
        %v655 = vsel %vm377, %v567, 0.0
        %656 = vadd.xlane.f32.xlu0 %v655
        %v657 = vpop.xlane.xlu0 %656
        %v658 = vsel %vm377, %v568, 0.0
        %659 = vadd.xlane.f32.xlu0 %v658
        %v660 = vpop.xlane.xlu0 %659
        %v661 = vsel %vm377, %v569, 0.0
        %662 = vadd.xlane.f32.xlu0 %v661
        %v663 = vpop.xlane.xlu0 %662
        %v664 = vsel %vm377, %v570, 0.0
        %665 = vadd.xlane.f32.xlu0 %v664
        %v666 = vpop.xlane.xlu0 %665
        %v667 = vmul.f32 %v573, %v474
        %v668 = vmul.f32 %v576, %v474
        %v669 = vmul.f32 %v579, %v474
        %v670 = vmul.f32 %v582, %v474
        %v671 = vmul.f32 %v585, %v474
        %v672 = vmul.f32 %v588, %v474
        %v673 = vmul.f32 %v591, %v474
        %v674 = vmul.f32 %v594, %v474
        %v675 = vmul.f32 %v597, %v474
        %v676 = vmul.f32 %v600, %v474
        %v677 = vmul.f32 %v603, %v474
        %v678 = vmul.f32 %v606, %v474
        %v679 = vmul.f32 %v609, %v474
        %v680 = vmul.f32 %v612, %v474
        %v681 = vmul.f32 %v615, %v474
        %v682 = vmul.f32 %v618, %v474
        %v683 = vmul.f32 %v621, %v474
        %v684 = vmul.f32 %v624, %v474
        %v685 = vmul.f32 %v627, %v474
        %v686 = vmul.f32 %v630, %v474
        %v687 = vmul.f32 %v633, %v474
        %v688 = vmul.f32 %v636, %v474
        %v689 = vmul.f32 %v639, %v474
        %v690 = vmul.f32 %v642, %v474
        %v691 = vmul.f32 %v645, %v474
        %v692 = vmul.f32 %v648, %v474
        %v693 = vmul.f32 %v651, %v474
        %v694 = vmul.f32 %v654, %v474
        %v695 = vmul.f32 %v657, %v474
        %v696 = vmul.f32 %v660, %v474
        %v697 = vmul.f32 %v663, %v474
        %v698 = vmul.f32 %v666, %v474
        %v699 = vadd.f32 %v667, 1e-05
        %v700 = vadd.f32 %v668, 1e-05
        %v701 = vadd.f32 %v669, 1e-05
        %v702 = vadd.f32 %v670, 1e-05
        %v703 = vadd.f32 %v671, 1e-05
        %v704 = vadd.f32 %v672, 1e-05
        %v705 = vadd.f32 %v673, 1e-05
        %v706 = vadd.f32 %v674, 1e-05
        %v707 = vadd.f32 %v675, 1e-05
        %v708 = vadd.f32 %v676, 1e-05
        %v709 = vadd.f32 %v677, 1e-05
        %v710 = vadd.f32 %v678, 1e-05
        %v711 = vadd.f32 %v679, 1e-05
        %v712 = vadd.f32 %v680, 1e-05
        %v713 = vadd.f32 %v681, 1e-05
        %v714 = vadd.f32 %v682, 1e-05
        %v715 = vadd.f32 %v683, 1e-05
        %v716 = vadd.f32 %v684, 1e-05
        %v717 = vadd.f32 %v685, 1e-05
        %v718 = vadd.f32 %v686, 1e-05
        %v719 = vadd.f32 %v687, 1e-05
        %v720 = vadd.f32 %v688, 1e-05
        %v721 = vadd.f32 %v689, 1e-05
        %v722 = vadd.f32 %v690, 1e-05
        %v723 = vadd.f32 %v691, 1e-05
        %v724 = vadd.f32 %v692, 1e-05
        %v725 = vadd.f32 %v693, 1e-05
        %v726 = vadd.f32 %v694, 1e-05
        %v727 = vadd.f32 %v695, 1e-05
        %v728 = vadd.f32 %v696, 1e-05
        %v729 = vadd.f32 %v697, 1e-05
        %v730 = vadd.f32 %v698, 1e-05
        %v731 = vrsqrt.pop %v699
        %v732 = vrsqrt.pop %v700
        %v733 = vrsqrt.pop %v701
        %v734 = vrsqrt.pop %v702
        %v735 = vrsqrt.pop %v703
        %v736 = vrsqrt.pop %v704
        %v737 = vrsqrt.pop %v705
        %v738 = vrsqrt.pop %v706
        %v739 = vrsqrt.pop %v707
        %v740 = vrsqrt.pop %v708
        %v741 = vrsqrt.pop %v709
        %v742 = vrsqrt.pop %v710
        %v743 = vrsqrt.pop %v711
        %v744 = vrsqrt.pop %v712
        %v745 = vrsqrt.pop %v713
        %v746 = vrsqrt.pop %v714
        %v747 = vrsqrt.pop %v715
        %v748 = vrsqrt.pop %v716
        %v749 = vrsqrt.pop %v717
        %v750 = vrsqrt.pop %v718
        %v751 = vrsqrt.pop %v719
        %v752 = vrsqrt.pop %v720
        %v753 = vrsqrt.pop %v721
        %v754 = vrsqrt.pop %v722
        %v755 = vrsqrt.pop %v723
        %v756 = vrsqrt.pop %v724
        %v757 = vrsqrt.pop %v725
        %v758 = vrsqrt.pop %v726
        %v759 = vrsqrt.pop %v727
        %v760 = vrsqrt.pop %v728
        %v761 = vrsqrt.pop %v729
        %v762 = vrsqrt.pop %v730
        %v763 = vmul.f32 %v507, %v731
        %v764 = vmul.f32 %v508, %v732
        %v765 = vmul.f32 %v509, %v733
        %v766 = vmul.f32 %v510, %v734
        %v767 = vmul.f32 %v511, %v735
        %v768 = vmul.f32 %v512, %v736
        %v769 = vmul.f32 %v513, %v737
        %v770 = vmul.f32 %v514, %v738
        %v771 = vmul.f32 %v515, %v739
        %v772 = vmul.f32 %v516, %v740
        %v773 = vmul.f32 %v517, %v741
        %v774 = vmul.f32 %v518, %v742
        %v775 = vmul.f32 %v519, %v743
        %v776 = vmul.f32 %v520, %v744
        %v777 = vmul.f32 %v521, %v745
        %v778 = vmul.f32 %v522, %v746
        %v779 = vmul.f32 %v523, %v747
        %v780 = vmul.f32 %v524, %v748
        %v781 = vmul.f32 %v525, %v749
        %v782 = vmul.f32 %v526, %v750
        %v783 = vmul.f32 %v527, %v751
        %v784 = vmul.f32 %v528, %v752
        %v785 = vmul.f32 %v529, %v753
        %v786 = vmul.f32 %v530, %v754
        %v787 = vmul.f32 %v531, %v755
        %v788 = vmul.f32 %v532, %v756
        %v789 = vmul.f32 %v533, %v757
        %v790 = vmul.f32 %v534, %v758
        %v791 = vmul.f32 %v535, %v759
        %v792 = vmul.f32 %v536, %v760
        %v793 = vmul.f32 %v537, %v761
        %v794 = vmul.f32 %v538, %v762
        %v795 = vld [vmem:[%s1] sm:$0x1]
        %v797 = vlaneseq
        %v798 = vshrl.u32 %v797, 7
        %v799 = vsub.s32 0, %v798
        %v800 = vrot.slane %v795, %v799
        %v802 = vmul.f32 %v763, %v800
        %v803 = vmul.f32 %v764, %v800
        %v804 = vmul.f32 %v765, %v800
        %v805 = vmul.f32 %v766, %v800
        %v806 = vmul.f32 %v767, %v800
        %v807 = vmul.f32 %v768, %v800
        %v808 = vmul.f32 %v769, %v800
        %v809 = vmul.f32 %v770, %v800
        %v810 = vmul.f32 %v771, %v800
        %v811 = vmul.f32 %v772, %v800
        %v812 = vmul.f32 %v773, %v800
        %v813 = vmul.f32 %v774, %v800
        %v814 = vmul.f32 %v775, %v800
        %v815 = vmul.f32 %v776, %v800
        %v816 = vmul.f32 %v777, %v800
        %v817 = vmul.f32 %v778, %v800
        %v818 = vmul.f32 %v779, %v800
        %v819 = vmul.f32 %v780, %v800
        %v820 = vmul.f32 %v781, %v800
        %v821 = vmul.f32 %v782, %v800
        %v822 = vmul.f32 %v783, %v800
        %v823 = vmul.f32 %v784, %v800
        %v824 = vmul.f32 %v785, %v800
        %v825 = vmul.f32 %v786, %v800
        %v826 = vmul.f32 %v787, %v800
        %v827 = vmul.f32 %v788, %v800
        %v828 = vmul.f32 %v789, %v800
        %v829 = vmul.f32 %v790, %v800
        %v830 = vmul.f32 %v791, %v800
        %v831 = vmul.f32 %v792, %v800
        %v832 = vmul.f32 %v793, %v800
        %v833 = vmul.f32 %v794, %v800
        %v834 = vld [vmem:[%s2] sm:$0x1]
        %v836 = vlaneseq
        %v837 = vshrl.u32 %v836, 7
        %v838 = vsub.s32 0, %v837
        %v839 = vrot.slane %v834, %v838
        %v841 = vadd.f32 %v802, %v839
        %v842 = vadd.f32 %v803, %v839
        %v843 = vadd.f32 %v804, %v839
        %v844 = vadd.f32 %v805, %v839
        %v845 = vadd.f32 %v806, %v839
        %v846 = vadd.f32 %v807, %v839
        %v847 = vadd.f32 %v808, %v839
        %v848 = vadd.f32 %v809, %v839
        %v849 = vadd.f32 %v810, %v839
        %v850 = vadd.f32 %v811, %v839
        %v851 = vadd.f32 %v812, %v839
        %v852 = vadd.f32 %v813, %v839
        %v853 = vadd.f32 %v814, %v839
        %v854 = vadd.f32 %v815, %v839
        %v855 = vadd.f32 %v816, %v839
        %v856 = vadd.f32 %v817, %v839
        %v857 = vadd.f32 %v818, %v839
        %v858 = vadd.f32 %v819, %v839
        %v859 = vadd.f32 %v820, %v839
        %v860 = vadd.f32 %v821, %v839
        %v861 = vadd.f32 %v822, %v839
        %v862 = vadd.f32 %v823, %v839
        %v863 = vadd.f32 %v824, %v839
        %v864 = vadd.f32 %v825, %v839
        %v865 = vadd.f32 %v826, %v839
        %v866 = vadd.f32 %v827, %v839
        %v867 = vadd.f32 %v828, %v839
        %v868 = vadd.f32 %v829, %v839
        %v869 = vadd.f32 %v830, %v839
        %v870 = vadd.f32 %v831, %v839
        %v871 = vadd.f32 %v832, %v839
        %v872 = vadd.f32 %v833, %v839
        %v873 = vpack.c.bf16 %v842, %v841
        %v874 = vpack.c.bf16 %v844, %v843
        %v875 = vpack.c.bf16 %v846, %v845
        %v876 = vpack.c.bf16 %v848, %v847
        %v877 = vpack.c.bf16 %v850, %v849
        %v878 = vpack.c.bf16 %v852, %v851
        %v879 = vpack.c.bf16 %v854, %v853
        %v880 = vpack.c.bf16 %v856, %v855
        %v881 = vpack.c.bf16 %v858, %v857
        %v882 = vpack.c.bf16 %v860, %v859
        %v883 = vpack.c.bf16 %v862, %v861
        %v884 = vpack.c.bf16 %v864, %v863
        %v885 = vpack.c.bf16 %v866, %v865
        %v886 = vpack.c.bf16 %v868, %v867
        %v887 = vpack.c.bf16 %v870, %v869
        %v888 = vpack.c.bf16 %v872, %v871
        %v889 = vld [vmem:[#allocation5] sm:$0xf]
        %v890 = vld [vmem:[#allocation5 + $0x4] sm:$0xf]
        %v891 = vld [vmem:[#allocation5 + $0x8] sm:$0xf]
        %v892 = vld [vmem:[#allocation5 + $0xc] sm:$0xf]
        %v893 = vld [vmem:[#allocation7] sm:$0x1]
        %v895 = vlaneseq
        %v896 = vshrl.u32 %v895, 7
        %v897 = vsub.s32 0, %v896
        %v898 = vrot.slane %v893, %v897
        %v904 = vunpack.c.l.b16 %v889
        %v905 = vunpack.c.l.b16 %v890
        %v906 = vunpack.c.l.b16 %v891
        %v907 = vunpack.c.l.b16 %v892
        %v908 = vpack.c.b16 %v905, %v904
        %v909 = vpack.c.b16 %v907, %v906
        %v913 = vsel %vm377, %v873, 0
        %v916 = vsel %vm377, %v874, 0
        %v919 = vsel %vm377, %v875, 0
        %v922 = vsel %vm377, %v876, 0
        %v925 = vsel %vm377, %v877, 0
        %v928 = vsel %vm377, %v878, 0
        %v931 = vsel %vm377, %v879, 0
        %v934 = vsel %vm377, %v880, 0
        %v937 = vsel %vm377, %v881, 0
        %v940 = vsel %vm377, %v882, 0
        %v943 = vsel %vm377, %v883, 0
        %v946 = vsel %vm377, %v884, 0
        %v949 = vsel %vm377, %v885, 0
        %v952 = vsel %vm377, %v886, 0
        %v955 = vsel %vm377, %v887, 0
        %v958 = vsel %vm377, %v888, 0
        %960 = vmatprep.subr.bf16.mxu0 0
        %961 = vmatpush1.bf16.msra.mxu0 %v908
        %962 = vmatprep.subr.bf16.mxu0 0
        %963 = vmatpush1.bf16.msra.mxu0 %v909
        %964 = vmatprep.subr.bf16.mxu0 0
        %965 = vmatpush1.bf16.msra.mxu0 0
        %966 = vmatprep.subr.bf16.mxu0 0
        %967 = vmatpush1.bf16.msra.mxu0 0
        %968 = vmatprep.subr.bf16.mxu0 0
        %969 = vmatpush1.bf16.msra.mxu0 0
        %970 = vmatprep.subr.bf16.mxu0 0
        %971 = vmatpush1.bf16.msra.mxu0 0
        %972 = vmatprep.subr.bf16.mxu0 0
        %973 = vmatpush1.bf16.msra.mxu0 0
        %974 = vmatprep.subr.bf16.mxu0 0
        %975 = vmatpush1.bf16.msra.mxu0 0
        %976 = vmatprep.subr.bf16.mxu0 0
        %977 = vmatpush1.bf16.msra.mxu0 0
        %978 = vmatprep.subr.bf16.mxu0 0
        %979 = vmatpush1.bf16.msra.mxu0 0
        %980 = vmatprep.subr.bf16.mxu0 0
        %981 = vmatpush1.bf16.msra.mxu0 0
        %982 = vmatprep.subr.bf16.mxu0 0
        %983 = vmatpush1.bf16.msra.mxu0 0
        %984 = vmatprep.subr.bf16.mxu0 0
        %985 = vmatpush1.bf16.msra.mxu0 0
        %986 = vmatprep.subr.bf16.mxu0 0
        %987 = vmatpush1.bf16.msra.mxu0 0
        %988 = vmatprep.subr.bf16.mxu0 0
        %989 = vmatpush1.bf16.msra.mxu0 0
        %990 = vmatprep.subr.bf16.mxu0 0
        %991 = vmatpush1.bf16.msra.mxu0 0
        %992 = vmatprep.mubr.bf16.mxu0 0
        %993 = vmatmul.mubr.bf16.gmra.mrb[0].mxu0 %v913
        %v994 = vpop.f32.mrb[0].mxu0
        %v995 = vadd.f32 %v898, %v994
        %v996 = vpop.f32.mrb[0].mxu0
        %v997 = vpop.f32.mrb[0].mxu0
        %v998 = vadd.f32 %v898, %v997
        %v999 = vpop.f32.mrb[0].mxu0
        %1000 = vmatprep.mubr.bf16.mxu0 0
        %1001 = vmatmul.mubr.bf16.gmra.mrb[0].mxu0 %v916
        %v1002 = vpop.f32.mrb[0].mxu0
        %v1003 = vadd.f32 %v898, %v1002
        %v1004 = vpop.f32.mrb[0].mxu0
        %v1005 = vpop.f32.mrb[0].mxu0
        %v1006 = vadd.f32 %v898, %v1005
        %v1007 = vpop.f32.mrb[0].mxu0
        %1008 = vmatprep.mubr.bf16.mxu0 0
        %1009 = vmatmul.mubr.bf16.gmra.mrb[0].mxu0 %v919
        %v1010 = vpop.f32.mrb[0].mxu0
        %v1011 = vadd.f32 %v898, %v1010
        %v1012 = vpop.f32.mrb[0].mxu0
        %v1013 = vpop.f32.mrb[0].mxu0
        %v1014 = vadd.f32 %v898, %v1013
        %v1015 = vpop.f32.mrb[0].mxu0
        %1016 = vmatprep.mubr.bf16.mxu0 0
        %1017 = vmatmul.mubr.bf16.gmra.mrb[0].mxu0 %v922
        %v1018 = vpop.f32.mrb[0].mxu0
        %v1019 = vadd.f32 %v898, %v1018
        %v1020 = vpop.f32.mrb[0].mxu0
        %v1021 = vpop.f32.mrb[0].mxu0
        %v1022 = vadd.f32 %v898, %v1021
        %v1023 = vpop.f32.mrb[0].mxu0
        %1024 = vmatprep.mubr.bf16.mxu0 0
        %1025 = vmatmul.mubr.bf16.gmra.mrb[0].mxu0 %v925
        %v1026 = vpop.f32.mrb[0].mxu0
        %v1027 = vadd.f32 %v898, %v1026
        %v1028 = vpop.f32.mrb[0].mxu0
        %v1029 = vpop.f32.mrb[0].mxu0
        %v1030 = vadd.f32 %v898, %v1029
        %v1031 = vpop.f32.mrb[0].mxu0
        %1032 = vmatprep.mubr.bf16.mxu0 0
        %1033 = vmatmul.mubr.bf16.gmra.mrb[0].mxu0 %v928
        %v1034 = vpop.f32.mrb[0].mxu0
        %v1035 = vadd.f32 %v898, %v1034
        %v1036 = vpop.f32.mrb[0].mxu0
        %v1037 = vpop.f32.mrb[0].mxu0
        %v1038 = vadd.f32 %v898, %v1037
        %v1039 = vpop.f32.mrb[0].mxu0
        %1040 = vmatprep.mubr.bf16.mxu0 0
        %1041 = vmatmul.mubr.bf16.gmra.mrb[0].mxu0 %v931
        %v1042 = vpop.f32.mrb[0].mxu0
        %v1043 = vadd.f32 %v898, %v1042
        %v1044 = vpop.f32.mrb[0].mxu0
        %v1045 = vpop.f32.mrb[0].mxu0
        %v1046 = vadd.f32 %v898, %v1045
        %v1047 = vpop.f32.mrb[0].mxu0
        %1048 = vmatprep.mubr.bf16.mxu0 0
        %1049 = vmatmul.mubr.bf16.gmra.mrb[0].mxu0 %v934
        %v1050 = vpop.f32.mrb[0].mxu0
        %v1051 = vadd.f32 %v898, %v1050
        %v1052 = vpop.f32.mrb[0].mxu0
        %v1053 = vpop.f32.mrb[0].mxu0
        %v1054 = vadd.f32 %v898, %v1053
        %v1055 = vpop.f32.mrb[0].mxu0
        %1056 = vmatprep.mubr.bf16.mxu0 0
        %1057 = vmatmul.mubr.bf16.gmra.mrb[0].mxu0 %v937
        %v1058 = vpop.f32.mrb[0].mxu0
        %v1059 = vadd.f32 %v898, %v1058
        %v1060 = vpop.f32.mrb[0].mxu0
        %v1061 = vpop.f32.mrb[0].mxu0
        %v1062 = vadd.f32 %v898, %v1061
        %v1063 = vpop.f32.mrb[0].mxu0
        %1064 = vmatprep.mubr.bf16.mxu0 0
        %1065 = vmatmul.mubr.bf16.gmra.mrb[0].mxu0 %v940
        %v1066 = vpop.f32.mrb[0].mxu0
        %v1067 = vadd.f32 %v898, %v1066
        %v1068 = vpop.f32.mrb[0].mxu0
        %v1069 = vpop.f32.mrb[0].mxu0
        %v1070 = vadd.f32 %v898, %v1069
        %v1071 = vpop.f32.mrb[0].mxu0
        %1072 = vmatprep.mubr.bf16.mxu0 0
        %1073 = vmatmul.mubr.bf16.gmra.mrb[0].mxu0 %v943
        %v1074 = vpop.f32.mrb[0].mxu0
        %v1075 = vadd.f32 %v898, %v1074
        %v1076 = vpop.f32.mrb[0].mxu0
        %v1077 = vpop.f32.mrb[0].mxu0
        %v1078 = vadd.f32 %v898, %v1077
        %v1079 = vpop.f32.mrb[0].mxu0
        %1080 = vmatprep.mubr.bf16.mxu0 0
        %1081 = vmatmul.mubr.bf16.gmra.mrb[0].mxu0 %v946
        %v1082 = vpop.f32.mrb[0].mxu0
        %v1083 = vadd.f32 %v898, %v1082
        %v1084 = vpop.f32.mrb[0].mxu0
        %v1085 = vpop.f32.mrb[0].mxu0
        %v1086 = vadd.f32 %v898, %v1085
        %v1087 = vpop.f32.mrb[0].mxu0
        %1088 = vmatprep.mubr.bf16.mxu0 0
        %1089 = vmatmul.mubr.bf16.gmra.mrb[0].mxu0 %v949
        %v1090 = vpop.f32.mrb[0].mxu0
        %v1091 = vadd.f32 %v898, %v1090
        %v1092 = vpop.f32.mrb[0].mxu0
        %v1093 = vpop.f32.mrb[0].mxu0
        %v1094 = vadd.f32 %v898, %v1093
        %v1095 = vpop.f32.mrb[0].mxu0
        %1096 = vmatprep.mubr.bf16.mxu0 0
        %1097 = vmatmul.mubr.bf16.gmra.mrb[0].mxu0 %v952
        %v1098 = vpop.f32.mrb[0].mxu0
        %v1099 = vadd.f32 %v898, %v1098
        %v1100 = vpop.f32.mrb[0].mxu0
        %v1101 = vpop.f32.mrb[0].mxu0
        %v1102 = vadd.f32 %v898, %v1101
        %v1103 = vpop.f32.mrb[0].mxu0
        %1104 = vmatprep.mubr.bf16.mxu0 0
        %1105 = vmatmul.mubr.bf16.gmra.mrb[0].mxu0 %v955
        %v1106 = vpop.f32.mrb[0].mxu0
        %v1107 = vadd.f32 %v898, %v1106
        %v1108 = vpop.f32.mrb[0].mxu0
        %v1109 = vpop.f32.mrb[0].mxu0
        %v1110 = vadd.f32 %v898, %v1109
        %v1111 = vpop.f32.mrb[0].mxu0
        %1112 = vmatprep.mubr.bf16.mxu0 0
        %1113 = vmatmul.mubr.bf16.gmra.mrb[0].mxu0 %v958
        %v1114 = vpop.f32.mrb[0].mxu0
        %v1115 = vadd.f32 %v898, %v1114
        %v1116 = vpop.f32.mrb[0].mxu0
        %v1117 = vpop.f32.mrb[0].mxu0
        %v1118 = vadd.f32 %v898, %v1117
        %v1119 = vpop.f32.mrb[0].mxu0
        %1120 = vdwg.mxu0
        %1153 = vrot.lane.b32.xlu0 %v995, 120
        %v1154 = vpop.permute.xlu0 %1153
        %1155 = vrot.lane.b32.xlu0 %v998, 120
        %v1156 = vpop.permute.xlu0 %1155
        %1157 = vrot.lane.b32.xlu0 %v1003, 120
        %v1158 = vpop.permute.xlu0 %1157
        %1159 = vrot.lane.b32.xlu0 %v1006, 120
        %v1160 = vpop.permute.xlu0 %1159
        %1161 = vrot.lane.b32.xlu0 %v1011, 120
        %v1162 = vpop.permute.xlu0 %1161
        %1163 = vrot.lane.b32.xlu0 %v1014, 120
        %v1164 = vpop.permute.xlu0 %1163
        %1165 = vrot.lane.b32.xlu0 %v1019, 120
        %v1166 = vpop.permute.xlu0 %1165
        %1167 = vrot.lane.b32.xlu0 %v1022, 120
        %v1168 = vpop.permute.xlu0 %1167
        %1169 = vrot.lane.b32.xlu0 %v1027, 120
        %v1170 = vpop.permute.xlu0 %1169
        %1171 = vrot.lane.b32.xlu0 %v1030, 120
        %v1172 = vpop.permute.xlu0 %1171
        %1173 = vrot.lane.b32.xlu0 %v1035, 120
        %v1174 = vpop.permute.xlu0 %1173
        %1175 = vrot.lane.b32.xlu0 %v1038, 120
        %v1176 = vpop.permute.xlu0 %1175
        %1177 = vrot.lane.b32.xlu0 %v1043, 120
        %v1178 = vpop.permute.xlu0 %1177
        %1179 = vrot.lane.b32.xlu0 %v1046, 120
        %v1180 = vpop.permute.xlu0 %1179
        %1181 = vrot.lane.b32.xlu0 %v1051, 120
        %v1182 = vpop.permute.xlu0 %1181
        %1183 = vrot.lane.b32.xlu0 %v1054, 120
        %v1184 = vpop.permute.xlu0 %1183
        %1185 = vrot.lane.b32.xlu0 %v1059, 120
        %v1186 = vpop.permute.xlu0 %1185
        %1187 = vrot.lane.b32.xlu0 %v1062, 120
        %v1188 = vpop.permute.xlu0 %1187
        %1189 = vrot.lane.b32.xlu0 %v1067, 120
        %v1190 = vpop.permute.xlu0 %1189
        %1191 = vrot.lane.b32.xlu0 %v1070, 120
        %v1192 = vpop.permute.xlu0 %1191
        %1193 = vrot.lane.b32.xlu0 %v1075, 120
        %v1194 = vpop.permute.xlu0 %1193
        %1195 = vrot.lane.b32.xlu0 %v1078, 120
        %v1196 = vpop.permute.xlu0 %1195
        %1197 = vrot.lane.b32.xlu0 %v1083, 120
        %v1198 = vpop.permute.xlu0 %1197
        %1199 = vrot.lane.b32.xlu0 %v1086, 120
        %v1200 = vpop.permute.xlu0 %1199
        %1201 = vrot.lane.b32.xlu0 %v1091, 120
        %v1202 = vpop.permute.xlu0 %1201
        %1203 = vrot.lane.b32.xlu0 %v1094, 120
        %v1204 = vpop.permute.xlu0 %1203
        %1205 = vrot.lane.b32.xlu0 %v1099, 120
        %v1206 = vpop.permute.xlu0 %1205
        %1207 = vrot.lane.b32.xlu0 %v1102, 120
        %v1208 = vpop.permute.xlu0 %1207
        %1209 = vrot.lane.b32.xlu0 %v1107, 120
        %v1210 = vpop.permute.xlu0 %1209
        %1211 = vrot.lane.b32.xlu0 %v1110, 120
        %v1212 = vpop.permute.xlu0 %1211
        %1213 = vrot.lane.b32.xlu0 %v1115, 120
        %v1214 = vpop.permute.xlu0 %1213
        %1215 = vrot.lane.b32.xlu0 %v1118, 120
        %v1216 = vpop.permute.xlu0 %1215
        %1249 = vrot.lane.b32.xlu0 %v995, 112
        %v1250 = vpop.permute.xlu0 %1249
        %1251 = vrot.lane.b32.xlu0 %v998, 112
        %v1252 = vpop.permute.xlu0 %1251
        %1253 = vrot.lane.b32.xlu0 %v1003, 112
        %v1254 = vpop.permute.xlu0 %1253
        %1255 = vrot.lane.b32.xlu0 %v1006, 112
        %v1256 = vpop.permute.xlu0 %1255
        %1257 = vrot.lane.b32.xlu0 %v1011, 112
        %v1258 = vpop.permute.xlu0 %1257
        %1259 = vrot.lane.b32.xlu0 %v1014, 112
        %v1260 = vpop.permute.xlu0 %1259
        %1261 = vrot.lane.b32.xlu0 %v1019, 112
        %v1262 = vpop.permute.xlu0 %1261
        %1263 = vrot.lane.b32.xlu0 %v1022, 112
        %v1264 = vpop.permute.xlu0 %1263
        %1265 = vrot.lane.b32.xlu0 %v1027, 112
        %v1266 = vpop.permute.xlu0 %1265
        %1267 = vrot.lane.b32.xlu0 %v1030, 112
        %v1268 = vpop.permute.xlu0 %1267
        %1269 = vrot.lane.b32.xlu0 %v1035, 112
        %v1270 = vpop.permute.xlu0 %1269
        %1271 = vrot.lane.b32.xlu0 %v1038, 112
        %v1272 = vpop.permute.xlu0 %1271
        %1273 = vrot.lane.b32.xlu0 %v1043, 112
        %v1274 = vpop.permute.xlu0 %1273
        %1275 = vrot.lane.b32.xlu0 %v1046, 112
        %v1276 = vpop.permute.xlu0 %1275
        %1277 = vrot.lane.b32.xlu0 %v1051, 112
        %v1278 = vpop.permute.xlu0 %1277
        %1279 = vrot.lane.b32.xlu0 %v1054, 112
        %v1280 = vpop.permute.xlu0 %1279
        %1281 = vrot.lane.b32.xlu0 %v1059, 112
        %v1282 = vpop.permute.xlu0 %1281
        %1283 = vrot.lane.b32.xlu0 %v1062, 112
        %v1284 = vpop.permute.xlu0 %1283
        %1285 = vrot.lane.b32.xlu0 %v1067, 112
        %v1286 = vpop.permute.xlu0 %1285
        %1287 = vrot.lane.b32.xlu0 %v1070, 112
        %v1288 = vpop.permute.xlu0 %1287
        %1289 = vrot.lane.b32.xlu0 %v1075, 112
        %v1290 = vpop.permute.xlu0 %1289
        %1291 = vrot.lane.b32.xlu0 %v1078, 112
        %v1292 = vpop.permute.xlu0 %1291
        %1293 = vrot.lane.b32.xlu0 %v1083, 112
        %v1294 = vpop.permute.xlu0 %1293
        %1295 = vrot.lane.b32.xlu0 %v1086, 112
        %v1296 = vpop.permute.xlu0 %1295
        %1297 = vrot.lane.b32.xlu0 %v1091, 112
        %v1298 = vpop.permute.xlu0 %1297
        %1299 = vrot.lane.b32.xlu0 %v1094, 112
        %v1300 = vpop.permute.xlu0 %1299
        %1301 = vrot.lane.b32.xlu0 %v1099, 112
        %v1302 = vpop.permute.xlu0 %1301
        %1303 = vrot.lane.b32.xlu0 %v1102, 112
        %v1304 = vpop.permute.xlu0 %1303
        %1305 = vrot.lane.b32.xlu0 %v1107, 112
        %v1306 = vpop.permute.xlu0 %1305
        %1307 = vrot.lane.b32.xlu0 %v1110, 112
        %v1308 = vpop.permute.xlu0 %1307
        %1309 = vrot.lane.b32.xlu0 %v1115, 112
        %v1310 = vpop.permute.xlu0 %1309
        %1311 = vrot.lane.b32.xlu0 %v1118, 112
        %v1312 = vpop.permute.xlu0 %1311
        %1345 = vrot.lane.b32.xlu0 %v995, 104
        %v1346 = vpop.permute.xlu0 %1345
        %1347 = vrot.lane.b32.xlu0 %v998, 104
        %v1348 = vpop.permute.xlu0 %1347
        %1349 = vrot.lane.b32.xlu0 %v1003, 104
        %v1350 = vpop.permute.xlu0 %1349
        %1351 = vrot.lane.b32.xlu0 %v1006, 104
        %v1352 = vpop.permute.xlu0 %1351
        %1353 = vrot.lane.b32.xlu0 %v1011, 104
        %v1354 = vpop.permute.xlu0 %1353
        %1355 = vrot.lane.b32.xlu0 %v1014, 104
        %v1356 = vpop.permute.xlu0 %1355
        %1357 = vrot.lane.b32.xlu0 %v1019, 104
        %v1358 = vpop.permute.xlu0 %1357
        %1359 = vrot.lane.b32.xlu0 %v1022, 104
        %v1360 = vpop.permute.xlu0 %1359
        %1361 = vrot.lane.b32.xlu0 %v1027, 104
        %v1362 = vpop.permute.xlu0 %1361
        %1363 = vrot.lane.b32.xlu0 %v1030, 104
        %v1364 = vpop.permute.xlu0 %1363
        %1365 = vrot.lane.b32.xlu0 %v1035, 104
        %v1366 = vpop.permute.xlu0 %1365
        %1367 = vrot.lane.b32.xlu0 %v1038, 104
        %v1368 = vpop.permute.xlu0 %1367
        %1369 = vrot.lane.b32.xlu0 %v1043, 104
        %v1370 = vpop.permute.xlu0 %1369
        %1371 = vrot.lane.b32.xlu0 %v1046, 104
        %v1372 = vpop.permute.xlu0 %1371
        %1373 = vrot.lane.b32.xlu0 %v1051, 104
        %v1374 = vpop.permute.xlu0 %1373
        %1375 = vrot.lane.b32.xlu0 %v1054, 104
        %v1376 = vpop.permute.xlu0 %1375
        %1377 = vrot.lane.b32.xlu0 %v1059, 104
        %v1378 = vpop.permute.xlu0 %1377
        %1379 = vrot.lane.b32.xlu0 %v1062, 104
        %v1380 = vpop.permute.xlu0 %1379
        %1381 = vrot.lane.b32.xlu0 %v1067, 104
        %v1382 = vpop.permute.xlu0 %1381
        %1383 = vrot.lane.b32.xlu0 %v1070, 104
        %v1384 = vpop.permute.xlu0 %1383
        %1385 = vrot.lane.b32.xlu0 %v1075, 104
        %v1386 = vpop.permute.xlu0 %1385
        %1387 = vrot.lane.b32.xlu0 %v1078, 104
        %v1388 = vpop.permute.xlu0 %1387
        %1389 = vrot.lane.b32.xlu0 %v1083, 104
        %v1390 = vpop.permute.xlu0 %1389
        %1391 = vrot.lane.b32.xlu0 %v1086, 104
        %v1392 = vpop.permute.xlu0 %1391
        %1393 = vrot.lane.b32.xlu0 %v1091, 104
        %v1394 = vpop.permute.xlu0 %1393
        %1395 = vrot.lane.b32.xlu0 %v1094, 104
        %v1396 = vpop.permute.xlu0 %1395
        %1397 = vrot.lane.b32.xlu0 %v1099, 104
        %v1398 = vpop.permute.xlu0 %1397
        %1399 = vrot.lane.b32.xlu0 %v1102, 104
        %v1400 = vpop.permute.xlu0 %1399
        %1401 = vrot.lane.b32.xlu0 %v1107, 104
        %v1402 = vpop.permute.xlu0 %1401
        %1403 = vrot.lane.b32.xlu0 %v1110, 104
        %v1404 = vpop.permute.xlu0 %1403
        %1405 = vrot.lane.b32.xlu0 %v1115, 104
        %v1406 = vpop.permute.xlu0 %1405
        %1407 = vrot.lane.b32.xlu0 %v1118, 104
        %v1408 = vpop.permute.xlu0 %1407
        %v1441 = vpack.c.bf16 %v998, %v995
        %v1442 = vpack.c.bf16 %v1006, %v1003
        %v1443 = vpack.c.bf16 %v1014, %v1011
        %v1444 = vpack.c.bf16 %v1022, %v1019
        %v1445 = vpack.c.bf16 %v1030, %v1027
        %v1446 = vpack.c.bf16 %v1038, %v1035
        %v1447 = vpack.c.bf16 %v1046, %v1043
        %v1448 = vpack.c.bf16 %v1054, %v1051
        %v1449 = vpack.c.bf16 %v1062, %v1059
        %v1450 = vpack.c.bf16 %v1070, %v1067
        %v1451 = vpack.c.bf16 %v1078, %v1075
        %v1452 = vpack.c.bf16 %v1086, %v1083
        %v1453 = vpack.c.bf16 %v1094, %v1091
        %v1454 = vpack.c.bf16 %v1102, %v1099
        %v1455 = vpack.c.bf16 %v1110, %v1107
        %v1456 = vpack.c.bf16 %v1118, %v1115
        %v1457 = vpack.c.bf16 %v1156, %v1154
        %v1458 = vpack.c.bf16 %v1160, %v1158
        %v1459 = vpack.c.bf16 %v1164, %v1162
        %v1460 = vpack.c.bf16 %v1168, %v1166
        %v1461 = vpack.c.bf16 %v1172, %v1170
        %v1462 = vpack.c.bf16 %v1176, %v1174
        %v1463 = vpack.c.bf16 %v1180, %v1178
        %v1464 = vpack.c.bf16 %v1184, %v1182
        %v1465 = vpack.c.bf16 %v1188, %v1186
        %v1466 = vpack.c.bf16 %v1192, %v1190
        %v1467 = vpack.c.bf16 %v1196, %v1194
        %v1468 = vpack.c.bf16 %v1200, %v1198
        %v1469 = vpack.c.bf16 %v1204, %v1202
        %v1470 = vpack.c.bf16 %v1208, %v1206
        %v1471 = vpack.c.bf16 %v1212, %v1210
        %v1472 = vpack.c.bf16 %v1216, %v1214
        %v1473 = vpack.c.bf16 %v1252, %v1250
        %v1474 = vpack.c.bf16 %v1256, %v1254
        %v1475 = vpack.c.bf16 %v1260, %v1258
        %v1476 = vpack.c.bf16 %v1264, %v1262
        %v1477 = vpack.c.bf16 %v1268, %v1266
        %v1478 = vpack.c.bf16 %v1272, %v1270
        %v1479 = vpack.c.bf16 %v1276, %v1274
        %v1480 = vpack.c.bf16 %v1280, %v1278
        %v1481 = vpack.c.bf16 %v1284, %v1282
        %v1482 = vpack.c.bf16 %v1288, %v1286
        %v1483 = vpack.c.bf16 %v1292, %v1290
        %v1484 = vpack.c.bf16 %v1296, %v1294
        %v1485 = vpack.c.bf16 %v1300, %v1298
        %v1486 = vpack.c.bf16 %v1304, %v1302
        %v1487 = vpack.c.bf16 %v1308, %v1306
        %v1488 = vpack.c.bf16 %v1312, %v1310
        %v1489 = vpack.c.bf16 %v1348, %v1346
        %v1490 = vpack.c.bf16 %v1352, %v1350
        %v1491 = vpack.c.bf16 %v1356, %v1354
        %v1492 = vpack.c.bf16 %v1360, %v1358
        %v1493 = vpack.c.bf16 %v1364, %v1362
        %v1494 = vpack.c.bf16 %v1368, %v1366
        %v1495 = vpack.c.bf16 %v1372, %v1370
        %v1496 = vpack.c.bf16 %v1376, %v1374
        %v1497 = vpack.c.bf16 %v1380, %v1378
        %v1498 = vpack.c.bf16 %v1384, %v1382
        %v1499 = vpack.c.bf16 %v1388, %v1386
        %v1500 = vpack.c.bf16 %v1392, %v1390
        %v1501 = vpack.c.bf16 %v1396, %v1394
        %v1502 = vpack.c.bf16 %v1400, %v1398
        %v1503 = vpack.c.bf16 %v1404, %v1402
        %v1504 = vpack.c.bf16 %v1408, %v1406
        %1509 = vrot.lane.b32.xlu0 %v1441, 96
        %v1510 = vpop.permute.xlu0 %1509
        %1511 = vrot.lane.b32.xlu0 %v1442, 96
        %v1512 = vpop.permute.xlu0 %1511
        %1513 = vrot.lane.b32.xlu0 %v1443, 96
        %v1514 = vpop.permute.xlu0 %1513
        %1515 = vrot.lane.b32.xlu0 %v1444, 96
        %v1516 = vpop.permute.xlu0 %1515
        %vm1517 = vcmask 64512
        %v1519 = vsel %vm1517, %v1441, 0
        %v1522 = vsel %vm1517, %v1442, 0
        %v1525 = vsel %vm1517, %v1443, 0
        %v1528 = vsel %vm1517, %v1444, 0
        %v1531 = vsel %vm1517, %v1510, 0
        %v1534 = vsel %vm1517, %v1512, 0
        %v1537 = vsel %vm1517, %v1514, 0
        %v1540 = vsel %vm1517, %v1516, 0
        %1542 = vmatprep.subr.bf16.mxu0 0
        %1543 = vmatpush1.bf16.xpose.msra.mxu0 %v1531
        %1544 = vmatprep.subr.bf16.mxu0 0
        %1545 = vmatpush1.bf16.xpose.msra.mxu0 %v1534
        %1546 = vmatprep.subr.bf16.mxu0 0
        %1547 = vmatpush1.bf16.xpose.msra.mxu0 %v1537
        %1548 = vmatprep.subr.bf16.mxu0 0
        %1549 = vmatpush1.bf16.xpose.msra.mxu0 %v1540
        %1550 = vmatprep.subr.bf16.mxu0 0
        %1551 = vmatpush1.bf16.xpose.msra.mxu0 0
        %1552 = vmatprep.subr.bf16.mxu0 0
        %1553 = vmatpush1.bf16.xpose.msra.mxu0 0
        %1554 = vmatprep.subr.bf16.mxu0 0
        %1555 = vmatpush1.bf16.xpose.msra.mxu0 0
        %1556 = vmatprep.subr.bf16.mxu0 0
        %1557 = vmatpush1.bf16.xpose.msra.mxu0 0
        %1558 = vmatprep.subr.bf16.mxu0 0
        %1559 = vmatpush1.bf16.xpose.msra.mxu0 0
        %1560 = vmatprep.subr.bf16.mxu0 0
        %1561 = vmatpush1.bf16.xpose.msra.mxu0 0
        %1562 = vmatprep.subr.bf16.mxu0 0
        %1563 = vmatpush1.bf16.xpose.msra.mxu0 0
        %1564 = vmatprep.subr.bf16.mxu0 0
        %1565 = vmatpush1.bf16.xpose.msra.mxu0 0
        %1566 = vmatprep.subr.bf16.mxu0 0
        %1567 = vmatpush1.bf16.xpose.msra.mxu0 0
        %1568 = vmatprep.subr.bf16.mxu0 0
        %1569 = vmatpush1.bf16.xpose.msra.mxu0 0
        %1570 = vmatprep.subr.bf16.mxu0 0
        %1571 = vmatpush1.bf16.xpose.msra.mxu0 0
        %1572 = vmatprep.subr.bf16.mxu0 0
        %1573 = vmatpush1.bf16.xpose.msra.mxu0 0
        %1574 = vmatprep.mubr.bf16.mxu0 0
        %1575 = vmatmul.mubr.bf16.gmra.mrb[0].mxu0 %v1519
        %v1576 = vpop.f32.mrb[0].mxu0
        %v1577 = vadd.f32 0.0, %v1576
        %v1578 = vpop.f32.mrb[0].mxu0
        %v1579 = vpop.f32.mrb[0].mxu0
        %v1580 = vadd.f32 0.0, %v1579
        %v1581 = vpop.f32.mrb[0].mxu0
        %1582 = vmatprep.mubr.bf16.mxu0 0
        %1583 = vmatmul.mubr.bf16.gmra.mrb[0].mxu0 %v1522
        %v1584 = vpop.f32.mrb[0].mxu0
        %v1585 = vadd.f32 0.0, %v1584
        %v1586 = vpop.f32.mrb[0].mxu0
        %v1587 = vpop.f32.mrb[0].mxu0
        %v1588 = vadd.f32 0.0, %v1587
        %v1589 = vpop.f32.mrb[0].mxu0
        %1590 = vmatprep.mubr.bf16.mxu0 0
        %1591 = vmatmul.mubr.bf16.gmra.mrb[0].mxu0 %v1525
        %v1592 = vpop.f32.mrb[0].mxu0
        %v1593 = vadd.f32 0.0, %v1592
        %v1594 = vpop.f32.mrb[0].mxu0
        %v1595 = vpop.f32.mrb[0].mxu0
        %v1596 = vadd.f32 0.0, %v1595
        %v1597 = vpop.f32.mrb[0].mxu0
        %1598 = vmatprep.mubr.bf16.mxu0 0
        %1599 = vmatmul.mubr.bf16.gmra.mrb[0].mxu0 %v1528
        %v1600 = vpop.f32.mrb[0].mxu0
        %v1601 = vadd.f32 0.0, %v1600
        %v1602 = vpop.f32.mrb[0].mxu0
        %v1603 = vpop.f32.mrb[0].mxu0
        %v1604 = vadd.f32 0.0, %v1603
        %v1605 = vpop.f32.mrb[0].mxu0
        %1606 = vdwg.mxu0
        %1611 = vrot.lane.b32.xlu0 %v1445, 96
        %v1612 = vpop.permute.xlu0 %1611
        %1613 = vrot.lane.b32.xlu0 %v1446, 96
        %v1614 = vpop.permute.xlu0 %1613
        %1615 = vrot.lane.b32.xlu0 %v1447, 96
        %v1616 = vpop.permute.xlu0 %1615
        %1617 = vrot.lane.b32.xlu0 %v1448, 96
        %v1618 = vpop.permute.xlu0 %1617
        %v1620 = vsel %vm1517, %v1445, 0
        %v1623 = vsel %vm1517, %v1446, 0
        %v1626 = vsel %vm1517, %v1447, 0
        %v1629 = vsel %vm1517, %v1448, 0
        %v1632 = vsel %vm1517, %v1612, 0
        %v1635 = vsel %vm1517, %v1614, 0
        %v1638 = vsel %vm1517, %v1616, 0
        %v1641 = vsel %vm1517, %v1618, 0
        %1643 = vmatprep.subr.bf16.mxu0 0
        %1644 = vmatpush1.bf16.xpose.msra.mxu0 %v1632
        %1645 = vmatprep.subr.bf16.mxu0 0
        %1646 = vmatpush1.bf16.xpose.msra.mxu0 %v1635
        %1647 = vmatprep.subr.bf16.mxu0 0
        %1648 = vmatpush1.bf16.xpose.msra.mxu0 %v1638
        %1649 = vmatprep.subr.bf16.mxu0 0
        %1650 = vmatpush1.bf16.xpose.msra.mxu0 %v1641
        %1651 = vmatprep.subr.bf16.mxu0 0
        %1652 = vmatpush1.bf16.xpose.msra.mxu0 0
        %1653 = vmatprep.subr.bf16.mxu0 0
        %1654 = vmatpush1.bf16.xpose.msra.mxu0 0
        %1655 = vmatprep.subr.bf16.mxu0 0
        %1656 = vmatpush1.bf16.xpose.msra.mxu0 0
        %1657 = vmatprep.subr.bf16.mxu0 0
        %1658 = vmatpush1.bf16.xpose.msra.mxu0 0
        %1659 = vmatprep.subr.bf16.mxu0 0
        %1660 = vmatpush1.bf16.xpose.msra.mxu0 0
        %1661 = vmatprep.subr.bf16.mxu0 0
        %1662 = vmatpush1.bf16.xpose.msra.mxu0 0
        %1663 = vmatprep.subr.bf16.mxu0 0
        %1664 = vmatpush1.bf16.xpose.msra.mxu0 0
        %1665 = vmatprep.subr.bf16.mxu0 0
        %1666 = vmatpush1.bf16.xpose.msra.mxu0 0
        %1667 = vmatprep.subr.bf16.mxu0 0
        %1668 = vmatpush1.bf16.xpose.msra.mxu0 0
        %1669 = vmatprep.subr.bf16.mxu0 0
        %1670 = vmatpush1.bf16.xpose.msra.mxu0 0
        %1671 = vmatprep.subr.bf16.mxu0 0
        %1672 = vmatpush1.bf16.xpose.msra.mxu0 0
        %1673 = vmatprep.subr.bf16.mxu0 0
        %1674 = vmatpush1.bf16.xpose.msra.mxu0 0
        %1675 = vmatprep.mubr.bf16.mxu0 0
        %1676 = vmatmul.mubr.bf16.gmra.mrb[0].mxu0 %v1620
        %v1677 = vpop.f32.mrb[0].mxu0
        %v1678 = vadd.f32 0.0, %v1677
        %v1679 = vpop.f32.mrb[0].mxu0
        %v1680 = vpop.f32.mrb[0].mxu0
        %v1681 = vadd.f32 0.0, %v1680
        %v1682 = vpop.f32.mrb[0].mxu0
        %1683 = vmatprep.mubr.bf16.mxu0 0
        %1684 = vmatmul.mubr.bf16.gmra.mrb[0].mxu0 %v1623
        %v1685 = vpop.f32.mrb[0].mxu0
        %v1686 = vadd.f32 0.0, %v1685
        %v1687 = vpop.f32.mrb[0].mxu0
        %v1688 = vpop.f32.mrb[0].mxu0
        %v1689 = vadd.f32 0.0, %v1688
        %v1690 = vpop.f32.mrb[0].mxu0
        %1691 = vmatprep.mubr.bf16.mxu0 0
        %1692 = vmatmul.mubr.bf16.gmra.mrb[0].mxu0 %v1626
        %v1693 = vpop.f32.mrb[0].mxu0
        %v1694 = vadd.f32 0.0, %v1693
        %v1695 = vpop.f32.mrb[0].mxu0
        %v1696 = vpop.f32.mrb[0].mxu0
        %v1697 = vadd.f32 0.0, %v1696
        %v1698 = vpop.f32.mrb[0].mxu0
        %1699 = vmatprep.mubr.bf16.mxu0 0
        %1700 = vmatmul.mubr.bf16.gmra.mrb[0].mxu0 %v1629
        %v1701 = vpop.f32.mrb[0].mxu0
        %v1702 = vadd.f32 0.0, %v1701
        %v1703 = vpop.f32.mrb[0].mxu0
        %v1704 = vpop.f32.mrb[0].mxu0
        %v1705 = vadd.f32 0.0, %v1704
        %v1706 = vpop.f32.mrb[0].mxu0
        %1707 = vdwg.mxu0
        %1712 = vrot.lane.b32.xlu0 %v1449, 96
        %v1713 = vpop.permute.xlu0 %1712
        %1714 = vrot.lane.b32.xlu0 %v1450, 96
        %v1715 = vpop.permute.xlu0 %1714
        %1716 = vrot.lane.b32.xlu0 %v1451, 96
        %v1717 = vpop.permute.xlu0 %1716
        %1718 = vrot.lane.b32.xlu0 %v1452, 96
        %v1719 = vpop.permute.xlu0 %1718
        %v1721 = vsel %vm1517, %v1449, 0
        %v1724 = vsel %vm1517, %v1450, 0
        %v1727 = vsel %vm1517, %v1451, 0
        %v1730 = vsel %vm1517, %v1452, 0
        %v1733 = vsel %vm1517, %v1713, 0
        %v1736 = vsel %vm1517, %v1715, 0
        %v1739 = vsel %vm1517, %v1717, 0
        %v1742 = vsel %vm1517, %v1719, 0
        %1744 = vmatprep.subr.bf16.mxu0 0
        %1745 = vmatpush1.bf16.xpose.msra.mxu0 %v1733
        %1746 = vmatprep.subr.bf16.mxu0 0
        %1747 = vmatpush1.bf16.xpose.msra.mxu0 %v1736
        %1748 = vmatprep.subr.bf16.mxu0 0
        %1749 = vmatpush1.bf16.xpose.msra.mxu0 %v1739
        %1750 = vmatprep.subr.bf16.mxu0 0
        %1751 = vmatpush1.bf16.xpose.msra.mxu0 %v1742
        %1752 = vmatprep.subr.bf16.mxu0 0
        %1753 = vmatpush1.bf16.xpose.msra.mxu0 0
        %1754 = vmatprep.subr.bf16.mxu0 0
        %1755 = vmatpush1.bf16.xpose.msra.mxu0 0
        %1756 = vmatprep.subr.bf16.mxu0 0
        %1757 = vmatpush1.bf16.xpose.msra.mxu0 0
        %1758 = vmatprep.subr.bf16.mxu0 0
        %1759 = vmatpush1.bf16.xpose.msra.mxu0 0
        %1760 = vmatprep.subr.bf16.mxu0 0
        %1761 = vmatpush1.bf16.xpose.msra.mxu0 0
        %1762 = vmatprep.subr.bf16.mxu0 0
        %1763 = vmatpush1.bf16.xpose.msra.mxu0 0
        %1764 = vmatprep.subr.bf16.mxu0 0
        %1765 = vmatpush1.bf16.xpose.msra.mxu0 0
        %1766 = vmatprep.subr.bf16.mxu0 0
        %1767 = vmatpush1.bf16.xpose.msra.mxu0 0
        %1768 = vmatprep.subr.bf16.mxu0 0
        %1769 = vmatpush1.bf16.xpose.msra.mxu0 0
        %1770 = vmatprep.subr.bf16.mxu0 0
        %1771 = vmatpush1.bf16.xpose.msra.mxu0 0
        %1772 = vmatprep.subr.bf16.mxu0 0
        %1773 = vmatpush1.bf16.xpose.msra.mxu0 0
        %1774 = vmatprep.subr.bf16.mxu0 0
        %1775 = vmatpush1.bf16.xpose.msra.mxu0 0
        %1776 = vmatprep.mubr.bf16.mxu0 0
        %1777 = vmatmul.mubr.bf16.gmra.mrb[0].mxu0 %v1721
        %v1778 = vpop.f32.mrb[0].mxu0
        %v1779 = vadd.f32 0.0, %v1778
        %v1780 = vpop.f32.mrb[0].mxu0
        %v1781 = vpop.f32.mrb[0].mxu0
        %v1782 = vadd.f32 0.0, %v1781
        %v1783 = vpop.f32.mrb[0].mxu0
        %1784 = vmatprep.mubr.bf16.mxu0 0
        %1785 = vmatmul.mubr.bf16.gmra.mrb[0].mxu0 %v1724
        %v1786 = vpop.f32.mrb[0].mxu0
        %v1787 = vadd.f32 0.0, %v1786
        %v1788 = vpop.f32.mrb[0].mxu0
        %v1789 = vpop.f32.mrb[0].mxu0
        %v1790 = vadd.f32 0.0, %v1789
        %v1791 = vpop.f32.mrb[0].mxu0
        %1792 = vmatprep.mubr.bf16.mxu0 0
        %1793 = vmatmul.mubr.bf16.gmra.mrb[0].mxu0 %v1727
        %v1794 = vpop.f32.mrb[0].mxu0
        %v1795 = vadd.f32 0.0, %v1794
        %v1796 = vpop.f32.mrb[0].mxu0
        %v1797 = vpop.f32.mrb[0].mxu0
        %v1798 = vadd.f32 0.0, %v1797
        %v1799 = vpop.f32.mrb[0].mxu0
        %1800 = vmatprep.mubr.bf16.mxu0 0
        %1801 = vmatmul.mubr.bf16.gmra.mrb[0].mxu0 %v1730
        %v1802 = vpop.f32.mrb[0].mxu0
        %v1803 = vadd.f32 0.0, %v1802
        %v1804 = vpop.f32.mrb[0].mxu0
        %v1805 = vpop.f32.mrb[0].mxu0
        %v1806 = vadd.f32 0.0, %v1805
        %v1807 = vpop.f32.mrb[0].mxu0
        %1808 = vdwg.mxu0
        %1813 = vrot.lane.b32.xlu0 %v1453, 96
        %v1814 = vpop.permute.xlu0 %1813
        %1815 = vrot.lane.b32.xlu0 %v1454, 96
        %v1816 = vpop.permute.xlu0 %1815
        %1817 = vrot.lane.b32.xlu0 %v1455, 96
        %v1818 = vpop.permute.xlu0 %1817
        %1819 = vrot.lane.b32.xlu0 %v1456, 96
        %v1820 = vpop.permute.xlu0 %1819
        %v1822 = vsel %vm1517, %v1453, 0
        %v1825 = vsel %vm1517, %v1454, 0
        %v1828 = vsel %vm1517, %v1455, 0
        %v1831 = vsel %vm1517, %v1456, 0
        %v1834 = vsel %vm1517, %v1814, 0
        %v1837 = vsel %vm1517, %v1816, 0
        %v1840 = vsel %vm1517, %v1818, 0
        %v1843 = vsel %vm1517, %v1820, 0
        %1845 = vmatprep.subr.bf16.mxu0 0
        %1846 = vmatpush1.bf16.xpose.msra.mxu0 %v1834
        %1847 = vmatprep.subr.bf16.mxu0 0
        %1848 = vmatpush1.bf16.xpose.msra.mxu0 %v1837
        %1849 = vmatprep.subr.bf16.mxu0 0
        %1850 = vmatpush1.bf16.xpose.msra.mxu0 %v1840
        %1851 = vmatprep.subr.bf16.mxu0 0
        %1852 = vmatpush1.bf16.xpose.msra.mxu0 %v1843
        %1853 = vmatprep.subr.bf16.mxu0 0
        %1854 = vmatpush1.bf16.xpose.msra.mxu0 0
        %1855 = vmatprep.subr.bf16.mxu0 0
        %1856 = vmatpush1.bf16.xpose.msra.mxu0 0
        %1857 = vmatprep.subr.bf16.mxu0 0
        %1858 = vmatpush1.bf16.xpose.msra.mxu0 0
        %1859 = vmatprep.subr.bf16.mxu0 0
        %1860 = vmatpush1.bf16.xpose.msra.mxu0 0
        %1861 = vmatprep.subr.bf16.mxu0 0
        %1862 = vmatpush1.bf16.xpose.msra.mxu0 0
        %1863 = vmatprep.subr.bf16.mxu0 0
        %1864 = vmatpush1.bf16.xpose.msra.mxu0 0
        %1865 = vmatprep.subr.bf16.mxu0 0
        %1866 = vmatpush1.bf16.xpose.msra.mxu0 0
        %1867 = vmatprep.subr.bf16.mxu0 0
        %1868 = vmatpush1.bf16.xpose.msra.mxu0 0
        %1869 = vmatprep.subr.bf16.mxu0 0
        %1870 = vmatpush1.bf16.xpose.msra.mxu0 0
        %1871 = vmatprep.subr.bf16.mxu0 0
        %1872 = vmatpush1.bf16.xpose.msra.mxu0 0
        %1873 = vmatprep.subr.bf16.mxu0 0
        %1874 = vmatpush1.bf16.xpose.msra.mxu0 0
        %1875 = vmatprep.subr.bf16.mxu0 0
        %1876 = vmatpush1.bf16.xpose.msra.mxu0 0
        %1877 = vmatprep.mubr.bf16.mxu0 0
        %1878 = vmatmul.mubr.bf16.gmra.mrb[0].mxu0 %v1822
        %v1879 = vpop.f32.mrb[0].mxu0
        %v1880 = vadd.f32 0.0, %v1879
        %v1881 = vpop.f32.mrb[0].mxu0
        %v1882 = vpop.f32.mrb[0].mxu0
        %v1883 = vadd.f32 0.0, %v1882
        %v1884 = vpop.f32.mrb[0].mxu0
        %1885 = vmatprep.mubr.bf16.mxu0 0
        %1886 = vmatmul.mubr.bf16.gmra.mrb[0].mxu0 %v1825
        %v1887 = vpop.f32.mrb[0].mxu0
        %v1888 = vadd.f32 0.0, %v1887
        %v1889 = vpop.f32.mrb[0].mxu0
        %v1890 = vpop.f32.mrb[0].mxu0
        %v1891 = vadd.f32 0.0, %v1890
        %v1892 = vpop.f32.mrb[0].mxu0
        %1893 = vmatprep.mubr.bf16.mxu0 0
        %1894 = vmatmul.mubr.bf16.gmra.mrb[0].mxu0 %v1828
        %v1895 = vpop.f32.mrb[0].mxu0
        %v1896 = vadd.f32 0.0, %v1895
        %v1897 = vpop.f32.mrb[0].mxu0
        %v1898 = vpop.f32.mrb[0].mxu0
        %v1899 = vadd.f32 0.0, %v1898
        %v1900 = vpop.f32.mrb[0].mxu0
        %1901 = vmatprep.mubr.bf16.mxu0 0
        %1902 = vmatmul.mubr.bf16.gmra.mrb[0].mxu0 %v1831
        %v1903 = vpop.f32.mrb[0].mxu0
        %v1904 = vadd.f32 0.0, %v1903
        %v1905 = vpop.f32.mrb[0].mxu0
        %v1906 = vpop.f32.mrb[0].mxu0
        %v1907 = vadd.f32 0.0, %v1906
        %v1908 = vpop.f32.mrb[0].mxu0
        %1909 = vdwg.mxu0
        %1914 = vrot.lane.b32.xlu0 %v1457, 96
        %v1915 = vpop.permute.xlu0 %1914
        %1916 = vrot.lane.b32.xlu0 %v1458, 96
        %v1917 = vpop.permute.xlu0 %1916
        %1918 = vrot.lane.b32.xlu0 %v1459, 96
        %v1919 = vpop.permute.xlu0 %1918
        %1920 = vrot.lane.b32.xlu0 %v1460, 96
        %v1921 = vpop.permute.xlu0 %1920
        %v1923 = vsel %vm1517, %v1457, 0
        %v1926 = vsel %vm1517, %v1458, 0
        %v1929 = vsel %vm1517, %v1459, 0
        %v1932 = vsel %vm1517, %v1460, 0
        %v1935 = vsel %vm1517, %v1915, 0
        %v1938 = vsel %vm1517, %v1917, 0
        %v1941 = vsel %vm1517, %v1919, 0
        %v1944 = vsel %vm1517, %v1921, 0
        %1946 = vmatprep.subr.bf16.mxu0 0
        %1947 = vmatpush1.bf16.xpose.msra.mxu0 %v1935
        %1948 = vmatprep.subr.bf16.mxu0 0
        %1949 = vmatpush1.bf16.xpose.msra.mxu0 %v1938
        %1950 = vmatprep.subr.bf16.mxu0 0
        %1951 = vmatpush1.bf16.xpose.msra.mxu0 %v1941
        %1952 = vmatprep.subr.bf16.mxu0 0
        %1953 = vmatpush1.bf16.xpose.msra.mxu0 %v1944
        %1954 = vmatprep.subr.bf16.mxu0 0
        %1955 = vmatpush1.bf16.xpose.msra.mxu0 0
        %1956 = vmatprep.subr.bf16.mxu0 0
        %1957 = vmatpush1.bf16.xpose.msra.mxu0 0
        %1958 = vmatprep.subr.bf16.mxu0 0
        %1959 = vmatpush1.bf16.xpose.msra.mxu0 0
        %1960 = vmatprep.subr.bf16.mxu0 0
        %1961 = vmatpush1.bf16.xpose.msra.mxu0 0
        %1962 = vmatprep.subr.bf16.mxu0 0
        %1963 = vmatpush1.bf16.xpose.msra.mxu0 0
        %1964 = vmatprep.subr.bf16.mxu0 0
        %1965 = vmatpush1.bf16.xpose.msra.mxu0 0
        %1966 = vmatprep.subr.bf16.mxu0 0
        %1967 = vmatpush1.bf16.xpose.msra.mxu0 0
        %1968 = vmatprep.subr.bf16.mxu0 0
        %1969 = vmatpush1.bf16.xpose.msra.mxu0 0
        %1970 = vmatprep.subr.bf16.mxu0 0
        %1971 = vmatpush1.bf16.xpose.msra.mxu0 0
        %1972 = vmatprep.subr.bf16.mxu0 0
        %1973 = vmatpush1.bf16.xpose.msra.mxu0 0
        %1974 = vmatprep.subr.bf16.mxu0 0
        %1975 = vmatpush1.bf16.xpose.msra.mxu0 0
        %1976 = vmatprep.subr.bf16.mxu0 0
        %1977 = vmatpush1.bf16.xpose.msra.mxu0 0
        %1978 = vmatprep.mubr.bf16.mxu0 0
        %1979 = vmatmul.mubr.bf16.gmra.mrb[0].mxu0 %v1923
        %v1980 = vpop.f32.mrb[0].mxu0
        %v1981 = vadd.f32 0.0, %v1980
        %v1982 = vpop.f32.mrb[0].mxu0
        %v1983 = vpop.f32.mrb[0].mxu0
        %v1984 = vadd.f32 0.0, %v1983
        %v1985 = vpop.f32.mrb[0].mxu0
        %1986 = vmatprep.mubr.bf16.mxu0 0
        %1987 = vmatmul.mubr.bf16.gmra.mrb[0].mxu0 %v1926
        %v1988 = vpop.f32.mrb[0].mxu0
        %v1989 = vadd.f32 0.0, %v1988
        %v1990 = vpop.f32.mrb[0].mxu0
        %v1991 = vpop.f32.mrb[0].mxu0
        %v1992 = vadd.f32 0.0, %v1991
        %v1993 = vpop.f32.mrb[0].mxu0
        %1994 = vmatprep.mubr.bf16.mxu0 0
        %1995 = vmatmul.mubr.bf16.gmra.mrb[0].mxu0 %v1929
        %v1996 = vpop.f32.mrb[0].mxu0
        %v1997 = vadd.f32 0.0, %v1996
        %v1998 = vpop.f32.mrb[0].mxu0
        %v1999 = vpop.f32.mrb[0].mxu0
        %v2000 = vadd.f32 0.0, %v1999
        %v2001 = vpop.f32.mrb[0].mxu0
        %2002 = vmatprep.mubr.bf16.mxu0 0
        %2003 = vmatmul.mubr.bf16.gmra.mrb[0].mxu0 %v1932
        %v2004 = vpop.f32.mrb[0].mxu0
        %v2005 = vadd.f32 0.0, %v2004
        %v2006 = vpop.f32.mrb[0].mxu0
        %v2007 = vpop.f32.mrb[0].mxu0
        %v2008 = vadd.f32 0.0, %v2007
        %v2009 = vpop.f32.mrb[0].mxu0
        %2010 = vdwg.mxu0
        %2015 = vrot.lane.b32.xlu0 %v1461, 96
        %v2016 = vpop.permute.xlu0 %2015
        %2017 = vrot.lane.b32.xlu0 %v1462, 96
        %v2018 = vpop.permute.xlu0 %2017
        %2019 = vrot.lane.b32.xlu0 %v1463, 96
        %v2020 = vpop.permute.xlu0 %2019
        %2021 = vrot.lane.b32.xlu0 %v1464, 96
        %v2022 = vpop.permute.xlu0 %2021
        %v2024 = vsel %vm1517, %v1461, 0
        %v2027 = vsel %vm1517, %v1462, 0
        %v2030 = vsel %vm1517, %v1463, 0
        %v2033 = vsel %vm1517, %v1464, 0
        %v2036 = vsel %vm1517, %v2016, 0
        %v2039 = vsel %vm1517, %v2018, 0
        %v2042 = vsel %vm1517, %v2020, 0
        %v2045 = vsel %vm1517, %v2022, 0
        %2047 = vmatprep.subr.bf16.mxu0 0
        %2048 = vmatpush1.bf16.xpose.msra.mxu0 %v2036
        %2049 = vmatprep.subr.bf16.mxu0 0
        %2050 = vmatpush1.bf16.xpose.msra.mxu0 %v2039
        %2051 = vmatprep.subr.bf16.mxu0 0
        %2052 = vmatpush1.bf16.xpose.msra.mxu0 %v2042
        %2053 = vmatprep.subr.bf16.mxu0 0
        %2054 = vmatpush1.bf16.xpose.msra.mxu0 %v2045
        %2055 = vmatprep.subr.bf16.mxu0 0
        %2056 = vmatpush1.bf16.xpose.msra.mxu0 0
        %2057 = vmatprep.subr.bf16.mxu0 0
        %2058 = vmatpush1.bf16.xpose.msra.mxu0 0
        %2059 = vmatprep.subr.bf16.mxu0 0
        %2060 = vmatpush1.bf16.xpose.msra.mxu0 0
        %2061 = vmatprep.subr.bf16.mxu0 0
        %2062 = vmatpush1.bf16.xpose.msra.mxu0 0
        %2063 = vmatprep.subr.bf16.mxu0 0
        %2064 = vmatpush1.bf16.xpose.msra.mxu0 0
        %2065 = vmatprep.subr.bf16.mxu0 0
        %2066 = vmatpush1.bf16.xpose.msra.mxu0 0
        %2067 = vmatprep.subr.bf16.mxu0 0
        %2068 = vmatpush1.bf16.xpose.msra.mxu0 0
        %2069 = vmatprep.subr.bf16.mxu0 0
        %2070 = vmatpush1.bf16.xpose.msra.mxu0 0
        %2071 = vmatprep.subr.bf16.mxu0 0
        %2072 = vmatpush1.bf16.xpose.msra.mxu0 0
        %2073 = vmatprep.subr.bf16.mxu0 0
        %2074 = vmatpush1.bf16.xpose.msra.mxu0 0
        %2075 = vmatprep.subr.bf16.mxu0 0
        %2076 = vmatpush1.bf16.xpose.msra.mxu0 0
        %2077 = vmatprep.subr.bf16.mxu0 0
        %2078 = vmatpush1.bf16.xpose.msra.mxu0 0
        %2079 = vmatprep.mubr.bf16.mxu0 0
        %2080 = vmatmul.mubr.bf16.gmra.mrb[0].mxu0 %v2024
        %v2081 = vpop.f32.mrb[0].mxu0
        %v2082 = vadd.f32 0.0, %v2081
        %v2083 = vpop.f32.mrb[0].mxu0
        %v2084 = vpop.f32.mrb[0].mxu0
        %v2085 = vadd.f32 0.0, %v2084
        %v2086 = vpop.f32.mrb[0].mxu0
        %2087 = vmatprep.mubr.bf16.mxu0 0
        %2088 = vmatmul.mubr.bf16.gmra.mrb[0].mxu0 %v2027
        %v2089 = vpop.f32.mrb[0].mxu0
        %v2090 = vadd.f32 0.0, %v2089
        %v2091 = vpop.f32.mrb[0].mxu0
        %v2092 = vpop.f32.mrb[0].mxu0
        %v2093 = vadd.f32 0.0, %v2092
        %v2094 = vpop.f32.mrb[0].mxu0
        %2095 = vmatprep.mubr.bf16.mxu0 0
        %2096 = vmatmul.mubr.bf16.gmra.mrb[0].mxu0 %v2030
        %v2097 = vpop.f32.mrb[0].mxu0
        %v2098 = vadd.f32 0.0, %v2097
        %v2099 = vpop.f32.mrb[0].mxu0
        %v2100 = vpop.f32.mrb[0].mxu0
        %v2101 = vadd.f32 0.0, %v2100
        %v2102 = vpop.f32.mrb[0].mxu0
        %2103 = vmatprep.mubr.bf16.mxu0 0
        %2104 = vmatmul.mubr.bf16.gmra.mrb[0].mxu0 %v2033
        %v2105 = vpop.f32.mrb[0].mxu0
        %v2106 = vadd.f32 0.0, %v2105
        %v2107 = vpop.f32.mrb[0].mxu0
        %v2108 = vpop.f32.mrb[0].mxu0
        %v2109 = vadd.f32 0.0, %v2108
        %v2110 = vpop.f32.mrb[0].mxu0
        %2111 = vdwg.mxu0
        %2116 = vrot.lane.b32.xlu0 %v1465, 96
        %v2117 = vpop.permute.xlu0 %2116
        %2118 = vrot.lane.b32.xlu0 %v1466, 96
        %v2119 = vpop.permute.xlu0 %2118
        %2120 = vrot.lane.b32.xlu0 %v1467, 96
        %v2121 = vpop.permute.xlu0 %2120
        %2122 = vrot.lane.b32.xlu0 %v1468, 96
        %v2123 = vpop.permute.xlu0 %2122
        %v2125 = vsel %vm1517, %v1465, 0
        %v2128 = vsel %vm1517, %v1466, 0
        %v2131 = vsel %vm1517, %v1467, 0
        %v2134 = vsel %vm1517, %v1468, 0
        %v2137 = vsel %vm1517, %v2117, 0
        %v2140 = vsel %vm1517, %v2119, 0
        %v2143 = vsel %vm1517, %v2121, 0
        %v2146 = vsel %vm1517, %v2123, 0
        %2148 = vmatprep.subr.bf16.mxu0 0
        %2149 = vmatpush1.bf16.xpose.msra.mxu0 %v2137
        %2150 = vmatprep.subr.bf16.mxu0 0
        %2151 = vmatpush1.bf16.xpose.msra.mxu0 %v2140
        %2152 = vmatprep.subr.bf16.mxu0 0
        %2153 = vmatpush1.bf16.xpose.msra.mxu0 %v2143
        %2154 = vmatprep.subr.bf16.mxu0 0
        %2155 = vmatpush1.bf16.xpose.msra.mxu0 %v2146
        %2156 = vmatprep.subr.bf16.mxu0 0
        %2157 = vmatpush1.bf16.xpose.msra.mxu0 0
        %2158 = vmatprep.subr.bf16.mxu0 0
        %2159 = vmatpush1.bf16.xpose.msra.mxu0 0
        %2160 = vmatprep.subr.bf16.mxu0 0
        %2161 = vmatpush1.bf16.xpose.msra.mxu0 0
        %2162 = vmatprep.subr.bf16.mxu0 0
        %2163 = vmatpush1.bf16.xpose.msra.mxu0 0
        %2164 = vmatprep.subr.bf16.mxu0 0
        %2165 = vmatpush1.bf16.xpose.msra.mxu0 0
        %2166 = vmatprep.subr.bf16.mxu0 0
        %2167 = vmatpush1.bf16.xpose.msra.mxu0 0
        %2168 = vmatprep.subr.bf16.mxu0 0
        %2169 = vmatpush1.bf16.xpose.msra.mxu0 0
        %2170 = vmatprep.subr.bf16.mxu0 0
        %2171 = vmatpush1.bf16.xpose.msra.mxu0 0
        %2172 = vmatprep.subr.bf16.mxu0 0
        %2173 = vmatpush1.bf16.xpose.msra.mxu0 0
        %2174 = vmatprep.subr.bf16.mxu0 0
        %2175 = vmatpush1.bf16.xpose.msra.mxu0 0
        %2176 = vmatprep.subr.bf16.mxu0 0
        %2177 = vmatpush1.bf16.xpose.msra.mxu0 0
        %2178 = vmatprep.subr.bf16.mxu0 0
        %2179 = vmatpush1.bf16.xpose.msra.mxu0 0
        %2180 = vmatprep.mubr.bf16.mxu0 0
        %2181 = vmatmul.mubr.bf16.gmra.mrb[0].mxu0 %v2125
        %v2182 = vpop.f32.mrb[0].mxu0
        %v2183 = vadd.f32 0.0, %v2182
        %v2184 = vpop.f32.mrb[0].mxu0
        %v2185 = vpop.f32.mrb[0].mxu0
        %v2186 = vadd.f32 0.0, %v2185
        %v2187 = vpop.f32.mrb[0].mxu0
        %2188 = vmatprep.mubr.bf16.mxu0 0
        %2189 = vmatmul.mubr.bf16.gmra.mrb[0].mxu0 %v2128
        %v2190 = vpop.f32.mrb[0].mxu0
        %v2191 = vadd.f32 0.0, %v2190
        %v2192 = vpop.f32.mrb[0].mxu0
        %v2193 = vpop.f32.mrb[0].mxu0
        %v2194 = vadd.f32 0.0, %v2193
        %v2195 = vpop.f32.mrb[0].mxu0
        %2196 = vmatprep.mubr.bf16.mxu0 0
        %2197 = vmatmul.mubr.bf16.gmra.mrb[0].mxu0 %v2131
        %v2198 = vpop.f32.mrb[0].mxu0
        %v2199 = vadd.f32 0.0, %v2198
        %v2200 = vpop.f32.mrb[0].mxu0
        %v2201 = vpop.f32.mrb[0].mxu0
        %v2202 = vadd.f32 0.0, %v2201
        %v2203 = vpop.f32.mrb[0].mxu0
        %2204 = vmatprep.mubr.bf16.mxu0 0
        %2205 = vmatmul.mubr.bf16.gmra.mrb[0].mxu0 %v2134
        %v2206 = vpop.f32.mrb[0].mxu0
        %v2207 = vadd.f32 0.0, %v2206
        %v2208 = vpop.f32.mrb[0].mxu0
        %v2209 = vpop.f32.mrb[0].mxu0
        %v2210 = vadd.f32 0.0, %v2209
        %v2211 = vpop.f32.mrb[0].mxu0
        %2212 = vdwg.mxu0
        %2217 = vrot.lane.b32.xlu0 %v1469, 96
        %v2218 = vpop.permute.xlu0 %2217
        %2219 = vrot.lane.b32.xlu0 %v1470, 96
        %v2220 = vpop.permute.xlu0 %2219
        %2221 = vrot.lane.b32.xlu0 %v1471, 96
        %v2222 = vpop.permute.xlu0 %2221
        %2223 = vrot.lane.b32.xlu0 %v1472, 96
        %v2224 = vpop.permute.xlu0 %2223
        %v2226 = vsel %vm1517, %v1469, 0
        %v2229 = vsel %vm1517, %v1470, 0
        %v2232 = vsel %vm1517, %v1471, 0
        %v2235 = vsel %vm1517, %v1472, 0
        %v2238 = vsel %vm1517, %v2218, 0
        %v2241 = vsel %vm1517, %v2220, 0
        %v2244 = vsel %vm1517, %v2222, 0
        %v2247 = vsel %vm1517, %v2224, 0
        %2249 = vmatprep.subr.bf16.mxu0 0
        %2250 = vmatpush1.bf16.xpose.msra.mxu0 %v2238
        %2251 = vmatprep.subr.bf16.mxu0 0
        %2252 = vmatpush1.bf16.xpose.msra.mxu0 %v2241
        %2253 = vmatprep.subr.bf16.mxu0 0
        %2254 = vmatpush1.bf16.xpose.msra.mxu0 %v2244
        %2255 = vmatprep.subr.bf16.mxu0 0
        %2256 = vmatpush1.bf16.xpose.msra.mxu0 %v2247
        %2257 = vmatprep.subr.bf16.mxu0 0
        %2258 = vmatpush1.bf16.xpose.msra.mxu0 0
        %2259 = vmatprep.subr.bf16.mxu0 0
        %2260 = vmatpush1.bf16.xpose.msra.mxu0 0
        %2261 = vmatprep.subr.bf16.mxu0 0
        %2262 = vmatpush1.bf16.xpose.msra.mxu0 0
        %2263 = vmatprep.subr.bf16.mxu0 0
        %2264 = vmatpush1.bf16.xpose.msra.mxu0 0
        %2265 = vmatprep.subr.bf16.mxu0 0
        %2266 = vmatpush1.bf16.xpose.msra.mxu0 0
        %2267 = vmatprep.subr.bf16.mxu0 0
        %2268 = vmatpush1.bf16.xpose.msra.mxu0 0
        %2269 = vmatprep.subr.bf16.mxu0 0
        %2270 = vmatpush1.bf16.xpose.msra.mxu0 0
        %2271 = vmatprep.subr.bf16.mxu0 0
        %2272 = vmatpush1.bf16.xpose.msra.mxu0 0
        %2273 = vmatprep.subr.bf16.mxu0 0
        %2274 = vmatpush1.bf16.xpose.msra.mxu0 0
        %2275 = vmatprep.subr.bf16.mxu0 0
        %2276 = vmatpush1.bf16.xpose.msra.mxu0 0
        %2277 = vmatprep.subr.bf16.mxu0 0
        %2278 = vmatpush1.bf16.xpose.msra.mxu0 0
        %2279 = vmatprep.subr.bf16.mxu0 0
        %2280 = vmatpush1.bf16.xpose.msra.mxu0 0
        %2281 = vmatprep.mubr.bf16.mxu0 0
        %2282 = vmatmul.mubr.bf16.gmra.mrb[0].mxu0 %v2226
        %v2283 = vpop.f32.mrb[0].mxu0
        %v2284 = vadd.f32 0.0, %v2283
        %v2285 = vpop.f32.mrb[0].mxu0
        %v2286 = vpop.f32.mrb[0].mxu0
        %v2287 = vadd.f32 0.0, %v2286
        %v2288 = vpop.f32.mrb[0].mxu0
        %2289 = vmatprep.mubr.bf16.mxu0 0
        %2290 = vmatmul.mubr.bf16.gmra.mrb[0].mxu0 %v2229
        %v2291 = vpop.f32.mrb[0].mxu0
        %v2292 = vadd.f32 0.0, %v2291
        %v2293 = vpop.f32.mrb[0].mxu0
        %v2294 = vpop.f32.mrb[0].mxu0
        %v2295 = vadd.f32 0.0, %v2294
        %v2296 = vpop.f32.mrb[0].mxu0
        %2297 = vmatprep.mubr.bf16.mxu0 0
        %2298 = vmatmul.mubr.bf16.gmra.mrb[0].mxu0 %v2232
        %v2299 = vpop.f32.mrb[0].mxu0
        %v2300 = vadd.f32 0.0, %v2299
        %v2301 = vpop.f32.mrb[0].mxu0
        %v2302 = vpop.f32.mrb[0].mxu0
        %v2303 = vadd.f32 0.0, %v2302
        %v2304 = vpop.f32.mrb[0].mxu0
        %2305 = vmatprep.mubr.bf16.mxu0 0
        %2306 = vmatmul.mubr.bf16.gmra.mrb[0].mxu0 %v2235
        %v2307 = vpop.f32.mrb[0].mxu0
        %v2308 = vadd.f32 0.0, %v2307
        %v2309 = vpop.f32.mrb[0].mxu0
        %v2310 = vpop.f32.mrb[0].mxu0
        %v2311 = vadd.f32 0.0, %v2310
        %v2312 = vpop.f32.mrb[0].mxu0
        %2313 = vdwg.mxu0
        %2318 = vrot.lane.b32.xlu0 %v1473, 96
        %v2319 = vpop.permute.xlu0 %2318
        %2320 = vrot.lane.b32.xlu0 %v1474, 96
        %v2321 = vpop.permute.xlu0 %2320
        %2322 = vrot.lane.b32.xlu0 %v1475, 96
        %v2323 = vpop.permute.xlu0 %2322
        %2324 = vrot.lane.b32.xlu0 %v1476, 96
        %v2325 = vpop.permute.xlu0 %2324
        %v2327 = vsel %vm1517, %v1473, 0
        %v2330 = vsel %vm1517, %v1474, 0
        %v2333 = vsel %vm1517, %v1475, 0
        %v2336 = vsel %vm1517, %v1476, 0
        %v2339 = vsel %vm1517, %v2319, 0
        %v2342 = vsel %vm1517, %v2321, 0
        %v2345 = vsel %vm1517, %v2323, 0
        %v2348 = vsel %vm1517, %v2325, 0
        %2350 = vmatprep.subr.bf16.mxu0 0
        %2351 = vmatpush1.bf16.xpose.msra.mxu0 %v2339
        %2352 = vmatprep.subr.bf16.mxu0 0
        %2353 = vmatpush1.bf16.xpose.msra.mxu0 %v2342
        %2354 = vmatprep.subr.bf16.mxu0 0
        %2355 = vmatpush1.bf16.xpose.msra.mxu0 %v2345
        %2356 = vmatprep.subr.bf16.mxu0 0
        %2357 = vmatpush1.bf16.xpose.msra.mxu0 %v2348
        %2358 = vmatprep.subr.bf16.mxu0 0
        %2359 = vmatpush1.bf16.xpose.msra.mxu0 0
        %2360 = vmatprep.subr.bf16.mxu0 0
        %2361 = vmatpush1.bf16.xpose.msra.mxu0 0
        %2362 = vmatprep.subr.bf16.mxu0 0
        %2363 = vmatpush1.bf16.xpose.msra.mxu0 0
        %2364 = vmatprep.subr.bf16.mxu0 0
        %2365 = vmatpush1.bf16.xpose.msra.mxu0 0
        %2366 = vmatprep.subr.bf16.mxu0 0
        %2367 = vmatpush1.bf16.xpose.msra.mxu0 0
        %2368 = vmatprep.subr.bf16.mxu0 0
        %2369 = vmatpush1.bf16.xpose.msra.mxu0 0
        %2370 = vmatprep.subr.bf16.mxu0 0
        %2371 = vmatpush1.bf16.xpose.msra.mxu0 0
        %2372 = vmatprep.subr.bf16.mxu0 0
        %2373 = vmatpush1.bf16.xpose.msra.mxu0 0
        %2374 = vmatprep.subr.bf16.mxu0 0
        %2375 = vmatpush1.bf16.xpose.msra.mxu0 0
        %2376 = vmatprep.subr.bf16.mxu0 0
        %2377 = vmatpush1.bf16.xpose.msra.mxu0 0
        %2378 = vmatprep.subr.bf16.mxu0 0
        %2379 = vmatpush1.bf16.xpose.msra.mxu0 0
        %2380 = vmatprep.subr.bf16.mxu0 0
        %2381 = vmatpush1.bf16.xpose.msra.mxu0 0
        %2382 = vmatprep.mubr.bf16.mxu0 0
        %2383 = vmatmul.mubr.bf16.gmra.mrb[0].mxu0 %v2327
        %v2384 = vpop.f32.mrb[0].mxu0
        %v2385 = vadd.f32 0.0, %v2384
        %v2386 = vpop.f32.mrb[0].mxu0
        %v2387 = vpop.f32.mrb[0].mxu0
        %v2388 = vadd.f32 0.0, %v2387
        %v2389 = vpop.f32.mrb[0].mxu0
        %2390 = vmatprep.mubr.bf16.mxu0 0
        %2391 = vmatmul.mubr.bf16.gmra.mrb[0].mxu0 %v2330
        %v2392 = vpop.f32.mrb[0].mxu0
        %v2393 = vadd.f32 0.0, %v2392
        %v2394 = vpop.f32.mrb[0].mxu0
        %v2395 = vpop.f32.mrb[0].mxu0
        %v2396 = vadd.f32 0.0, %v2395
        %v2397 = vpop.f32.mrb[0].mxu0
        %2398 = vmatprep.mubr.bf16.mxu0 0
        %2399 = vmatmul.mubr.bf16.gmra.mrb[0].mxu0 %v2333
        %v2400 = vpop.f32.mrb[0].mxu0
        %v2401 = vadd.f32 0.0, %v2400
        %v2402 = vpop.f32.mrb[0].mxu0
        %v2403 = vpop.f32.mrb[0].mxu0
        %v2404 = vadd.f32 0.0, %v2403
        %v2405 = vpop.f32.mrb[0].mxu0
        %2406 = vmatprep.mubr.bf16.mxu0 0
        %2407 = vmatmul.mubr.bf16.gmra.mrb[0].mxu0 %v2336
        %v2408 = vpop.f32.mrb[0].mxu0
        %v2409 = vadd.f32 0.0, %v2408
        %v2410 = vpop.f32.mrb[0].mxu0
        %v2411 = vpop.f32.mrb[0].mxu0
        %v2412 = vadd.f32 0.0, %v2411
        %v2413 = vpop.f32.mrb[0].mxu0
        %2414 = vdwg.mxu0
        %2419 = vrot.lane.b32.xlu0 %v1477, 96
        %v2420 = vpop.permute.xlu0 %2419
        %2421 = vrot.lane.b32.xlu0 %v1478, 96
        %v2422 = vpop.permute.xlu0 %2421
        %2423 = vrot.lane.b32.xlu0 %v1479, 96
        %v2424 = vpop.permute.xlu0 %2423
        %2425 = vrot.lane.b32.xlu0 %v1480, 96
        %v2426 = vpop.permute.xlu0 %2425
        %v2428 = vsel %vm1517, %v1477, 0
        %v2431 = vsel %vm1517, %v1478, 0
        %v2434 = vsel %vm1517, %v1479, 0
        %v2437 = vsel %vm1517, %v1480, 0
        %v2440 = vsel %vm1517, %v2420, 0
        %v2443 = vsel %vm1517, %v2422, 0
        %v2446 = vsel %vm1517, %v2424, 0
        %v2449 = vsel %vm1517, %v2426, 0
        %2451 = vmatprep.subr.bf16.mxu0 0
        %2452 = vmatpush1.bf16.xpose.msra.mxu0 %v2440
        %2453 = vmatprep.subr.bf16.mxu0 0
        %2454 = vmatpush1.bf16.xpose.msra.mxu0 %v2443
        %2455 = vmatprep.subr.bf16.mxu0 0
        %2456 = vmatpush1.bf16.xpose.msra.mxu0 %v2446
        %2457 = vmatprep.subr.bf16.mxu0 0
        %2458 = vmatpush1.bf16.xpose.msra.mxu0 %v2449
        %2459 = vmatprep.subr.bf16.mxu0 0
        %2460 = vmatpush1.bf16.xpose.msra.mxu0 0
        %2461 = vmatprep.subr.bf16.mxu0 0
        %2462 = vmatpush1.bf16.xpose.msra.mxu0 0
        %2463 = vmatprep.subr.bf16.mxu0 0
        %2464 = vmatpush1.bf16.xpose.msra.mxu0 0
        %2465 = vmatprep.subr.bf16.mxu0 0
        %2466 = vmatpush1.bf16.xpose.msra.mxu0 0
        %2467 = vmatprep.subr.bf16.mxu0 0
        %2468 = vmatpush1.bf16.xpose.msra.mxu0 0
        %2469 = vmatprep.subr.bf16.mxu0 0
        %2470 = vmatpush1.bf16.xpose.msra.mxu0 0
        %2471 = vmatprep.subr.bf16.mxu0 0
        %2472 = vmatpush1.bf16.xpose.msra.mxu0 0
        %2473 = vmatprep.subr.bf16.mxu0 0
        %2474 = vmatpush1.bf16.xpose.msra.mxu0 0
        %2475 = vmatprep.subr.bf16.mxu0 0
        %2476 = vmatpush1.bf16.xpose.msra.mxu0 0
        %2477 = vmatprep.subr.bf16.mxu0 0
        %2478 = vmatpush1.bf16.xpose.msra.mxu0 0
        %2479 = vmatprep.subr.bf16.mxu0 0
        %2480 = vmatpush1.bf16.xpose.msra.mxu0 0
        %2481 = vmatprep.subr.bf16.mxu0 0
        %2482 = vmatpush1.bf16.xpose.msra.mxu0 0
        %2483 = vmatprep.mubr.bf16.mxu0 0
        %2484 = vmatmul.mubr.bf16.gmra.mrb[0].mxu0 %v2428
        %v2485 = vpop.f32.mrb[0].mxu0
        %v2486 = vadd.f32 0.0, %v2485
        %v2487 = vpop.f32.mrb[0].mxu0
        %v2488 = vpop.f32.mrb[0].mxu0
        %v2489 = vadd.f32 0.0, %v2488
        %v2490 = vpop.f32.mrb[0].mxu0
        %2491 = vmatprep.mubr.bf16.mxu0 0
        %2492 = vmatmul.mubr.bf16.gmra.mrb[0].mxu0 %v2431
        %v2493 = vpop.f32.mrb[0].mxu0
        %v2494 = vadd.f32 0.0, %v2493
        %v2495 = vpop.f32.mrb[0].mxu0
        %v2496 = vpop.f32.mrb[0].mxu0
        %v2497 = vadd.f32 0.0, %v2496
        %v2498 = vpop.f32.mrb[0].mxu0
        %2499 = vmatprep.mubr.bf16.mxu0 0
        %2500 = vmatmul.mubr.bf16.gmra.mrb[0].mxu0 %v2434
        %v2501 = vpop.f32.mrb[0].mxu0
        %v2502 = vadd.f32 0.0, %v2501
        %v2503 = vpop.f32.mrb[0].mxu0
        %v2504 = vpop.f32.mrb[0].mxu0
        %v2505 = vadd.f32 0.0, %v2504
        %v2506 = vpop.f32.mrb[0].mxu0
        %2507 = vmatprep.mubr.bf16.mxu0 0
        %2508 = vmatmul.mubr.bf16.gmra.mrb[0].mxu0 %v2437
        %v2509 = vpop.f32.mrb[0].mxu0
        %v2510 = vadd.f32 0.0, %v2509
        %v2511 = vpop.f32.mrb[0].mxu0
        %v2512 = vpop.f32.mrb[0].mxu0
        %v2513 = vadd.f32 0.0, %v2512
        %v2514 = vpop.f32.mrb[0].mxu0
        %2515 = vdwg.mxu0
        %2520 = vrot.lane.b32.xlu0 %v1481, 96
        %v2521 = vpop.permute.xlu0 %2520
        %2522 = vrot.lane.b32.xlu0 %v1482, 96
        %v2523 = vpop.permute.xlu0 %2522
        %2524 = vrot.lane.b32.xlu0 %v1483, 96
        %v2525 = vpop.permute.xlu0 %2524
        %2526 = vrot.lane.b32.xlu0 %v1484, 96
        %v2527 = vpop.permute.xlu0 %2526
        %v2529 = vsel %vm1517, %v1481, 0
        %v2532 = vsel %vm1517, %v1482, 0
        %v2535 = vsel %vm1517, %v1483, 0
        %v2538 = vsel %vm1517, %v1484, 0
        %v2541 = vsel %vm1517, %v2521, 0
        %v2544 = vsel %vm1517, %v2523, 0
        %v2547 = vsel %vm1517, %v2525, 0
        %v2550 = vsel %vm1517, %v2527, 0
        %2552 = vmatprep.subr.bf16.mxu0 0
        %2553 = vmatpush1.bf16.xpose.msra.mxu0 %v2541
        %2554 = vmatprep.subr.bf16.mxu0 0
        %2555 = vmatpush1.bf16.xpose.msra.mxu0 %v2544
        %2556 = vmatprep.subr.bf16.mxu0 0
        %2557 = vmatpush1.bf16.xpose.msra.mxu0 %v2547
        %2558 = vmatprep.subr.bf16.mxu0 0
        %2559 = vmatpush1.bf16.xpose.msra.mxu0 %v2550
        %2560 = vmatprep.subr.bf16.mxu0 0
        %2561 = vmatpush1.bf16.xpose.msra.mxu0 0
        %2562 = vmatprep.subr.bf16.mxu0 0
        %2563 = vmatpush1.bf16.xpose.msra.mxu0 0
        %2564 = vmatprep.subr.bf16.mxu0 0
        %2565 = vmatpush1.bf16.xpose.msra.mxu0 0
        %2566 = vmatprep.subr.bf16.mxu0 0
        %2567 = vmatpush1.bf16.xpose.msra.mxu0 0
        %2568 = vmatprep.subr.bf16.mxu0 0
        %2569 = vmatpush1.bf16.xpose.msra.mxu0 0
        %2570 = vmatprep.subr.bf16.mxu0 0
        %2571 = vmatpush1.bf16.xpose.msra.mxu0 0
        %2572 = vmatprep.subr.bf16.mxu0 0
        %2573 = vmatpush1.bf16.xpose.msra.mxu0 0
        %2574 = vmatprep.subr.bf16.mxu0 0
        %2575 = vmatpush1.bf16.xpose.msra.mxu0 0
        %2576 = vmatprep.subr.bf16.mxu0 0
        %2577 = vmatpush1.bf16.xpose.msra.mxu0 0
        %2578 = vmatprep.subr.bf16.mxu0 0
        %2579 = vmatpush1.bf16.xpose.msra.mxu0 0
        %2580 = vmatprep.subr.bf16.mxu0 0
        %2581 = vmatpush1.bf16.xpose.msra.mxu0 0
        %2582 = vmatprep.subr.bf16.mxu0 0
        %2583 = vmatpush1.bf16.xpose.msra.mxu0 0
        %2584 = vmatprep.mubr.bf16.mxu0 0
        %2585 = vmatmul.mubr.bf16.gmra.mrb[0].mxu0 %v2529
        %v2586 = vpop.f32.mrb[0].mxu0
        %v2587 = vadd.f32 0.0, %v2586
        %v2588 = vpop.f32.mrb[0].mxu0
        %v2589 = vpop.f32.mrb[0].mxu0
        %v2590 = vadd.f32 0.0, %v2589
        %v2591 = vpop.f32.mrb[0].mxu0
        %2592 = vmatprep.mubr.bf16.mxu0 0
        %2593 = vmatmul.mubr.bf16.gmra.mrb[0].mxu0 %v2532
        %v2594 = vpop.f32.mrb[0].mxu0
        %v2595 = vadd.f32 0.0, %v2594
        %v2596 = vpop.f32.mrb[0].mxu0
        %v2597 = vpop.f32.mrb[0].mxu0
        %v2598 = vadd.f32 0.0, %v2597
        %v2599 = vpop.f32.mrb[0].mxu0
        %2600 = vmatprep.mubr.bf16.mxu0 0
        %2601 = vmatmul.mubr.bf16.gmra.mrb[0].mxu0 %v2535
        %v2602 = vpop.f32.mrb[0].mxu0
        %v2603 = vadd.f32 0.0, %v2602
        %v2604 = vpop.f32.mrb[0].mxu0
        %v2605 = vpop.f32.mrb[0].mxu0
        %v2606 = vadd.f32 0.0, %v2605
        %v2607 = vpop.f32.mrb[0].mxu0
        %2608 = vmatprep.mubr.bf16.mxu0 0
        %2609 = vmatmul.mubr.bf16.gmra.mrb[0].mxu0 %v2538
        %v2610 = vpop.f32.mrb[0].mxu0
        %v2611 = vadd.f32 0.0, %v2610
        %v2612 = vpop.f32.mrb[0].mxu0
        %v2613 = vpop.f32.mrb[0].mxu0
        %v2614 = vadd.f32 0.0, %v2613
        %v2615 = vpop.f32.mrb[0].mxu0
        %2616 = vdwg.mxu0
        %2621 = vrot.lane.b32.xlu0 %v1485, 96
        %v2622 = vpop.permute.xlu0 %2621
        %2623 = vrot.lane.b32.xlu0 %v1486, 96
        %v2624 = vpop.permute.xlu0 %2623
        %2625 = vrot.lane.b32.xlu0 %v1487, 96
        %v2626 = vpop.permute.xlu0 %2625
        %2627 = vrot.lane.b32.xlu0 %v1488, 96
        %v2628 = vpop.permute.xlu0 %2627
        %v2630 = vsel %vm1517, %v1485, 0
        %v2633 = vsel %vm1517, %v1486, 0
        %v2636 = vsel %vm1517, %v1487, 0
        %v2639 = vsel %vm1517, %v1488, 0
        %v2642 = vsel %vm1517, %v2622, 0
        %v2645 = vsel %vm1517, %v2624, 0
        %v2648 = vsel %vm1517, %v2626, 0
        %v2651 = vsel %vm1517, %v2628, 0
        %2653 = vmatprep.subr.bf16.mxu0 0
        %2654 = vmatpush1.bf16.xpose.msra.mxu0 %v2642
        %2655 = vmatprep.subr.bf16.mxu0 0
        %2656 = vmatpush1.bf16.xpose.msra.mxu0 %v2645
        %2657 = vmatprep.subr.bf16.mxu0 0
        %2658 = vmatpush1.bf16.xpose.msra.mxu0 %v2648
        %2659 = vmatprep.subr.bf16.mxu0 0
        %2660 = vmatpush1.bf16.xpose.msra.mxu0 %v2651
        %2661 = vmatprep.subr.bf16.mxu0 0
        %2662 = vmatpush1.bf16.xpose.msra.mxu0 0
        %2663 = vmatprep.subr.bf16.mxu0 0
        %2664 = vmatpush1.bf16.xpose.msra.mxu0 0
        %2665 = vmatprep.subr.bf16.mxu0 0
        %2666 = vmatpush1.bf16.xpose.msra.mxu0 0
        %2667 = vmatprep.subr.bf16.mxu0 0
        %2668 = vmatpush1.bf16.xpose.msra.mxu0 0
        %2669 = vmatprep.subr.bf16.mxu0 0
        %2670 = vmatpush1.bf16.xpose.msra.mxu0 0
        %2671 = vmatprep.subr.bf16.mxu0 0
        %2672 = vmatpush1.bf16.xpose.msra.mxu0 0
        %2673 = vmatprep.subr.bf16.mxu0 0
        %2674 = vmatpush1.bf16.xpose.msra.mxu0 0
        %2675 = vmatprep.subr.bf16.mxu0 0
        %2676 = vmatpush1.bf16.xpose.msra.mxu0 0
        %2677 = vmatprep.subr.bf16.mxu0 0
        %2678 = vmatpush1.bf16.xpose.msra.mxu0 0
        %2679 = vmatprep.subr.bf16.mxu0 0
        %2680 = vmatpush1.bf16.xpose.msra.mxu0 0
        %2681 = vmatprep.subr.bf16.mxu0 0
        %2682 = vmatpush1.bf16.xpose.msra.mxu0 0
        %2683 = vmatprep.subr.bf16.mxu0 0
        %2684 = vmatpush1.bf16.xpose.msra.mxu0 0
        %2685 = vmatprep.mubr.bf16.mxu0 0
        %2686 = vmatmul.mubr.bf16.gmra.mrb[0].mxu0 %v2630
        %v2687 = vpop.f32.mrb[0].mxu0
        %v2688 = vadd.f32 0.0, %v2687
        %v2689 = vpop.f32.mrb[0].mxu0
        %v2690 = vpop.f32.mrb[0].mxu0
        %v2691 = vadd.f32 0.0, %v2690
        %v2692 = vpop.f32.mrb[0].mxu0
        %2693 = vmatprep.mubr.bf16.mxu0 0
        %2694 = vmatmul.mubr.bf16.gmra.mrb[0].mxu0 %v2633
        %v2695 = vpop.f32.mrb[0].mxu0
        %v2696 = vadd.f32 0.0, %v2695
        %v2697 = vpop.f32.mrb[0].mxu0
        %v2698 = vpop.f32.mrb[0].mxu0
        %v2699 = vadd.f32 0.0, %v2698
        %v2700 = vpop.f32.mrb[0].mxu0
        %2701 = vmatprep.mubr.bf16.mxu0 0
        %2702 = vmatmul.mubr.bf16.gmra.mrb[0].mxu0 %v2636
        %v2703 = vpop.f32.mrb[0].mxu0
        %v2704 = vadd.f32 0.0, %v2703
        %v2705 = vpop.f32.mrb[0].mxu0
        %v2706 = vpop.f32.mrb[0].mxu0
        %v2707 = vadd.f32 0.0, %v2706
        %v2708 = vpop.f32.mrb[0].mxu0
        %2709 = vmatprep.mubr.bf16.mxu0 0
        %2710 = vmatmul.mubr.bf16.gmra.mrb[0].mxu0 %v2639
        %v2711 = vpop.f32.mrb[0].mxu0
        %v2712 = vadd.f32 0.0, %v2711
        %v2713 = vpop.f32.mrb[0].mxu0
        %v2714 = vpop.f32.mrb[0].mxu0
        %v2715 = vadd.f32 0.0, %v2714
        %v2716 = vpop.f32.mrb[0].mxu0
        %2717 = vdwg.mxu0
        %2722 = vrot.lane.b32.xlu0 %v1489, 96
        %v2723 = vpop.permute.xlu0 %2722
        %2724 = vrot.lane.b32.xlu0 %v1490, 96
        %v2725 = vpop.permute.xlu0 %2724
        %2726 = vrot.lane.b32.xlu0 %v1491, 96
        %v2727 = vpop.permute.xlu0 %2726
        %2728 = vrot.lane.b32.xlu0 %v1492, 96
        %v2729 = vpop.permute.xlu0 %2728
        %v2731 = vsel %vm1517, %v1489, 0
        %v2734 = vsel %vm1517, %v1490, 0
        %v2737 = vsel %vm1517, %v1491, 0
        %v2740 = vsel %vm1517, %v1492, 0
        %v2743 = vsel %vm1517, %v2723, 0
        %v2746 = vsel %vm1517, %v2725, 0
        %v2749 = vsel %vm1517, %v2727, 0
        %v2752 = vsel %vm1517, %v2729, 0
        %2754 = vmatprep.subr.bf16.mxu0 0
        %2755 = vmatpush1.bf16.xpose.msra.mxu0 %v2743
        %2756 = vmatprep.subr.bf16.mxu0 0
        %2757 = vmatpush1.bf16.xpose.msra.mxu0 %v2746
        %2758 = vmatprep.subr.bf16.mxu0 0
        %2759 = vmatpush1.bf16.xpose.msra.mxu0 %v2749
        %2760 = vmatprep.subr.bf16.mxu0 0
        %2761 = vmatpush1.bf16.xpose.msra.mxu0 %v2752
        %2762 = vmatprep.subr.bf16.mxu0 0
        %2763 = vmatpush1.bf16.xpose.msra.mxu0 0
        %2764 = vmatprep.subr.bf16.mxu0 0
        %2765 = vmatpush1.bf16.xpose.msra.mxu0 0
        %2766 = vmatprep.subr.bf16.mxu0 0
        %2767 = vmatpush1.bf16.xpose.msra.mxu0 0
        %2768 = vmatprep.subr.bf16.mxu0 0
        %2769 = vmatpush1.bf16.xpose.msra.mxu0 0
        %2770 = vmatprep.subr.bf16.mxu0 0
        %2771 = vmatpush1.bf16.xpose.msra.mxu0 0
        %2772 = vmatprep.subr.bf16.mxu0 0
        %2773 = vmatpush1.bf16.xpose.msra.mxu0 0
        %2774 = vmatprep.subr.bf16.mxu0 0
        %2775 = vmatpush1.bf16.xpose.msra.mxu0 0
        %2776 = vmatprep.subr.bf16.mxu0 0
        %2777 = vmatpush1.bf16.xpose.msra.mxu0 0
        %2778 = vmatprep.subr.bf16.mxu0 0
        %2779 = vmatpush1.bf16.xpose.msra.mxu0 0
        %2780 = vmatprep.subr.bf16.mxu0 0
        %2781 = vmatpush1.bf16.xpose.msra.mxu0 0
        %2782 = vmatprep.subr.bf16.mxu0 0
        %2783 = vmatpush1.bf16.xpose.msra.mxu0 0
        %2784 = vmatprep.subr.bf16.mxu0 0
        %2785 = vmatpush1.bf16.xpose.msra.mxu0 0
        %2786 = vmatprep.mubr.bf16.mxu0 0
        %2787 = vmatmul.mubr.bf16.gmra.mrb[0].mxu0 %v2731
        %v2788 = vpop.f32.mrb[0].mxu0
        %v2789 = vadd.f32 0.0, %v2788
        %v2790 = vpop.f32.mrb[0].mxu0
        %v2791 = vpop.f32.mrb[0].mxu0
        %v2792 = vadd.f32 0.0, %v2791
        %v2793 = vpop.f32.mrb[0].mxu0
        %2794 = vmatprep.mubr.bf16.mxu0 0
        %2795 = vmatmul.mubr.bf16.gmra.mrb[0].mxu0 %v2734
        %v2796 = vpop.f32.mrb[0].mxu0
        %v2797 = vadd.f32 0.0, %v2796
        %v2798 = vpop.f32.mrb[0].mxu0
        %v2799 = vpop.f32.mrb[0].mxu0
        %v2800 = vadd.f32 0.0, %v2799
        %v2801 = vpop.f32.mrb[0].mxu0
        %2802 = vmatprep.mubr.bf16.mxu0 0
        %2803 = vmatmul.mubr.bf16.gmra.mrb[0].mxu0 %v2737
        %v2804 = vpop.f32.mrb[0].mxu0
        %v2805 = vadd.f32 0.0, %v2804
        %v2806 = vpop.f32.mrb[0].mxu0
        %v2807 = vpop.f32.mrb[0].mxu0
        %v2808 = vadd.f32 0.0, %v2807
        %v2809 = vpop.f32.mrb[0].mxu0
        %2810 = vmatprep.mubr.bf16.mxu0 0
        %2811 = vmatmul.mubr.bf16.gmra.mrb[0].mxu0 %v2740
        %v2812 = vpop.f32.mrb[0].mxu0
        %v2813 = vadd.f32 0.0, %v2812
        %v2814 = vpop.f32.mrb[0].mxu0
        %v2815 = vpop.f32.mrb[0].mxu0
        %v2816 = vadd.f32 0.0, %v2815
        %v2817 = vpop.f32.mrb[0].mxu0
        %2818 = vdwg.mxu0
        %2823 = vrot.lane.b32.xlu0 %v1493, 96
        %v2824 = vpop.permute.xlu0 %2823
        %2825 = vrot.lane.b32.xlu0 %v1494, 96
        %v2826 = vpop.permute.xlu0 %2825
        %2827 = vrot.lane.b32.xlu0 %v1495, 96
        %v2828 = vpop.permute.xlu0 %2827
        %2829 = vrot.lane.b32.xlu0 %v1496, 96
        %v2830 = vpop.permute.xlu0 %2829
        %v2832 = vsel %vm1517, %v1493, 0
        %v2835 = vsel %vm1517, %v1494, 0
        %v2838 = vsel %vm1517, %v1495, 0
        %v2841 = vsel %vm1517, %v1496, 0
        %v2844 = vsel %vm1517, %v2824, 0
        %v2847 = vsel %vm1517, %v2826, 0
        %v2850 = vsel %vm1517, %v2828, 0
        %v2853 = vsel %vm1517, %v2830, 0
        %2855 = vmatprep.subr.bf16.mxu0 0
        %2856 = vmatpush1.bf16.xpose.msra.mxu0 %v2844
        %2857 = vmatprep.subr.bf16.mxu0 0
        %2858 = vmatpush1.bf16.xpose.msra.mxu0 %v2847
        %2859 = vmatprep.subr.bf16.mxu0 0
        %2860 = vmatpush1.bf16.xpose.msra.mxu0 %v2850
        %2861 = vmatprep.subr.bf16.mxu0 0
        %2862 = vmatpush1.bf16.xpose.msra.mxu0 %v2853
        %2863 = vmatprep.subr.bf16.mxu0 0
        %2864 = vmatpush1.bf16.xpose.msra.mxu0 0
        %2865 = vmatprep.subr.bf16.mxu0 0
        %2866 = vmatpush1.bf16.xpose.msra.mxu0 0
        %2867 = vmatprep.subr.bf16.mxu0 0
        %2868 = vmatpush1.bf16.xpose.msra.mxu0 0
        %2869 = vmatprep.subr.bf16.mxu0 0
        %2870 = vmatpush1.bf16.xpose.msra.mxu0 0
        %2871 = vmatprep.subr.bf16.mxu0 0
        %2872 = vmatpush1.bf16.xpose.msra.mxu0 0
        %2873 = vmatprep.subr.bf16.mxu0 0
        %2874 = vmatpush1.bf16.xpose.msra.mxu0 0
        %2875 = vmatprep.subr.bf16.mxu0 0
        %2876 = vmatpush1.bf16.xpose.msra.mxu0 0
        %2877 = vmatprep.subr.bf16.mxu0 0
        %2878 = vmatpush1.bf16.xpose.msra.mxu0 0
        %2879 = vmatprep.subr.bf16.mxu0 0
        %2880 = vmatpush1.bf16.xpose.msra.mxu0 0
        %2881 = vmatprep.subr.bf16.mxu0 0
        %2882 = vmatpush1.bf16.xpose.msra.mxu0 0
        %2883 = vmatprep.subr.bf16.mxu0 0
        %2884 = vmatpush1.bf16.xpose.msra.mxu0 0
        %2885 = vmatprep.subr.bf16.mxu0 0
        %2886 = vmatpush1.bf16.xpose.msra.mxu0 0
        %2887 = vmatprep.mubr.bf16.mxu0 0
        %2888 = vmatmul.mubr.bf16.gmra.mrb[0].mxu0 %v2832
        %v2889 = vpop.f32.mrb[0].mxu0
        %v2890 = vadd.f32 0.0, %v2889
        %v2891 = vpop.f32.mrb[0].mxu0
        %v2892 = vpop.f32.mrb[0].mxu0
        %v2893 = vadd.f32 0.0, %v2892
        %v2894 = vpop.f32.mrb[0].mxu0
        %2895 = vmatprep.mubr.bf16.mxu0 0
        %2896 = vmatmul.mubr.bf16.gmra.mrb[0].mxu0 %v2835
        %v2897 = vpop.f32.mrb[0].mxu0
        %v2898 = vadd.f32 0.0, %v2897
        %v2899 = vpop.f32.mrb[0].mxu0
        %v2900 = vpop.f32.mrb[0].mxu0
        %v2901 = vadd.f32 0.0, %v2900
        %v2902 = vpop.f32.mrb[0].mxu0
        %2903 = vmatprep.mubr.bf16.mxu0 0
        %2904 = vmatmul.mubr.bf16.gmra.mrb[0].mxu0 %v2838
        %v2905 = vpop.f32.mrb[0].mxu0
        %v2906 = vadd.f32 0.0, %v2905
        %v2907 = vpop.f32.mrb[0].mxu0
        %v2908 = vpop.f32.mrb[0].mxu0
        %v2909 = vadd.f32 0.0, %v2908
        %v2910 = vpop.f32.mrb[0].mxu0
        %2911 = vmatprep.mubr.bf16.mxu0 0
        %2912 = vmatmul.mubr.bf16.gmra.mrb[0].mxu0 %v2841
        %v2913 = vpop.f32.mrb[0].mxu0
        %v2914 = vadd.f32 0.0, %v2913
        %v2915 = vpop.f32.mrb[0].mxu0
        %v2916 = vpop.f32.mrb[0].mxu0
        %v2917 = vadd.f32 0.0, %v2916
        %v2918 = vpop.f32.mrb[0].mxu0
        %2919 = vdwg.mxu0
        %2924 = vrot.lane.b32.xlu0 %v1497, 96
        %v2925 = vpop.permute.xlu0 %2924
        %2926 = vrot.lane.b32.xlu0 %v1498, 96
        %v2927 = vpop.permute.xlu0 %2926
        %2928 = vrot.lane.b32.xlu0 %v1499, 96
        %v2929 = vpop.permute.xlu0 %2928
        %2930 = vrot.lane.b32.xlu0 %v1500, 96
        %v2931 = vpop.permute.xlu0 %2930
        %v2933 = vsel %vm1517, %v1497, 0
        %v2936 = vsel %vm1517, %v1498, 0
        %v2939 = vsel %vm1517, %v1499, 0
        %v2942 = vsel %vm1517, %v1500, 0
        %v2945 = vsel %vm1517, %v2925, 0
        %v2948 = vsel %vm1517, %v2927, 0
        %v2951 = vsel %vm1517, %v2929, 0
        %v2954 = vsel %vm1517, %v2931, 0
        %2956 = vmatprep.subr.bf16.mxu0 0
        %2957 = vmatpush1.bf16.xpose.msra.mxu0 %v2945
        %2958 = vmatprep.subr.bf16.mxu0 0
        %2959 = vmatpush1.bf16.xpose.msra.mxu0 %v2948
        %2960 = vmatprep.subr.bf16.mxu0 0
        %2961 = vmatpush1.bf16.xpose.msra.mxu0 %v2951
        %2962 = vmatprep.subr.bf16.mxu0 0
        %2963 = vmatpush1.bf16.xpose.msra.mxu0 %v2954
        %2964 = vmatprep.subr.bf16.mxu0 0
        %2965 = vmatpush1.bf16.xpose.msra.mxu0 0
        %2966 = vmatprep.subr.bf16.mxu0 0
        %2967 = vmatpush1.bf16.xpose.msra.mxu0 0
        %2968 = vmatprep.subr.bf16.mxu0 0
        %2969 = vmatpush1.bf16.xpose.msra.mxu0 0
        %2970 = vmatprep.subr.bf16.mxu0 0
        %2971 = vmatpush1.bf16.xpose.msra.mxu0 0
        %2972 = vmatprep.subr.bf16.mxu0 0
        %2973 = vmatpush1.bf16.xpose.msra.mxu0 0
        %2974 = vmatprep.subr.bf16.mxu0 0
        %2975 = vmatpush1.bf16.xpose.msra.mxu0 0
        %2976 = vmatprep.subr.bf16.mxu0 0
        %2977 = vmatpush1.bf16.xpose.msra.mxu0 0
        %2978 = vmatprep.subr.bf16.mxu0 0
        %2979 = vmatpush1.bf16.xpose.msra.mxu0 0
        %2980 = vmatprep.subr.bf16.mxu0 0
        %2981 = vmatpush1.bf16.xpose.msra.mxu0 0
        %2982 = vmatprep.subr.bf16.mxu0 0
        %2983 = vmatpush1.bf16.xpose.msra.mxu0 0
        %2984 = vmatprep.subr.bf16.mxu0 0
        %2985 = vmatpush1.bf16.xpose.msra.mxu0 0
        %2986 = vmatprep.subr.bf16.mxu0 0
        %2987 = vmatpush1.bf16.xpose.msra.mxu0 0
        %2988 = vmatprep.mubr.bf16.mxu0 0
        %2989 = vmatmul.mubr.bf16.gmra.mrb[0].mxu0 %v2933
        %v2990 = vpop.f32.mrb[0].mxu0
        %v2991 = vadd.f32 0.0, %v2990
        %v2992 = vpop.f32.mrb[0].mxu0
        %v2993 = vpop.f32.mrb[0].mxu0
        %v2994 = vadd.f32 0.0, %v2993
        %v2995 = vpop.f32.mrb[0].mxu0
        %2996 = vmatprep.mubr.bf16.mxu0 0
        %2997 = vmatmul.mubr.bf16.gmra.mrb[0].mxu0 %v2936
        %v2998 = vpop.f32.mrb[0].mxu0
        %v2999 = vadd.f32 0.0, %v2998
        %v3000 = vpop.f32.mrb[0].mxu0
        %v3001 = vpop.f32.mrb[0].mxu0
        %v3002 = vadd.f32 0.0, %v3001
        %v3003 = vpop.f32.mrb[0].mxu0
        %3004 = vmatprep.mubr.bf16.mxu0 0
        %3005 = vmatmul.mubr.bf16.gmra.mrb[0].mxu0 %v2939
        %v3006 = vpop.f32.mrb[0].mxu0
        %v3007 = vadd.f32 0.0, %v3006
        %v3008 = vpop.f32.mrb[0].mxu0
        %v3009 = vpop.f32.mrb[0].mxu0
        %v3010 = vadd.f32 0.0, %v3009
        %v3011 = vpop.f32.mrb[0].mxu0
        %3012 = vmatprep.mubr.bf16.mxu0 0
        %3013 = vmatmul.mubr.bf16.gmra.mrb[0].mxu0 %v2942
        %v3014 = vpop.f32.mrb[0].mxu0
        %v3015 = vadd.f32 0.0, %v3014
        %v3016 = vpop.f32.mrb[0].mxu0
        %v3017 = vpop.f32.mrb[0].mxu0
        %v3018 = vadd.f32 0.0, %v3017
        %v3019 = vpop.f32.mrb[0].mxu0
        %3020 = vdwg.mxu0
        %3025 = vrot.lane.b32.xlu0 %v1501, 96
        %v3026 = vpop.permute.xlu0 %3025
        %3027 = vrot.lane.b32.xlu0 %v1502, 96
        %v3028 = vpop.permute.xlu0 %3027
        %3029 = vrot.lane.b32.xlu0 %v1503, 96
        %v3030 = vpop.permute.xlu0 %3029
        %3031 = vrot.lane.b32.xlu0 %v1504, 96
        %v3032 = vpop.permute.xlu0 %3031
        %v3034 = vsel %vm1517, %v1501, 0
        %v3037 = vsel %vm1517, %v1502, 0
        %v3040 = vsel %vm1517, %v1503, 0
        %v3043 = vsel %vm1517, %v1504, 0
        %v3046 = vsel %vm1517, %v3026, 0
        %v3049 = vsel %vm1517, %v3028, 0
        %v3052 = vsel %vm1517, %v3030, 0
        %v3055 = vsel %vm1517, %v3032, 0
        %3057 = vmatprep.subr.bf16.mxu0 0
        %3058 = vmatpush1.bf16.xpose.msra.mxu0 %v3046
        %3059 = vmatprep.subr.bf16.mxu0 0
        %3060 = vmatpush1.bf16.xpose.msra.mxu0 %v3049
        %3061 = vmatprep.subr.bf16.mxu0 0
        %3062 = vmatpush1.bf16.xpose.msra.mxu0 %v3052
        %3063 = vmatprep.subr.bf16.mxu0 0
        %3064 = vmatpush1.bf16.xpose.msra.mxu0 %v3055
        %3065 = vmatprep.subr.bf16.mxu0 0
        %3066 = vmatpush1.bf16.xpose.msra.mxu0 0
        %3067 = vmatprep.subr.bf16.mxu0 0
        %3068 = vmatpush1.bf16.xpose.msra.mxu0 0
        %3069 = vmatprep.subr.bf16.mxu0 0
        %3070 = vmatpush1.bf16.xpose.msra.mxu0 0
        %3071 = vmatprep.subr.bf16.mxu0 0
        %3072 = vmatpush1.bf16.xpose.msra.mxu0 0
        %3073 = vmatprep.subr.bf16.mxu0 0
        %3074 = vmatpush1.bf16.xpose.msra.mxu0 0
        %3075 = vmatprep.subr.bf16.mxu0 0
        %3076 = vmatpush1.bf16.xpose.msra.mxu0 0
        %3077 = vmatprep.subr.bf16.mxu0 0
        %3078 = vmatpush1.bf16.xpose.msra.mxu0 0
        %3079 = vmatprep.subr.bf16.mxu0 0
        %3080 = vmatpush1.bf16.xpose.msra.mxu0 0
        %3081 = vmatprep.subr.bf16.mxu0 0
        %3082 = vmatpush1.bf16.xpose.msra.mxu0 0
        %3083 = vmatprep.subr.bf16.mxu0 0
        %3084 = vmatpush1.bf16.xpose.msra.mxu0 0
        %3085 = vmatprep.subr.bf16.mxu0 0
        %3086 = vmatpush1.bf16.xpose.msra.mxu0 0
        %3087 = vmatprep.subr.bf16.mxu0 0
        %3088 = vmatpush1.bf16.xpose.msra.mxu0 0
        %3089 = vmatprep.mubr.bf16.mxu0 0
        %3090 = vmatmul.mubr.bf16.gmra.mrb[0].mxu0 %v3034
        %v3091 = vpop.f32.mrb[0].mxu0
        %v3092 = vadd.f32 0.0, %v3091
        %v3093 = vpop.f32.mrb[0].mxu0
        %v3094 = vpop.f32.mrb[0].mxu0
        %v3095 = vadd.f32 0.0, %v3094
        %v3096 = vpop.f32.mrb[0].mxu0
        %3097 = vmatprep.mubr.bf16.mxu0 0
        %3098 = vmatmul.mubr.bf16.gmra.mrb[0].mxu0 %v3037
        %v3099 = vpop.f32.mrb[0].mxu0
        %v3100 = vadd.f32 0.0, %v3099
        %v3101 = vpop.f32.mrb[0].mxu0
        %v3102 = vpop.f32.mrb[0].mxu0
        %v3103 = vadd.f32 0.0, %v3102
        %v3104 = vpop.f32.mrb[0].mxu0
        %3105 = vmatprep.mubr.bf16.mxu0 0
        %3106 = vmatmul.mubr.bf16.gmra.mrb[0].mxu0 %v3040
        %v3107 = vpop.f32.mrb[0].mxu0
        %v3108 = vadd.f32 0.0, %v3107
        %v3109 = vpop.f32.mrb[0].mxu0
        %v3110 = vpop.f32.mrb[0].mxu0
        %v3111 = vadd.f32 0.0, %v3110
        %v3112 = vpop.f32.mrb[0].mxu0
        %3113 = vmatprep.mubr.bf16.mxu0 0
        %3114 = vmatmul.mubr.bf16.gmra.mrb[0].mxu0 %v3043
        %v3115 = vpop.f32.mrb[0].mxu0
        %v3116 = vadd.f32 0.0, %v3115
        %v3117 = vpop.f32.mrb[0].mxu0
        %v3118 = vpop.f32.mrb[0].mxu0
        %v3119 = vadd.f32 0.0, %v3118
        %v3120 = vpop.f32.mrb[0].mxu0
        %3121 = vdwg.mxu0
        %vm3122 = vcmask 523264
        %v3123 = vsel %vm3122, %v1577, -inf
        %3124 = vmax.xlane.f32.xlu0 %v3123
        %v3125 = vpop.xlane.xlu0 %3124
        %v3126 = vsel %vm3122, %v1580, -inf
        %3127 = vmax.xlane.f32.xlu0 %v3126
        %v3128 = vpop.xlane.xlu0 %3127
        %v3129 = vsel %vm3122, %v1585, -inf
        %3130 = vmax.xlane.f32.xlu0 %v3129
        %v3131 = vpop.xlane.xlu0 %3130
        %v3132 = vsel %vm3122, %v1588, -inf
        %3133 = vmax.xlane.f32.xlu0 %v3132
        %v3134 = vpop.xlane.xlu0 %3133
        %v3135 = vsel %vm3122, %v1593, -inf
        %3136 = vmax.xlane.f32.xlu0 %v3135
        %v3137 = vpop.xlane.xlu0 %3136
        %v3138 = vsel %vm3122, %v1596, -inf
        %3139 = vmax.xlane.f32.xlu0 %v3138
        %v3140 = vpop.xlane.xlu0 %3139
        %v3141 = vsel %vm3122, %v1601, -inf
        %3142 = vmax.xlane.f32.xlu0 %v3141
        %v3143 = vpop.xlane.xlu0 %3142
        %v3144 = vsel %vm3122, %v1604, -inf
        %3145 = vmax.xlane.f32.xlu0 %v3144
        %v3146 = vpop.xlane.xlu0 %3145
        %v3147 = vsel %vm3122, %v1678, -inf
        %3148 = vmax.xlane.f32.xlu0 %v3147
        %v3149 = vpop.xlane.xlu0 %3148
        %v3150 = vsel %vm3122, %v1681, -inf
        %3151 = vmax.xlane.f32.xlu0 %v3150
        %v3152 = vpop.xlane.xlu0 %3151
        %v3153 = vsel %vm3122, %v1686, -inf
        %3154 = vmax.xlane.f32.xlu0 %v3153
        %v3155 = vpop.xlane.xlu0 %3154
        %v3156 = vsel %vm3122, %v1689, -inf
        %3157 = vmax.xlane.f32.xlu0 %v3156
        %v3158 = vpop.xlane.xlu0 %3157
        %v3159 = vsel %vm3122, %v1694, -inf
        %3160 = vmax.xlane.f32.xlu0 %v3159
        %v3161 = vpop.xlane.xlu0 %3160
        %v3162 = vsel %vm3122, %v1697, -inf
        %3163 = vmax.xlane.f32.xlu0 %v3162
        %v3164 = vpop.xlane.xlu0 %3163
        %v3165 = vsel %vm3122, %v1702, -inf
        %3166 = vmax.xlane.f32.xlu0 %v3165
        %v3167 = vpop.xlane.xlu0 %3166
        %v3168 = vsel %vm3122, %v1705, -inf
        %3169 = vmax.xlane.f32.xlu0 %v3168
        %v3170 = vpop.xlane.xlu0 %3169
        %v3171 = vsel %vm3122, %v1779, -inf
        %3172 = vmax.xlane.f32.xlu0 %v3171
        %v3173 = vpop.xlane.xlu0 %3172
        %v3174 = vsel %vm3122, %v1782, -inf
        %3175 = vmax.xlane.f32.xlu0 %v3174
        %v3176 = vpop.xlane.xlu0 %3175
        %v3177 = vsel %vm3122, %v1787, -inf
        %3178 = vmax.xlane.f32.xlu0 %v3177
        %v3179 = vpop.xlane.xlu0 %3178
        %v3180 = vsel %vm3122, %v1790, -inf
        %3181 = vmax.xlane.f32.xlu0 %v3180
        %v3182 = vpop.xlane.xlu0 %3181
        %v3183 = vsel %vm3122, %v1795, -inf
        %3184 = vmax.xlane.f32.xlu0 %v3183
        %v3185 = vpop.xlane.xlu0 %3184
        %v3186 = vsel %vm3122, %v1798, -inf
        %3187 = vmax.xlane.f32.xlu0 %v3186
        %v3188 = vpop.xlane.xlu0 %3187
        %v3189 = vsel %vm3122, %v1803, -inf
        %3190 = vmax.xlane.f32.xlu0 %v3189
        %v3191 = vpop.xlane.xlu0 %3190
        %v3192 = vsel %vm3122, %v1806, -inf
        %3193 = vmax.xlane.f32.xlu0 %v3192
        %v3194 = vpop.xlane.xlu0 %3193
        %v3195 = vsel %vm3122, %v1880, -inf
        %3196 = vmax.xlane.f32.xlu0 %v3195
        %v3197 = vpop.xlane.xlu0 %3196
        %v3198 = vsel %vm3122, %v1883, -inf
        %3199 = vmax.xlane.f32.xlu0 %v3198
        %v3200 = vpop.xlane.xlu0 %3199
        %v3201 = vsel %vm3122, %v1888, -inf
        %3202 = vmax.xlane.f32.xlu0 %v3201
        %v3203 = vpop.xlane.xlu0 %3202
        %v3204 = vsel %vm3122, %v1891, -inf
        %3205 = vmax.xlane.f32.xlu0 %v3204
        %v3206 = vpop.xlane.xlu0 %3205
        %v3207 = vsel %vm3122, %v1896, -inf
        %3208 = vmax.xlane.f32.xlu0 %v3207
        %v3209 = vpop.xlane.xlu0 %3208
        %v3210 = vsel %vm3122, %v1899, -inf
        %3211 = vmax.xlane.f32.xlu0 %v3210
        %v3212 = vpop.xlane.xlu0 %3211
        %v3213 = vsel %vm3122, %v1904, -inf
        %3214 = vmax.xlane.f32.xlu0 %v3213
        %v3215 = vpop.xlane.xlu0 %3214
        %v3216 = vsel %vm3122, %v1907, -inf
        %3217 = vmax.xlane.f32.xlu0 %v3216
        %v3218 = vpop.xlane.xlu0 %3217
        %v3219 = vsel %vm3122, %v1981, -inf
        %3220 = vmax.xlane.f32.xlu0 %v3219
        %v3221 = vpop.xlane.xlu0 %3220
        %v3222 = vsel %vm3122, %v1984, -inf
        %3223 = vmax.xlane.f32.xlu0 %v3222
        %v3224 = vpop.xlane.xlu0 %3223
        %v3225 = vsel %vm3122, %v1989, -inf
        %3226 = vmax.xlane.f32.xlu0 %v3225
        %v3227 = vpop.xlane.xlu0 %3226
        %v3228 = vsel %vm3122, %v1992, -inf
        %3229 = vmax.xlane.f32.xlu0 %v3228
        %v3230 = vpop.xlane.xlu0 %3229
        %v3231 = vsel %vm3122, %v1997, -inf
        %3232 = vmax.xlane.f32.xlu0 %v3231
        %v3233 = vpop.xlane.xlu0 %3232
        %v3234 = vsel %vm3122, %v2000, -inf
        %3235 = vmax.xlane.f32.xlu0 %v3234
        %v3236 = vpop.xlane.xlu0 %3235
        %v3237 = vsel %vm3122, %v2005, -inf
        %3238 = vmax.xlane.f32.xlu0 %v3237
        %v3239 = vpop.xlane.xlu0 %3238
        %v3240 = vsel %vm3122, %v2008, -inf
        %3241 = vmax.xlane.f32.xlu0 %v3240
        %v3242 = vpop.xlane.xlu0 %3241
        %v3243 = vsel %vm3122, %v2082, -inf
        %3244 = vmax.xlane.f32.xlu0 %v3243
        %v3245 = vpop.xlane.xlu0 %3244
        %v3246 = vsel %vm3122, %v2085, -inf
        %3247 = vmax.xlane.f32.xlu0 %v3246
        %v3248 = vpop.xlane.xlu0 %3247
        %v3249 = vsel %vm3122, %v2090, -inf
        %3250 = vmax.xlane.f32.xlu0 %v3249
        %v3251 = vpop.xlane.xlu0 %3250
        %v3252 = vsel %vm3122, %v2093, -inf
        %3253 = vmax.xlane.f32.xlu0 %v3252
        %v3254 = vpop.xlane.xlu0 %3253
        %v3255 = vsel %vm3122, %v2098, -inf
        %3256 = vmax.xlane.f32.xlu0 %v3255
        %v3257 = vpop.xlane.xlu0 %3256
        %v3258 = vsel %vm3122, %v2101, -inf
        %3259 = vmax.xlane.f32.xlu0 %v3258
        %v3260 = vpop.xlane.xlu0 %3259
        %v3261 = vsel %vm3122, %v2106, -inf
        %3262 = vmax.xlane.f32.xlu0 %v3261
        %v3263 = vpop.xlane.xlu0 %3262
        %v3264 = vsel %vm3122, %v2109, -inf
        %3265 = vmax.xlane.f32.xlu0 %v3264
        %v3266 = vpop.xlane.xlu0 %3265
        %v3267 = vsel %vm3122, %v2183, -inf
        %3268 = vmax.xlane.f32.xlu0 %v3267
        %v3269 = vpop.xlane.xlu0 %3268
        %v3270 = vsel %vm3122, %v2186, -inf
        %3271 = vmax.xlane.f32.xlu0 %v3270
        %v3272 = vpop.xlane.xlu0 %3271
        %v3273 = vsel %vm3122, %v2191, -inf
        %3274 = vmax.xlane.f32.xlu0 %v3273
        %v3275 = vpop.xlane.xlu0 %3274
        %v3276 = vsel %vm3122, %v2194, -inf
        %3277 = vmax.xlane.f32.xlu0 %v3276
        %v3278 = vpop.xlane.xlu0 %3277
        %v3279 = vsel %vm3122, %v2199, -inf
        %3280 = vmax.xlane.f32.xlu0 %v3279
        %v3281 = vpop.xlane.xlu0 %3280
        %v3282 = vsel %vm3122, %v2202, -inf
        %3283 = vmax.xlane.f32.xlu0 %v3282
        %v3284 = vpop.xlane.xlu0 %3283
        %v3285 = vsel %vm3122, %v2207, -inf
        %3286 = vmax.xlane.f32.xlu0 %v3285
        %v3287 = vpop.xlane.xlu0 %3286
        %v3288 = vsel %vm3122, %v2210, -inf
        %3289 = vmax.xlane.f32.xlu0 %v3288
        %v3290 = vpop.xlane.xlu0 %3289
        %v3291 = vsel %vm3122, %v2284, -inf
        %3292 = vmax.xlane.f32.xlu0 %v3291
        %v3293 = vpop.xlane.xlu0 %3292
        %v3294 = vsel %vm3122, %v2287, -inf
        %3295 = vmax.xlane.f32.xlu0 %v3294
        %v3296 = vpop.xlane.xlu0 %3295
        %v3297 = vsel %vm3122, %v2292, -inf
        %3298 = vmax.xlane.f32.xlu0 %v3297
        %v3299 = vpop.xlane.xlu0 %3298
        %v3300 = vsel %vm3122, %v2295, -inf
        %3301 = vmax.xlane.f32.xlu0 %v3300
        %v3302 = vpop.xlane.xlu0 %3301
        %v3303 = vsel %vm3122, %v2300, -inf
        %3304 = vmax.xlane.f32.xlu0 %v3303
        %v3305 = vpop.xlane.xlu0 %3304
        %v3306 = vsel %vm3122, %v2303, -inf
        %3307 = vmax.xlane.f32.xlu0 %v3306
        %v3308 = vpop.xlane.xlu0 %3307
        %v3309 = vsel %vm3122, %v2308, -inf
        %3310 = vmax.xlane.f32.xlu0 %v3309
        %v3311 = vpop.xlane.xlu0 %3310
        %v3312 = vsel %vm3122, %v2311, -inf
        %3313 = vmax.xlane.f32.xlu0 %v3312
        %v3314 = vpop.xlane.xlu0 %3313
        %v3315 = vsel %vm3122, %v2385, -inf
        %3316 = vmax.xlane.f32.xlu0 %v3315
        %v3317 = vpop.xlane.xlu0 %3316
        %v3318 = vsel %vm3122, %v2388, -inf
        %3319 = vmax.xlane.f32.xlu0 %v3318
        %v3320 = vpop.xlane.xlu0 %3319
        %v3321 = vsel %vm3122, %v2393, -inf
        %3322 = vmax.xlane.f32.xlu0 %v3321
        %v3323 = vpop.xlane.xlu0 %3322
        %v3324 = vsel %vm3122, %v2396, -inf
        %3325 = vmax.xlane.f32.xlu0 %v3324
        %v3326 = vpop.xlane.xlu0 %3325
        %v3327 = vsel %vm3122, %v2401, -inf
        %3328 = vmax.xlane.f32.xlu0 %v3327
        %v3329 = vpop.xlane.xlu0 %3328
        %v3330 = vsel %vm3122, %v2404, -inf
        %3331 = vmax.xlane.f32.xlu0 %v3330
        %v3332 = vpop.xlane.xlu0 %3331
        %v3333 = vsel %vm3122, %v2409, -inf
        %3334 = vmax.xlane.f32.xlu0 %v3333
        %v3335 = vpop.xlane.xlu0 %3334
        %v3336 = vsel %vm3122, %v2412, -inf
        %3337 = vmax.xlane.f32.xlu0 %v3336
        %v3338 = vpop.xlane.xlu0 %3337
        %v3339 = vsel %vm3122, %v2486, -inf
        %3340 = vmax.xlane.f32.xlu0 %v3339
        %v3341 = vpop.xlane.xlu0 %3340
        %v3342 = vsel %vm3122, %v2489, -inf
        %3343 = vmax.xlane.f32.xlu0 %v3342
        %v3344 = vpop.xlane.xlu0 %3343
        %v3345 = vsel %vm3122, %v2494, -inf
        %3346 = vmax.xlane.f32.xlu0 %v3345
        %v3347 = vpop.xlane.xlu0 %3346
        %v3348 = vsel %vm3122, %v2497, -inf
        %3349 = vmax.xlane.f32.xlu0 %v3348
        %v3350 = vpop.xlane.xlu0 %3349
        %v3351 = vsel %vm3122, %v2502, -inf
        %3352 = vmax.xlane.f32.xlu0 %v3351
        %v3353 = vpop.xlane.xlu0 %3352
        %v3354 = vsel %vm3122, %v2505, -inf
        %3355 = vmax.xlane.f32.xlu0 %v3354
        %v3356 = vpop.xlane.xlu0 %3355
        %v3357 = vsel %vm3122, %v2510, -inf
        %3358 = vmax.xlane.f32.xlu0 %v3357
        %v3359 = vpop.xlane.xlu0 %3358
        %v3360 = vsel %vm3122, %v2513, -inf
        %3361 = vmax.xlane.f32.xlu0 %v3360
        %v3362 = vpop.xlane.xlu0 %3361
        %v3363 = vsel %vm3122, %v2587, -inf
        %3364 = vmax.xlane.f32.xlu0 %v3363
        %v3365 = vpop.xlane.xlu0 %3364
        %v3366 = vsel %vm3122, %v2590, -inf
        %3367 = vmax.xlane.f32.xlu0 %v3366
        %v3368 = vpop.xlane.xlu0 %3367
        %v3369 = vsel %vm3122, %v2595, -inf
        %3370 = vmax.xlane.f32.xlu0 %v3369
        %v3371 = vpop.xlane.xlu0 %3370
        %v3372 = vsel %vm3122, %v2598, -inf
        %3373 = vmax.xlane.f32.xlu0 %v3372
        %v3374 = vpop.xlane.xlu0 %3373
        %v3375 = vsel %vm3122, %v2603, -inf
        %3376 = vmax.xlane.f32.xlu0 %v3375
        %v3377 = vpop.xlane.xlu0 %3376
        %v3378 = vsel %vm3122, %v2606, -inf
        %3379 = vmax.xlane.f32.xlu0 %v3378
        %v3380 = vpop.xlane.xlu0 %3379
        %v3381 = vsel %vm3122, %v2611, -inf
        %3382 = vmax.xlane.f32.xlu0 %v3381
        %v3383 = vpop.xlane.xlu0 %3382
        %v3384 = vsel %vm3122, %v2614, -inf
        %3385 = vmax.xlane.f32.xlu0 %v3384
        %v3386 = vpop.xlane.xlu0 %3385
        %v3387 = vsel %vm3122, %v2688, -inf
        %3388 = vmax.xlane.f32.xlu0 %v3387
        %v3389 = vpop.xlane.xlu0 %3388
        %v3390 = vsel %vm3122, %v2691, -inf
        %3391 = vmax.xlane.f32.xlu0 %v3390
        %v3392 = vpop.xlane.xlu0 %3391
        %v3393 = vsel %vm3122, %v2696, -inf
        %3394 = vmax.xlane.f32.xlu0 %v3393
        %v3395 = vpop.xlane.xlu0 %3394
        %v3396 = vsel %vm3122, %v2699, -inf
        %3397 = vmax.xlane.f32.xlu0 %v3396
        %v3398 = vpop.xlane.xlu0 %3397
        %v3399 = vsel %vm3122, %v2704, -inf
        %3400 = vmax.xlane.f32.xlu0 %v3399
        %v3401 = vpop.xlane.xlu0 %3400
        %v3402 = vsel %vm3122, %v2707, -inf
        %3403 = vmax.xlane.f32.xlu0 %v3402
        %v3404 = vpop.xlane.xlu0 %3403
        %v3405 = vsel %vm3122, %v2712, -inf
        %3406 = vmax.xlane.f32.xlu0 %v3405
        %v3407 = vpop.xlane.xlu0 %3406
        %v3408 = vsel %vm3122, %v2715, -inf
        %3409 = vmax.xlane.f32.xlu0 %v3408
        %v3410 = vpop.xlane.xlu0 %3409
        %v3411 = vsel %vm3122, %v2789, -inf
        %3412 = vmax.xlane.f32.xlu0 %v3411
        %v3413 = vpop.xlane.xlu0 %3412
        %v3414 = vsel %vm3122, %v2792, -inf
        %3415 = vmax.xlane.f32.xlu0 %v3414
        %v3416 = vpop.xlane.xlu0 %3415
        %v3417 = vsel %vm3122, %v2797, -inf
        %3418 = vmax.xlane.f32.xlu0 %v3417
        %v3419 = vpop.xlane.xlu0 %3418
        %v3420 = vsel %vm3122, %v2800, -inf
        %3421 = vmax.xlane.f32.xlu0 %v3420
        %v3422 = vpop.xlane.xlu0 %3421
        %v3423 = vsel %vm3122, %v2805, -inf
        %3424 = vmax.xlane.f32.xlu0 %v3423
        %v3425 = vpop.xlane.xlu0 %3424
        %v3426 = vsel %vm3122, %v2808, -inf
        %3427 = vmax.xlane.f32.xlu0 %v3426
        %v3428 = vpop.xlane.xlu0 %3427
        %v3429 = vsel %vm3122, %v2813, -inf
        %3430 = vmax.xlane.f32.xlu0 %v3429
        %v3431 = vpop.xlane.xlu0 %3430
        %v3432 = vsel %vm3122, %v2816, -inf
        %3433 = vmax.xlane.f32.xlu0 %v3432
        %v3434 = vpop.xlane.xlu0 %3433
        %v3435 = vsel %vm3122, %v2890, -inf
        %3436 = vmax.xlane.f32.xlu0 %v3435
        %v3437 = vpop.xlane.xlu0 %3436
        %v3438 = vsel %vm3122, %v2893, -inf
        %3439 = vmax.xlane.f32.xlu0 %v3438
        %v3440 = vpop.xlane.xlu0 %3439
        %v3441 = vsel %vm3122, %v2898, -inf
        %3442 = vmax.xlane.f32.xlu0 %v3441
        %v3443 = vpop.xlane.xlu0 %3442
        %v3444 = vsel %vm3122, %v2901, -inf
        %3445 = vmax.xlane.f32.xlu0 %v3444
        %v3446 = vpop.xlane.xlu0 %3445
        %v3447 = vsel %vm3122, %v2906, -inf
        %3448 = vmax.xlane.f32.xlu0 %v3447
        %v3449 = vpop.xlane.xlu0 %3448
        %v3450 = vsel %vm3122, %v2909, -inf
        %3451 = vmax.xlane.f32.xlu0 %v3450
        %v3452 = vpop.xlane.xlu0 %3451
        %v3453 = vsel %vm3122, %v2914, -inf
        %3454 = vmax.xlane.f32.xlu0 %v3453
        %v3455 = vpop.xlane.xlu0 %3454
        %v3456 = vsel %vm3122, %v2917, -inf
        %3457 = vmax.xlane.f32.xlu0 %v3456
        %v3458 = vpop.xlane.xlu0 %3457
        %v3459 = vsel %vm3122, %v2991, -inf
        %3460 = vmax.xlane.f32.xlu0 %v3459
        %v3461 = vpop.xlane.xlu0 %3460
        %v3462 = vsel %vm3122, %v2994, -inf
        %3463 = vmax.xlane.f32.xlu0 %v3462
        %v3464 = vpop.xlane.xlu0 %3463
        %v3465 = vsel %vm3122, %v2999, -inf
        %3466 = vmax.xlane.f32.xlu0 %v3465
        %v3467 = vpop.xlane.xlu0 %3466
        %v3468 = vsel %vm3122, %v3002, -inf
        %3469 = vmax.xlane.f32.xlu0 %v3468
        %v3470 = vpop.xlane.xlu0 %3469
        %v3471 = vsel %vm3122, %v3007, -inf
        %3472 = vmax.xlane.f32.xlu0 %v3471
        %v3473 = vpop.xlane.xlu0 %3472
        %v3474 = vsel %vm3122, %v3010, -inf
        %3475 = vmax.xlane.f32.xlu0 %v3474
        %v3476 = vpop.xlane.xlu0 %3475
        %v3477 = vsel %vm3122, %v3015, -inf
        %3478 = vmax.xlane.f32.xlu0 %v3477
        %v3479 = vpop.xlane.xlu0 %3478
        %v3480 = vsel %vm3122, %v3018, -inf
        %3481 = vmax.xlane.f32.xlu0 %v3480
        %v3482 = vpop.xlane.xlu0 %3481
        %v3483 = vsel %vm3122, %v3092, -inf
        %3484 = vmax.xlane.f32.xlu0 %v3483
        %v3485 = vpop.xlane.xlu0 %3484
        %v3486 = vsel %vm3122, %v3095, -inf
        %3487 = vmax.xlane.f32.xlu0 %v3486
        %v3488 = vpop.xlane.xlu0 %3487
        %v3489 = vsel %vm3122, %v3100, -inf
        %3490 = vmax.xlane.f32.xlu0 %v3489
        %v3491 = vpop.xlane.xlu0 %3490
        %v3492 = vsel %vm3122, %v3103, -inf
        %3493 = vmax.xlane.f32.xlu0 %v3492
        %v3494 = vpop.xlane.xlu0 %3493
        %v3495 = vsel %vm3122, %v3108, -inf
        %3496 = vmax.xlane.f32.xlu0 %v3495
        %v3497 = vpop.xlane.xlu0 %3496
        %v3498 = vsel %vm3122, %v3111, -inf
        %3499 = vmax.xlane.f32.xlu0 %v3498
        %v3500 = vpop.xlane.xlu0 %3499
        %v3501 = vsel %vm3122, %v3116, -inf
        %3502 = vmax.xlane.f32.xlu0 %v3501
        %v3503 = vpop.xlane.xlu0 %3502
        %v3504 = vsel %vm3122, %v3119, -inf
        %3505 = vmax.xlane.f32.xlu0 %v3504
        %v3506 = vpop.xlane.xlu0 %3505
        %v3507 = vsub.f32 %v1577, %v3125
        %v3508 = vsub.f32 %v1580, %v3128
        %v3509 = vsub.f32 %v1585, %v3131
        %v3510 = vsub.f32 %v1588, %v3134
        %v3511 = vsub.f32 %v1593, %v3137
        %v3512 = vsub.f32 %v1596, %v3140
        %v3513 = vsub.f32 %v1601, %v3143
        %v3514 = vsub.f32 %v1604, %v3146
        %v3515 = vsub.f32 %v1678, %v3149
        %v3516 = vsub.f32 %v1681, %v3152
        %v3517 = vsub.f32 %v1686, %v3155
        %v3518 = vsub.f32 %v1689, %v3158
        %v3519 = vsub.f32 %v1694, %v3161
        %v3520 = vsub.f32 %v1697, %v3164
        %v3521 = vsub.f32 %v1702, %v3167
        %v3522 = vsub.f32 %v1705, %v3170
        %v3523 = vsub.f32 %v1779, %v3173
        %v3524 = vsub.f32 %v1782, %v3176
        %v3525 = vsub.f32 %v1787, %v3179
        %v3526 = vsub.f32 %v1790, %v3182
        %v3527 = vsub.f32 %v1795, %v3185
        %v3528 = vsub.f32 %v1798, %v3188
        %v3529 = vsub.f32 %v1803, %v3191
        %v3530 = vsub.f32 %v1806, %v3194
        %v3531 = vsub.f32 %v1880, %v3197
        %v3532 = vsub.f32 %v1883, %v3200
        %v3533 = vsub.f32 %v1888, %v3203
        %v3534 = vsub.f32 %v1891, %v3206
        %v3535 = vsub.f32 %v1896, %v3209
        %v3536 = vsub.f32 %v1899, %v3212
        %v3537 = vsub.f32 %v1904, %v3215
        %v3538 = vsub.f32 %v1907, %v3218
        %v3539 = vsub.f32 %v1981, %v3221
        %v3540 = vsub.f32 %v1984, %v3224
        %v3541 = vsub.f32 %v1989, %v3227
        %v3542 = vsub.f32 %v1992, %v3230
        %v3543 = vsub.f32 %v1997, %v3233
        %v3544 = vsub.f32 %v2000, %v3236
        %v3545 = vsub.f32 %v2005, %v3239
        %v3546 = vsub.f32 %v2008, %v3242
        %v3547 = vsub.f32 %v2082, %v3245
        %v3548 = vsub.f32 %v2085, %v3248
        %v3549 = vsub.f32 %v2090, %v3251
        %v3550 = vsub.f32 %v2093, %v3254
        %v3551 = vsub.f32 %v2098, %v3257
        %v3552 = vsub.f32 %v2101, %v3260
        %v3553 = vsub.f32 %v2106, %v3263
        %v3554 = vsub.f32 %v2109, %v3266
        %v3555 = vsub.f32 %v2183, %v3269
        %v3556 = vsub.f32 %v2186, %v3272
        %v3557 = vsub.f32 %v2191, %v3275
        %v3558 = vsub.f32 %v2194, %v3278
        %v3559 = vsub.f32 %v2199, %v3281
        %v3560 = vsub.f32 %v2202, %v3284
        %v3561 = vsub.f32 %v2207, %v3287
        %v3562 = vsub.f32 %v2210, %v3290
        %v3563 = vsub.f32 %v2284, %v3293
        %v3564 = vsub.f32 %v2287, %v3296
        %v3565 = vsub.f32 %v2292, %v3299
        %v3566 = vsub.f32 %v2295, %v3302
        %v3567 = vsub.f32 %v2300, %v3305
        %v3568 = vsub.f32 %v2303, %v3308
        %v3569 = vsub.f32 %v2308, %v3311
        %v3570 = vsub.f32 %v2311, %v3314
        %v3571 = vsub.f32 %v2385, %v3317
        %v3572 = vsub.f32 %v2388, %v3320
        %v3573 = vsub.f32 %v2393, %v3323
        %v3574 = vsub.f32 %v2396, %v3326
        %v3575 = vsub.f32 %v2401, %v3329
        %v3576 = vsub.f32 %v2404, %v3332
        %v3577 = vsub.f32 %v2409, %v3335
        %v3578 = vsub.f32 %v2412, %v3338
        %v3579 = vsub.f32 %v2486, %v3341
        %v3580 = vsub.f32 %v2489, %v3344
        %v3581 = vsub.f32 %v2494, %v3347
        %v3582 = vsub.f32 %v2497, %v3350
        %v3583 = vsub.f32 %v2502, %v3353
        %v3584 = vsub.f32 %v2505, %v3356
        %v3585 = vsub.f32 %v2510, %v3359
        %v3586 = vsub.f32 %v2513, %v3362
        %v3587 = vsub.f32 %v2587, %v3365
        %v3588 = vsub.f32 %v2590, %v3368
        %v3589 = vsub.f32 %v2595, %v3371
        %v3590 = vsub.f32 %v2598, %v3374
        %v3591 = vsub.f32 %v2603, %v3377
        %v3592 = vsub.f32 %v2606, %v3380
        %v3593 = vsub.f32 %v2611, %v3383
        %v3594 = vsub.f32 %v2614, %v3386
        %v3595 = vsub.f32 %v2688, %v3389
        %v3596 = vsub.f32 %v2691, %v3392
        %v3597 = vsub.f32 %v2696, %v3395
        %v3598 = vsub.f32 %v2699, %v3398
        %v3599 = vsub.f32 %v2704, %v3401
        %v3600 = vsub.f32 %v2707, %v3404
        %v3601 = vsub.f32 %v2712, %v3407
        %v3602 = vsub.f32 %v2715, %v3410
        %v3603 = vsub.f32 %v2789, %v3413
        %v3604 = vsub.f32 %v2792, %v3416
        %v3605 = vsub.f32 %v2797, %v3419
        %v3606 = vsub.f32 %v2800, %v3422
        %v3607 = vsub.f32 %v2805, %v3425
        %v3608 = vsub.f32 %v2808, %v3428
        %v3609 = vsub.f32 %v2813, %v3431
        %v3610 = vsub.f32 %v2816, %v3434
        %v3611 = vsub.f32 %v2890, %v3437
        %v3612 = vsub.f32 %v2893, %v3440
        %v3613 = vsub.f32 %v2898, %v3443
        %v3614 = vsub.f32 %v2901, %v3446
        %v3615 = vsub.f32 %v2906, %v3449
        %v3616 = vsub.f32 %v2909, %v3452
        %v3617 = vsub.f32 %v2914, %v3455
        %v3618 = vsub.f32 %v2917, %v3458
        %v3619 = vsub.f32 %v2991, %v3461
        %v3620 = vsub.f32 %v2994, %v3464
        %v3621 = vsub.f32 %v2999, %v3467
        %v3622 = vsub.f32 %v3002, %v3470
        %v3623 = vsub.f32 %v3007, %v3473
        %v3624 = vsub.f32 %v3010, %v3476
        %v3625 = vsub.f32 %v3015, %v3479
        %v3626 = vsub.f32 %v3018, %v3482
        %v3627 = vsub.f32 %v3092, %v3485
        %v3628 = vsub.f32 %v3095, %v3488
        %v3629 = vsub.f32 %v3100, %v3491
        %v3630 = vsub.f32 %v3103, %v3494
        %v3631 = vsub.f32 %v3108, %v3497
        %v3632 = vsub.f32 %v3111, %v3500
        %v3633 = vsub.f32 %v3116, %v3503
        %v3634 = vsub.f32 %v3119, %v3506
        %v3635 = vmul.f32 %v3507, 1.442695
        %v3636 = vpow.pop %v3635
        %v3637 = vmul.f32 %v3508, 1.442695
        %v3638 = vpow.pop %v3637
        %v3639 = vmul.f32 %v3509, 1.442695
        %v3640 = vpow.pop %v3639
        %v3641 = vmul.f32 %v3510, 1.442695
        %v3642 = vpow.pop %v3641
        %v3643 = vmul.f32 %v3511, 1.442695
        %v3644 = vpow.pop %v3643
        %v3645 = vmul.f32 %v3512, 1.442695
        %v3646 = vpow.pop %v3645
        %v3647 = vmul.f32 %v3513, 1.442695
        %v3648 = vpow.pop %v3647
        %v3649 = vmul.f32 %v3514, 1.442695
        %v3650 = vpow.pop %v3649
        %v3651 = vmul.f32 %v3515, 1.442695
        %v3652 = vpow.pop %v3651
        %v3653 = vmul.f32 %v3516, 1.442695
        %v3654 = vpow.pop %v3653
        %v3655 = vmul.f32 %v3517, 1.442695
        %v3656 = vpow.pop %v3655
        %v3657 = vmul.f32 %v3518, 1.442695
        %v3658 = vpow.pop %v3657
        %v3659 = vmul.f32 %v3519, 1.442695
        %v3660 = vpow.pop %v3659
        %v3661 = vmul.f32 %v3520, 1.442695
        %v3662 = vpow.pop %v3661
        %v3663 = vmul.f32 %v3521, 1.442695
        %v3664 = vpow.pop %v3663
        %v3665 = vmul.f32 %v3522, 1.442695
        %v3666 = vpow.pop %v3665
        %v3667 = vmul.f32 %v3523, 1.442695
        %v3668 = vpow.pop %v3667
        %v3669 = vmul.f32 %v3524, 1.442695
        %v3670 = vpow.pop %v3669
        %v3671 = vmul.f32 %v3525, 1.442695
        %v3672 = vpow.pop %v3671
        %v3673 = vmul.f32 %v3526, 1.442695
        %v3674 = vpow.pop %v3673
        %v3675 = vmul.f32 %v3527, 1.442695
        %v3676 = vpow.pop %v3675
        %v3677 = vmul.f32 %v3528, 1.442695
        %v3678 = vpow.pop %v3677
        %v3679 = vmul.f32 %v3529, 1.442695
        %v3680 = vpow.pop %v3679
        %v3681 = vmul.f32 %v3530, 1.442695
        %v3682 = vpow.pop %v3681
        %v3683 = vmul.f32 %v3531, 1.442695
        %v3684 = vpow.pop %v3683
        %v3685 = vmul.f32 %v3532, 1.442695
        %v3686 = vpow.pop %v3685
        %v3687 = vmul.f32 %v3533, 1.442695
        %v3688 = vpow.pop %v3687
        %v3689 = vmul.f32 %v3534, 1.442695
        %v3690 = vpow.pop %v3689
        %v3691 = vmul.f32 %v3535, 1.442695
        %v3692 = vpow.pop %v3691
        %v3693 = vmul.f32 %v3536, 1.442695
        %v3694 = vpow.pop %v3693
        %v3695 = vmul.f32 %v3537, 1.442695
        %v3696 = vpow.pop %v3695
        %v3697 = vmul.f32 %v3538, 1.442695
        %v3698 = vpow.pop %v3697
        %v3699 = vmul.f32 %v3539, 1.442695
        %v3700 = vpow.pop %v3699
        %v3701 = vmul.f32 %v3540, 1.442695
        %v3702 = vpow.pop %v3701
        %v3703 = vmul.f32 %v3541, 1.442695
        %v3704 = vpow.pop %v3703
        %v3705 = vmul.f32 %v3542, 1.442695
        %v3706 = vpow.pop %v3705
        %v3707 = vmul.f32 %v3543, 1.442695
        %v3708 = vpow.pop %v3707
        %v3709 = vmul.f32 %v3544, 1.442695
        %v3710 = vpow.pop %v3709
        %v3711 = vmul.f32 %v3545, 1.442695
        %v3712 = vpow.pop %v3711
        %v3713 = vmul.f32 %v3546, 1.442695
        %v3714 = vpow.pop %v3713
        %v3715 = vmul.f32 %v3547, 1.442695
        %v3716 = vpow.pop %v3715
        %v3717 = vmul.f32 %v3548, 1.442695
        %v3718 = vpow.pop %v3717
        %v3719 = vmul.f32 %v3549, 1.442695
        %v3720 = vpow.pop %v3719
        %v3721 = vmul.f32 %v3550, 1.442695
        %v3722 = vpow.pop %v3721
        %v3723 = vmul.f32 %v3551, 1.442695
        %v3724 = vpow.pop %v3723
        %v3725 = vmul.f32 %v3552, 1.442695
        %v3726 = vpow.pop %v3725
        %v3727 = vmul.f32 %v3553, 1.442695
        %v3728 = vpow.pop %v3727
        %v3729 = vmul.f32 %v3554, 1.442695
        %v3730 = vpow.pop %v3729
        %v3731 = vmul.f32 %v3555, 1.442695
        %v3732 = vpow.pop %v3731
        %v3733 = vmul.f32 %v3556, 1.442695
        %v3734 = vpow.pop %v3733
        %v3735 = vmul.f32 %v3557, 1.442695
        %v3736 = vpow.pop %v3735
        %v3737 = vmul.f32 %v3558, 1.442695
        %v3738 = vpow.pop %v3737
        %v3739 = vmul.f32 %v3559, 1.442695
        %v3740 = vpow.pop %v3739
        %v3741 = vmul.f32 %v3560, 1.442695
        %v3742 = vpow.pop %v3741
        %v3743 = vmul.f32 %v3561, 1.442695
        %v3744 = vpow.pop %v3743
        %v3745 = vmul.f32 %v3562, 1.442695
        %v3746 = vpow.pop %v3745
        %v3747 = vmul.f32 %v3563, 1.442695
        %v3748 = vpow.pop %v3747
        %v3749 = vmul.f32 %v3564, 1.442695
        %v3750 = vpow.pop %v3749
        %v3751 = vmul.f32 %v3565, 1.442695
        %v3752 = vpow.pop %v3751
        %v3753 = vmul.f32 %v3566, 1.442695
        %v3754 = vpow.pop %v3753
        %v3755 = vmul.f32 %v3567, 1.442695
        %v3756 = vpow.pop %v3755
        %v3757 = vmul.f32 %v3568, 1.442695
        %v3758 = vpow.pop %v3757
        %v3759 = vmul.f32 %v3569, 1.442695
        %v3760 = vpow.pop %v3759
        %v3761 = vmul.f32 %v3570, 1.442695
        %v3762 = vpow.pop %v3761
        %v3763 = vmul.f32 %v3571, 1.442695
        %v3764 = vpow.pop %v3763
        %v3765 = vmul.f32 %v3572, 1.442695
        %v3766 = vpow.pop %v3765
        %v3767 = vmul.f32 %v3573, 1.442695
        %v3768 = vpow.pop %v3767
        %v3769 = vmul.f32 %v3574, 1.442695
        %v3770 = vpow.pop %v3769
        %v3771 = vmul.f32 %v3575, 1.442695
        %v3772 = vpow.pop %v3771
        %v3773 = vmul.f32 %v3576, 1.442695
        %v3774 = vpow.pop %v3773
        %v3775 = vmul.f32 %v3577, 1.442695
        %v3776 = vpow.pop %v3775
        %v3777 = vmul.f32 %v3578, 1.442695
        %v3778 = vpow.pop %v3777
        %v3779 = vmul.f32 %v3579, 1.442695
        %v3780 = vpow.pop %v3779
        %v3781 = vmul.f32 %v3580, 1.442695
        %v3782 = vpow.pop %v3781
        %v3783 = vmul.f32 %v3581, 1.442695
        %v3784 = vpow.pop %v3783
        %v3785 = vmul.f32 %v3582, 1.442695
        %v3786 = vpow.pop %v3785
        %v3787 = vmul.f32 %v3583, 1.442695
        %v3788 = vpow.pop %v3787
        %v3789 = vmul.f32 %v3584, 1.442695
        %v3790 = vpow.pop %v3789
        %v3791 = vmul.f32 %v3585, 1.442695
        %v3792 = vpow.pop %v3791
        %v3793 = vmul.f32 %v3586, 1.442695
        %v3794 = vpow.pop %v3793
        %v3795 = vmul.f32 %v3587, 1.442695
        %v3796 = vpow.pop %v3795
        %v3797 = vmul.f32 %v3588, 1.442695
        %v3798 = vpow.pop %v3797
        %v3799 = vmul.f32 %v3589, 1.442695
        %v3800 = vpow.pop %v3799
        %v3801 = vmul.f32 %v3590, 1.442695
        %v3802 = vpow.pop %v3801
        %v3803 = vmul.f32 %v3591, 1.442695
        %v3804 = vpow.pop %v3803
        %v3805 = vmul.f32 %v3592, 1.442695
        %v3806 = vpow.pop %v3805
        %v3807 = vmul.f32 %v3593, 1.442695
        %v3808 = vpow.pop %v3807
        %v3809 = vmul.f32 %v3594, 1.442695
        %v3810 = vpow.pop %v3809
        %v3811 = vmul.f32 %v3595, 1.442695
        %v3812 = vpow.pop %v3811
        %v3813 = vmul.f32 %v3596, 1.442695
        %v3814 = vpow.pop %v3813
        %v3815 = vmul.f32 %v3597, 1.442695
        %v3816 = vpow.pop %v3815
        %v3817 = vmul.f32 %v3598, 1.442695
        %v3818 = vpow.pop %v3817
        %v3819 = vmul.f32 %v3599, 1.442695
        %v3820 = vpow.pop %v3819
        %v3821 = vmul.f32 %v3600, 1.442695
        %v3822 = vpow.pop %v3821
        %v3823 = vmul.f32 %v3601, 1.442695
        %v3824 = vpow.pop %v3823
        %v3825 = vmul.f32 %v3602, 1.442695
        %v3826 = vpow.pop %v3825
        %v3827 = vmul.f32 %v3603, 1.442695
        %v3828 = vpow.pop %v3827
        %v3829 = vmul.f32 %v3604, 1.442695
        %v3830 = vpow.pop %v3829
        %v3831 = vmul.f32 %v3605, 1.442695
        %v3832 = vpow.pop %v3831
        %v3833 = vmul.f32 %v3606, 1.442695
        %v3834 = vpow.pop %v3833
        %v3835 = vmul.f32 %v3607, 1.442695
        %v3836 = vpow.pop %v3835
        %v3837 = vmul.f32 %v3608, 1.442695
        %v3838 = vpow.pop %v3837
        %v3839 = vmul.f32 %v3609, 1.442695
        %v3840 = vpow.pop %v3839
        %v3841 = vmul.f32 %v3610, 1.442695
        %v3842 = vpow.pop %v3841
        %v3843 = vmul.f32 %v3611, 1.442695
        %v3844 = vpow.pop %v3843
        %v3845 = vmul.f32 %v3612, 1.442695
        %v3846 = vpow.pop %v3845
        %v3847 = vmul.f32 %v3613, 1.442695
        %v3848 = vpow.pop %v3847
        %v3849 = vmul.f32 %v3614, 1.442695
        %v3850 = vpow.pop %v3849
        %v3851 = vmul.f32 %v3615, 1.442695
        %v3852 = vpow.pop %v3851
        %v3853 = vmul.f32 %v3616, 1.442695
        %v3854 = vpow.pop %v3853
        %v3855 = vmul.f32 %v3617, 1.442695
        %v3856 = vpow.pop %v3855
        %v3857 = vmul.f32 %v3618, 1.442695
        %v3858 = vpow.pop %v3857
        %v3859 = vmul.f32 %v3619, 1.442695
        %v3860 = vpow.pop %v3859
        %v3861 = vmul.f32 %v3620, 1.442695
        %v3862 = vpow.pop %v3861
        %v3863 = vmul.f32 %v3621, 1.442695
        %v3864 = vpow.pop %v3863
        %v3865 = vmul.f32 %v3622, 1.442695
        %v3866 = vpow.pop %v3865
        %v3867 = vmul.f32 %v3623, 1.442695
        %v3868 = vpow.pop %v3867
        %v3869 = vmul.f32 %v3624, 1.442695
        %v3870 = vpow.pop %v3869
        %v3871 = vmul.f32 %v3625, 1.442695
        %v3872 = vpow.pop %v3871
        %v3873 = vmul.f32 %v3626, 1.442695
        %v3874 = vpow.pop %v3873
        %v3875 = vmul.f32 %v3627, 1.442695
        %v3876 = vpow.pop %v3875
        %v3877 = vmul.f32 %v3628, 1.442695
        %v3878 = vpow.pop %v3877
        %v3879 = vmul.f32 %v3629, 1.442695
        %v3880 = vpow.pop %v3879
        %v3881 = vmul.f32 %v3630, 1.442695
        %v3882 = vpow.pop %v3881
        %v3883 = vmul.f32 %v3631, 1.442695
        %v3884 = vpow.pop %v3883
        %v3885 = vmul.f32 %v3632, 1.442695
        %v3886 = vpow.pop %v3885
        %v3887 = vmul.f32 %v3633, 1.442695
        %v3888 = vpow.pop %v3887
        %v3889 = vmul.f32 %v3634, 1.442695
        %v3890 = vpow.pop %v3889
        %v3891 = vsel %vm3122, %v3636, 0.0
        %3892 = vadd.xlane.f32.xlu0 %v3891
        %v3893 = vpop.xlane.xlu0 %3892
        %v3894 = vsel %vm3122, %v3638, 0.0
        %3895 = vadd.xlane.f32.xlu0 %v3894
        %v3896 = vpop.xlane.xlu0 %3895
        %v3897 = vsel %vm3122, %v3640, 0.0
        %3898 = vadd.xlane.f32.xlu0 %v3897
        %v3899 = vpop.xlane.xlu0 %3898
        %v3900 = vsel %vm3122, %v3642, 0.0
        %3901 = vadd.xlane.f32.xlu0 %v3900
        %v3902 = vpop.xlane.xlu0 %3901
        %v3903 = vsel %vm3122, %v3644, 0.0
        %3904 = vadd.xlane.f32.xlu0 %v3903
        %v3905 = vpop.xlane.xlu0 %3904
        %v3906 = vsel %vm3122, %v3646, 0.0
        %3907 = vadd.xlane.f32.xlu0 %v3906
        %v3908 = vpop.xlane.xlu0 %3907
        %v3909 = vsel %vm3122, %v3648, 0.0
        %3910 = vadd.xlane.f32.xlu0 %v3909
        %v3911 = vpop.xlane.xlu0 %3910
        %v3912 = vsel %vm3122, %v3650, 0.0
        %3913 = vadd.xlane.f32.xlu0 %v3912
        %v3914 = vpop.xlane.xlu0 %3913
        %v3915 = vsel %vm3122, %v3652, 0.0
        %3916 = vadd.xlane.f32.xlu0 %v3915
        %v3917 = vpop.xlane.xlu0 %3916
        %v3918 = vsel %vm3122, %v3654, 0.0
        %3919 = vadd.xlane.f32.xlu0 %v3918
        %v3920 = vpop.xlane.xlu0 %3919
        %v3921 = vsel %vm3122, %v3656, 0.0
        %3922 = vadd.xlane.f32.xlu0 %v3921
        %v3923 = vpop.xlane.xlu0 %3922
        %v3924 = vsel %vm3122, %v3658, 0.0
        %3925 = vadd.xlane.f32.xlu0 %v3924
        %v3926 = vpop.xlane.xlu0 %3925
        %v3927 = vsel %vm3122, %v3660, 0.0
        %3928 = vadd.xlane.f32.xlu0 %v3927
        %v3929 = vpop.xlane.xlu0 %3928
        %v3930 = vsel %vm3122, %v3662, 0.0
        %3931 = vadd.xlane.f32.xlu0 %v3930
        %v3932 = vpop.xlane.xlu0 %3931
        %v3933 = vsel %vm3122, %v3664, 0.0
        %3934 = vadd.xlane.f32.xlu0 %v3933
        %v3935 = vpop.xlane.xlu0 %3934
        %v3936 = vsel %vm3122, %v3666, 0.0
        %3937 = vadd.xlane.f32.xlu0 %v3936
        %v3938 = vpop.xlane.xlu0 %3937
        %v3939 = vsel %vm3122, %v3668, 0.0
        %3940 = vadd.xlane.f32.xlu0 %v3939
        %v3941 = vpop.xlane.xlu0 %3940
        %v3942 = vsel %vm3122, %v3670, 0.0
        %3943 = vadd.xlane.f32.xlu0 %v3942
        %v3944 = vpop.xlane.xlu0 %3943
        %v3945 = vsel %vm3122, %v3672, 0.0
        %3946 = vadd.xlane.f32.xlu0 %v3945
        %v3947 = vpop.xlane.xlu0 %3946
        %v3948 = vsel %vm3122, %v3674, 0.0
        %3949 = vadd.xlane.f32.xlu0 %v3948
        %v3950 = vpop.xlane.xlu0 %3949
        %v3951 = vsel %vm3122, %v3676, 0.0
        %3952 = vadd.xlane.f32.xlu0 %v3951
        %v3953 = vpop.xlane.xlu0 %3952
        %v3954 = vsel %vm3122, %v3678, 0.0
        %3955 = vadd.xlane.f32.xlu0 %v3954
        %v3956 = vpop.xlane.xlu0 %3955
        %v3957 = vsel %vm3122, %v3680, 0.0
        %3958 = vadd.xlane.f32.xlu0 %v3957
        %v3959 = vpop.xlane.xlu0 %3958
        %v3960 = vsel %vm3122, %v3682, 0.0
        %3961 = vadd.xlane.f32.xlu0 %v3960
        %v3962 = vpop.xlane.xlu0 %3961
        %v3963 = vsel %vm3122, %v3684, 0.0
        %3964 = vadd.xlane.f32.xlu0 %v3963
        %v3965 = vpop.xlane.xlu0 %3964
        %v3966 = vsel %vm3122, %v3686, 0.0
        %3967 = vadd.xlane.f32.xlu0 %v3966
        %v3968 = vpop.xlane.xlu0 %3967
        %v3969 = vsel %vm3122, %v3688, 0.0
        %3970 = vadd.xlane.f32.xlu0 %v3969
        %v3971 = vpop.xlane.xlu0 %3970
        %v3972 = vsel %vm3122, %v3690, 0.0
        %3973 = vadd.xlane.f32.xlu0 %v3972
        %v3974 = vpop.xlane.xlu0 %3973
        %v3975 = vsel %vm3122, %v3692, 0.0
        %3976 = vadd.xlane.f32.xlu0 %v3975
        %v3977 = vpop.xlane.xlu0 %3976
        %v3978 = vsel %vm3122, %v3694, 0.0
        %3979 = vadd.xlane.f32.xlu0 %v3978
        %v3980 = vpop.xlane.xlu0 %3979
        %v3981 = vsel %vm3122, %v3696, 0.0
        %3982 = vadd.xlane.f32.xlu0 %v3981
        %v3983 = vpop.xlane.xlu0 %3982
        %v3984 = vsel %vm3122, %v3698, 0.0
        %3985 = vadd.xlane.f32.xlu0 %v3984
        %v3986 = vpop.xlane.xlu0 %3985
        %v3987 = vsel %vm3122, %v3700, 0.0
        %3988 = vadd.xlane.f32.xlu0 %v3987
        %v3989 = vpop.xlane.xlu0 %3988
        %v3990 = vsel %vm3122, %v3702, 0.0
        %3991 = vadd.xlane.f32.xlu0 %v3990
        %v3992 = vpop.xlane.xlu0 %3991
        %v3993 = vsel %vm3122, %v3704, 0.0
        %3994 = vadd.xlane.f32.xlu0 %v3993
        %v3995 = vpop.xlane.xlu0 %3994
        %v3996 = vsel %vm3122, %v3706, 0.0
        %3997 = vadd.xlane.f32.xlu0 %v3996
        %v3998 = vpop.xlane.xlu0 %3997
        %v3999 = vsel %vm3122, %v3708, 0.0
        %4000 = vadd.xlane.f32.xlu0 %v3999
        %v4001 = vpop.xlane.xlu0 %4000
        %v4002 = vsel %vm3122, %v3710, 0.0
        %4003 = vadd.xlane.f32.xlu0 %v4002
        %v4004 = vpop.xlane.xlu0 %4003
        %v4005 = vsel %vm3122, %v3712, 0.0
        %4006 = vadd.xlane.f32.xlu0 %v4005
        %v4007 = vpop.xlane.xlu0 %4006
        %v4008 = vsel %vm3122, %v3714, 0.0
        %4009 = vadd.xlane.f32.xlu0 %v4008
        %v4010 = vpop.xlane.xlu0 %4009
        %v4011 = vsel %vm3122, %v3716, 0.0
        %4012 = vadd.xlane.f32.xlu0 %v4011
        %v4013 = vpop.xlane.xlu0 %4012
        %v4014 = vsel %vm3122, %v3718, 0.0
        %4015 = vadd.xlane.f32.xlu0 %v4014
        %v4016 = vpop.xlane.xlu0 %4015
        %v4017 = vsel %vm3122, %v3720, 0.0
        %4018 = vadd.xlane.f32.xlu0 %v4017
        %v4019 = vpop.xlane.xlu0 %4018
        %v4020 = vsel %vm3122, %v3722, 0.0
        %4021 = vadd.xlane.f32.xlu0 %v4020
        %v4022 = vpop.xlane.xlu0 %4021
        %v4023 = vsel %vm3122, %v3724, 0.0
        %4024 = vadd.xlane.f32.xlu0 %v4023
        %v4025 = vpop.xlane.xlu0 %4024
        %v4026 = vsel %vm3122, %v3726, 0.0
        %4027 = vadd.xlane.f32.xlu0 %v4026
        %v4028 = vpop.xlane.xlu0 %4027
        %v4029 = vsel %vm3122, %v3728, 0.0
        %4030 = vadd.xlane.f32.xlu0 %v4029
        %v4031 = vpop.xlane.xlu0 %4030
        %v4032 = vsel %vm3122, %v3730, 0.0
        %4033 = vadd.xlane.f32.xlu0 %v4032
        %v4034 = vpop.xlane.xlu0 %4033
        %v4035 = vsel %vm3122, %v3732, 0.0
        %4036 = vadd.xlane.f32.xlu0 %v4035
        %v4037 = vpop.xlane.xlu0 %4036
        %v4038 = vsel %vm3122, %v3734, 0.0
        %4039 = vadd.xlane.f32.xlu0 %v4038
        %v4040 = vpop.xlane.xlu0 %4039
        %v4041 = vsel %vm3122, %v3736, 0.0
        %4042 = vadd.xlane.f32.xlu0 %v4041
        %v4043 = vpop.xlane.xlu0 %4042
        %v4044 = vsel %vm3122, %v3738, 0.0
        %4045 = vadd.xlane.f32.xlu0 %v4044
        %v4046 = vpop.xlane.xlu0 %4045
        %v4047 = vsel %vm3122, %v3740, 0.0
        %4048 = vadd.xlane.f32.xlu0 %v4047
        %v4049 = vpop.xlane.xlu0 %4048
        %v4050 = vsel %vm3122, %v3742, 0.0
        %4051 = vadd.xlane.f32.xlu0 %v4050
        %v4052 = vpop.xlane.xlu0 %4051
        %v4053 = vsel %vm3122, %v3744, 0.0
        %4054 = vadd.xlane.f32.xlu0 %v4053
        %v4055 = vpop.xlane.xlu0 %4054
        %v4056 = vsel %vm3122, %v3746, 0.0
        %4057 = vadd.xlane.f32.xlu0 %v4056
        %v4058 = vpop.xlane.xlu0 %4057
        %v4059 = vsel %vm3122, %v3748, 0.0
        %4060 = vadd.xlane.f32.xlu0 %v4059
        %v4061 = vpop.xlane.xlu0 %4060
        %v4062 = vsel %vm3122, %v3750, 0.0
        %4063 = vadd.xlane.f32.xlu0 %v4062
        %v4064 = vpop.xlane.xlu0 %4063
        %v4065 = vsel %vm3122, %v3752, 0.0
        %4066 = vadd.xlane.f32.xlu0 %v4065
        %v4067 = vpop.xlane.xlu0 %4066
        %v4068 = vsel %vm3122, %v3754, 0.0
        %4069 = vadd.xlane.f32.xlu0 %v4068
        %v4070 = vpop.xlane.xlu0 %4069
        %v4071 = vsel %vm3122, %v3756, 0.0
        %4072 = vadd.xlane.f32.xlu0 %v4071
        %v4073 = vpop.xlane.xlu0 %4072
        %v4074 = vsel %vm3122, %v3758, 0.0
        %4075 = vadd.xlane.f32.xlu0 %v4074
        %v4076 = vpop.xlane.xlu0 %4075
        %v4077 = vsel %vm3122, %v3760, 0.0
        %4078 = vadd.xlane.f32.xlu0 %v4077
        %v4079 = vpop.xlane.xlu0 %4078
        %v4080 = vsel %vm3122, %v3762, 0.0
        %4081 = vadd.xlane.f32.xlu0 %v4080
        %v4082 = vpop.xlane.xlu0 %4081
        %v4083 = vsel %vm3122, %v3764, 0.0
        %4084 = vadd.xlane.f32.xlu0 %v4083
        %v4085 = vpop.xlane.xlu0 %4084
        %v4086 = vsel %vm3122, %v3766, 0.0
        %4087 = vadd.xlane.f32.xlu0 %v4086
        %v4088 = vpop.xlane.xlu0 %4087
        %v4089 = vsel %vm3122, %v3768, 0.0
        %4090 = vadd.xlane.f32.xlu0 %v4089
        %v4091 = vpop.xlane.xlu0 %4090
        %v4092 = vsel %vm3122, %v3770, 0.0
        %4093 = vadd.xlane.f32.xlu0 %v4092
        %v4094 = vpop.xlane.xlu0 %4093
        %v4095 = vsel %vm3122, %v3772, 0.0
        %4096 = vadd.xlane.f32.xlu0 %v4095
        %v4097 = vpop.xlane.xlu0 %4096
        %v4098 = vsel %vm3122, %v3774, 0.0
        %4099 = vadd.xlane.f32.xlu0 %v4098
        %v4100 = vpop.xlane.xlu0 %4099
        %v4101 = vsel %vm3122, %v3776, 0.0
        %4102 = vadd.xlane.f32.xlu0 %v4101
        %v4103 = vpop.xlane.xlu0 %4102
        %v4104 = vsel %vm3122, %v3778, 0.0
        %4105 = vadd.xlane.f32.xlu0 %v4104
        %v4106 = vpop.xlane.xlu0 %4105
        %v4107 = vsel %vm3122, %v3780, 0.0
        %4108 = vadd.xlane.f32.xlu0 %v4107
        %v4109 = vpop.xlane.xlu0 %4108
        %v4110 = vsel %vm3122, %v3782, 0.0
        %4111 = vadd.xlane.f32.xlu0 %v4110
        %v4112 = vpop.xlane.xlu0 %4111
        %v4113 = vsel %vm3122, %v3784, 0.0
        %4114 = vadd.xlane.f32.xlu0 %v4113
        %v4115 = vpop.xlane.xlu0 %4114
        %v4116 = vsel %vm3122, %v3786, 0.0
        %4117 = vadd.xlane.f32.xlu0 %v4116
        %v4118 = vpop.xlane.xlu0 %4117
        %v4119 = vsel %vm3122, %v3788, 0.0
        %4120 = vadd.xlane.f32.xlu0 %v4119
        %v4121 = vpop.xlane.xlu0 %4120
        %v4122 = vsel %vm3122, %v3790, 0.0
        %4123 = vadd.xlane.f32.xlu0 %v4122
        %v4124 = vpop.xlane.xlu0 %4123
        %v4125 = vsel %vm3122, %v3792, 0.0
        %4126 = vadd.xlane.f32.xlu0 %v4125
        %v4127 = vpop.xlane.xlu0 %4126
        %v4128 = vsel %vm3122, %v3794, 0.0
        %4129 = vadd.xlane.f32.xlu0 %v4128
        %v4130 = vpop.xlane.xlu0 %4129
        %v4131 = vsel %vm3122, %v3796, 0.0
        %4132 = vadd.xlane.f32.xlu0 %v4131
        %v4133 = vpop.xlane.xlu0 %4132
        %v4134 = vsel %vm3122, %v3798, 0.0
        %4135 = vadd.xlane.f32.xlu0 %v4134
        %v4136 = vpop.xlane.xlu0 %4135
        %v4137 = vsel %vm3122, %v3800, 0.0
        %4138 = vadd.xlane.f32.xlu0 %v4137
        %v4139 = vpop.xlane.xlu0 %4138
        %v4140 = vsel %vm3122, %v3802, 0.0
        %4141 = vadd.xlane.f32.xlu0 %v4140
        %v4142 = vpop.xlane.xlu0 %4141
        %v4143 = vsel %vm3122, %v3804, 0.0
        %4144 = vadd.xlane.f32.xlu0 %v4143
        %v4145 = vpop.xlane.xlu0 %4144
        %v4146 = vsel %vm3122, %v3806, 0.0
        %4147 = vadd.xlane.f32.xlu0 %v4146
        %v4148 = vpop.xlane.xlu0 %4147
        %v4149 = vsel %vm3122, %v3808, 0.0
        %4150 = vadd.xlane.f32.xlu0 %v4149
        %v4151 = vpop.xlane.xlu0 %4150
        %v4152 = vsel %vm3122, %v3810, 0.0
        %4153 = vadd.xlane.f32.xlu0 %v4152
        %v4154 = vpop.xlane.xlu0 %4153
        %v4155 = vsel %vm3122, %v3812, 0.0
        %4156 = vadd.xlane.f32.xlu0 %v4155
        %v4157 = vpop.xlane.xlu0 %4156
        %v4158 = vsel %vm3122, %v3814, 0.0
        %4159 = vadd.xlane.f32.xlu0 %v4158
        %v4160 = vpop.xlane.xlu0 %4159
        %v4161 = vsel %vm3122, %v3816, 0.0
        %4162 = vadd.xlane.f32.xlu0 %v4161
        %v4163 = vpop.xlane.xlu0 %4162
        %v4164 = vsel %vm3122, %v3818, 0.0
        %4165 = vadd.xlane.f32.xlu0 %v4164
        %v4166 = vpop.xlane.xlu0 %4165
        %v4167 = vsel %vm3122, %v3820, 0.0
        %4168 = vadd.xlane.f32.xlu0 %v4167
        %v4169 = vpop.xlane.xlu0 %4168
        %v4170 = vsel %vm3122, %v3822, 0.0
        %4171 = vadd.xlane.f32.xlu0 %v4170
        %v4172 = vpop.xlane.xlu0 %4171
        %v4173 = vsel %vm3122, %v3824, 0.0
        %4174 = vadd.xlane.f32.xlu0 %v4173
        %v4175 = vpop.xlane.xlu0 %4174
        %v4176 = vsel %vm3122, %v3826, 0.0
        %4177 = vadd.xlane.f32.xlu0 %v4176
        %v4178 = vpop.xlane.xlu0 %4177
        %v4179 = vsel %vm3122, %v3828, 0.0
        %4180 = vadd.xlane.f32.xlu0 %v4179
        %v4181 = vpop.xlane.xlu0 %4180
        %v4182 = vsel %vm3122, %v3830, 0.0
        %4183 = vadd.xlane.f32.xlu0 %v4182
        %v4184 = vpop.xlane.xlu0 %4183
        %v4185 = vsel %vm3122, %v3832, 0.0
        %4186 = vadd.xlane.f32.xlu0 %v4185
        %v4187 = vpop.xlane.xlu0 %4186
        %v4188 = vsel %vm3122, %v3834, 0.0
        %4189 = vadd.xlane.f32.xlu0 %v4188
        %v4190 = vpop.xlane.xlu0 %4189
        %v4191 = vsel %vm3122, %v3836, 0.0
        %4192 = vadd.xlane.f32.xlu0 %v4191
        %v4193 = vpop.xlane.xlu0 %4192
        %v4194 = vsel %vm3122, %v3838, 0.0
        %4195 = vadd.xlane.f32.xlu0 %v4194
        %v4196 = vpop.xlane.xlu0 %4195
        %v4197 = vsel %vm3122, %v3840, 0.0
        %4198 = vadd.xlane.f32.xlu0 %v4197
        %v4199 = vpop.xlane.xlu0 %4198
        %v4200 = vsel %vm3122, %v3842, 0.0
        %4201 = vadd.xlane.f32.xlu0 %v4200
        %v4202 = vpop.xlane.xlu0 %4201
        %v4203 = vsel %vm3122, %v3844, 0.0
        %4204 = vadd.xlane.f32.xlu0 %v4203
        %v4205 = vpop.xlane.xlu0 %4204
        %v4206 = vsel %vm3122, %v3846, 0.0
        %4207 = vadd.xlane.f32.xlu0 %v4206
        %v4208 = vpop.xlane.xlu0 %4207
        %v4209 = vsel %vm3122, %v3848, 0.0
        %4210 = vadd.xlane.f32.xlu0 %v4209
        %v4211 = vpop.xlane.xlu0 %4210
        %v4212 = vsel %vm3122, %v3850, 0.0
        %4213 = vadd.xlane.f32.xlu0 %v4212
        %v4214 = vpop.xlane.xlu0 %4213
        %v4215 = vsel %vm3122, %v3852, 0.0
        %4216 = vadd.xlane.f32.xlu0 %v4215
        %v4217 = vpop.xlane.xlu0 %4216
        %v4218 = vsel %vm3122, %v3854, 0.0
        %4219 = vadd.xlane.f32.xlu0 %v4218
        %v4220 = vpop.xlane.xlu0 %4219
        %v4221 = vsel %vm3122, %v3856, 0.0
        %4222 = vadd.xlane.f32.xlu0 %v4221
        %v4223 = vpop.xlane.xlu0 %4222
        %v4224 = vsel %vm3122, %v3858, 0.0
        %4225 = vadd.xlane.f32.xlu0 %v4224
        %v4226 = vpop.xlane.xlu0 %4225
        %v4227 = vsel %vm3122, %v3860, 0.0
        %4228 = vadd.xlane.f32.xlu0 %v4227
        %v4229 = vpop.xlane.xlu0 %4228
        %v4230 = vsel %vm3122, %v3862, 0.0
        %4231 = vadd.xlane.f32.xlu0 %v4230
        %v4232 = vpop.xlane.xlu0 %4231
        %v4233 = vsel %vm3122, %v3864, 0.0
        %4234 = vadd.xlane.f32.xlu0 %v4233
        %v4235 = vpop.xlane.xlu0 %4234
        %v4236 = vsel %vm3122, %v3866, 0.0
        %4237 = vadd.xlane.f32.xlu0 %v4236
        %v4238 = vpop.xlane.xlu0 %4237
        %v4239 = vsel %vm3122, %v3868, 0.0
        %4240 = vadd.xlane.f32.xlu0 %v4239
        %v4241 = vpop.xlane.xlu0 %4240
        %v4242 = vsel %vm3122, %v3870, 0.0
        %4243 = vadd.xlane.f32.xlu0 %v4242
        %v4244 = vpop.xlane.xlu0 %4243
        %v4245 = vsel %vm3122, %v3872, 0.0
        %4246 = vadd.xlane.f32.xlu0 %v4245
        %v4247 = vpop.xlane.xlu0 %4246
        %v4248 = vsel %vm3122, %v3874, 0.0
        %4249 = vadd.xlane.f32.xlu0 %v4248
        %v4250 = vpop.xlane.xlu0 %4249
        %v4251 = vsel %vm3122, %v3876, 0.0
        %4252 = vadd.xlane.f32.xlu0 %v4251
        %v4253 = vpop.xlane.xlu0 %4252
        %v4254 = vsel %vm3122, %v3878, 0.0
        %4255 = vadd.xlane.f32.xlu0 %v4254
        %v4256 = vpop.xlane.xlu0 %4255
        %v4257 = vsel %vm3122, %v3880, 0.0
        %4258 = vadd.xlane.f32.xlu0 %v4257
        %v4259 = vpop.xlane.xlu0 %4258
        %v4260 = vsel %vm3122, %v3882, 0.0
        %4261 = vadd.xlane.f32.xlu0 %v4260
        %v4262 = vpop.xlane.xlu0 %4261
        %v4263 = vsel %vm3122, %v3884, 0.0
        %4264 = vadd.xlane.f32.xlu0 %v4263
        %v4265 = vpop.xlane.xlu0 %4264
        %v4266 = vsel %vm3122, %v3886, 0.0
        %4267 = vadd.xlane.f32.xlu0 %v4266
        %v4268 = vpop.xlane.xlu0 %4267
        %v4269 = vsel %vm3122, %v3888, 0.0
        %4270 = vadd.xlane.f32.xlu0 %v4269
        %v4271 = vpop.xlane.xlu0 %4270
        %v4272 = vsel %vm3122, %v3890, 0.0
        %4273 = vadd.xlane.f32.xlu0 %v4272
        %v4274 = vpop.xlane.xlu0 %4273
        %v4275 = vrcp.pop %v3893
        %v4276 = vrcp.pop %v3896
        %v4277 = vrcp.pop %v3899
        %v4278 = vrcp.pop %v3902
        %v4279 = vrcp.pop %v3905
        %v4280 = vrcp.pop %v3908
        %v4281 = vrcp.pop %v3911
        %v4282 = vrcp.pop %v3914
        %v4283 = vrcp.pop %v3917
        %v4284 = vrcp.pop %v3920
        %v4285 = vrcp.pop %v3923
        %v4286 = vrcp.pop %v3926
        %v4287 = vrcp.pop %v3929
        %v4288 = vrcp.pop %v3932
        %v4289 = vrcp.pop %v3935
        %v4290 = vrcp.pop %v3938
        %v4291 = vrcp.pop %v3941
        %v4292 = vrcp.pop %v3944
        %v4293 = vrcp.pop %v3947
        %v4294 = vrcp.pop %v3950
        %v4295 = vrcp.pop %v3953
        %v4296 = vrcp.pop %v3956
        %v4297 = vrcp.pop %v3959
        %v4298 = vrcp.pop %v3962
        %v4299 = vrcp.pop %v3965
        %v4300 = vrcp.pop %v3968
        %v4301 = vrcp.pop %v3971
        %v4302 = vrcp.pop %v3974
        %v4303 = vrcp.pop %v3977
        %v4304 = vrcp.pop %v3980
        %v4305 = vrcp.pop %v3983
        %v4306 = vrcp.pop %v3986
        %v4307 = vrcp.pop %v3989
        %v4308 = vrcp.pop %v3992
        %v4309 = vrcp.pop %v3995
        %v4310 = vrcp.pop %v3998
        %v4311 = vrcp.pop %v4001
        %v4312 = vrcp.pop %v4004
        %v4313 = vrcp.pop %v4007
        %v4314 = vrcp.pop %v4010
        %v4315 = vrcp.pop %v4013
        %v4316 = vrcp.pop %v4016
        %v4317 = vrcp.pop %v4019
        %v4318 = vrcp.pop %v4022
        %v4319 = vrcp.pop %v4025
        %v4320 = vrcp.pop %v4028
        %v4321 = vrcp.pop %v4031
        %v4322 = vrcp.pop %v4034
        %v4323 = vrcp.pop %v4037
        %v4324 = vrcp.pop %v4040
        %v4325 = vrcp.pop %v4043
        %v4326 = vrcp.pop %v4046
        %v4327 = vrcp.pop %v4049
        %v4328 = vrcp.pop %v4052
        %v4329 = vrcp.pop %v4055
        %v4330 = vrcp.pop %v4058
        %v4331 = vrcp.pop %v4061
        %v4332 = vrcp.pop %v4064
        %v4333 = vrcp.pop %v4067
        %v4334 = vrcp.pop %v4070
        %v4335 = vrcp.pop %v4073
        %v4336 = vrcp.pop %v4076
        %v4337 = vrcp.pop %v4079
        %v4338 = vrcp.pop %v4082
        %v4339 = vrcp.pop %v4085
        %v4340 = vrcp.pop %v4088
        %v4341 = vrcp.pop %v4091
        %v4342 = vrcp.pop %v4094
        %v4343 = vrcp.pop %v4097
        %v4344 = vrcp.pop %v4100
        %v4345 = vrcp.pop %v4103
        %v4346 = vrcp.pop %v4106
        %v4347 = vrcp.pop %v4109
        %v4348 = vrcp.pop %v4112
        %v4349 = vrcp.pop %v4115
        %v4350 = vrcp.pop %v4118
        %v4351 = vrcp.pop %v4121
        %v4352 = vrcp.pop %v4124
        %v4353 = vrcp.pop %v4127
        %v4354 = vrcp.pop %v4130
        %v4355 = vrcp.pop %v4133
        %v4356 = vrcp.pop %v4136
        %v4357 = vrcp.pop %v4139
        %v4358 = vrcp.pop %v4142
        %v4359 = vrcp.pop %v4145
        %v4360 = vrcp.pop %v4148
        %v4361 = vrcp.pop %v4151
        %v4362 = vrcp.pop %v4154
        %v4363 = vrcp.pop %v4157
        %v4364 = vrcp.pop %v4160
        %v4365 = vrcp.pop %v4163
        %v4366 = vrcp.pop %v4166
        %v4367 = vrcp.pop %v4169
        %v4368 = vrcp.pop %v4172
        %v4369 = vrcp.pop %v4175
        %v4370 = vrcp.pop %v4178
        %v4371 = vrcp.pop %v4181
        %v4372 = vrcp.pop %v4184
        %v4373 = vrcp.pop %v4187
        %v4374 = vrcp.pop %v4190
        %v4375 = vrcp.pop %v4193
        %v4376 = vrcp.pop %v4196
        %v4377 = vrcp.pop %v4199
        %v4378 = vrcp.pop %v4202
        %v4379 = vrcp.pop %v4205
        %v4380 = vrcp.pop %v4208
        %v4381 = vrcp.pop %v4211
        %v4382 = vrcp.pop %v4214
        %v4383 = vrcp.pop %v4217
        %v4384 = vrcp.pop %v4220
        %v4385 = vrcp.pop %v4223
        %v4386 = vrcp.pop %v4226
        %v4387 = vrcp.pop %v4229
        %v4388 = vrcp.pop %v4232
        %v4389 = vrcp.pop %v4235
        %v4390 = vrcp.pop %v4238
        %v4391 = vrcp.pop %v4241
        %v4392 = vrcp.pop %v4244
        %v4393 = vrcp.pop %v4247
        %v4394 = vrcp.pop %v4250
        %v4395 = vrcp.pop %v4253
        %v4396 = vrcp.pop %v4256
        %v4397 = vrcp.pop %v4259
        %v4398 = vrcp.pop %v4262
        %v4399 = vrcp.pop %v4265
        %v4400 = vrcp.pop %v4268
        %v4401 = vrcp.pop %v4271
        %v4402 = vrcp.pop %v4274
        %v4403 = vmul.f32 %v3636, %v4275
        %v4404 = vmul.f32 %v3638, %v4276
        %v4405 = vmul.f32 %v3640, %v4277
        %v4406 = vmul.f32 %v3642, %v4278
        %v4407 = vmul.f32 %v3644, %v4279
        %v4408 = vmul.f32 %v3646, %v4280
        %v4409 = vmul.f32 %v3648, %v4281
        %v4410 = vmul.f32 %v3650, %v4282
        %v4411 = vmul.f32 %v3652, %v4283
        %v4412 = vmul.f32 %v3654, %v4284
        %v4413 = vmul.f32 %v3656, %v4285
        %v4414 = vmul.f32 %v3658, %v4286
        %v4415 = vmul.f32 %v3660, %v4287
        %v4416 = vmul.f32 %v3662, %v4288
        %v4417 = vmul.f32 %v3664, %v4289
        %v4418 = vmul.f32 %v3666, %v4290
        %v4419 = vmul.f32 %v3668, %v4291
        %v4420 = vmul.f32 %v3670, %v4292
        %v4421 = vmul.f32 %v3672, %v4293
        %v4422 = vmul.f32 %v3674, %v4294
        %v4423 = vmul.f32 %v3676, %v4295
        %v4424 = vmul.f32 %v3678, %v4296
        %v4425 = vmul.f32 %v3680, %v4297
        %v4426 = vmul.f32 %v3682, %v4298
        %v4427 = vmul.f32 %v3684, %v4299
        %v4428 = vmul.f32 %v3686, %v4300
        %v4429 = vmul.f32 %v3688, %v4301
        %v4430 = vmul.f32 %v3690, %v4302
        %v4431 = vmul.f32 %v3692, %v4303
        %v4432 = vmul.f32 %v3694, %v4304
        %v4433 = vmul.f32 %v3696, %v4305
        %v4434 = vmul.f32 %v3698, %v4306
        %v4435 = vmul.f32 %v3700, %v4307
        %v4436 = vmul.f32 %v3702, %v4308
        %v4437 = vmul.f32 %v3704, %v4309
        %v4438 = vmul.f32 %v3706, %v4310
        %v4439 = vmul.f32 %v3708, %v4311
        %v4440 = vmul.f32 %v3710, %v4312
        %v4441 = vmul.f32 %v3712, %v4313
        %v4442 = vmul.f32 %v3714, %v4314
        %v4443 = vmul.f32 %v3716, %v4315
        %v4444 = vmul.f32 %v3718, %v4316
        %v4445 = vmul.f32 %v3720, %v4317
        %v4446 = vmul.f32 %v3722, %v4318
        %v4447 = vmul.f32 %v3724, %v4319
        %v4448 = vmul.f32 %v3726, %v4320
        %v4449 = vmul.f32 %v3728, %v4321
        %v4450 = vmul.f32 %v3730, %v4322
        %v4451 = vmul.f32 %v3732, %v4323
        %v4452 = vmul.f32 %v3734, %v4324
        %v4453 = vmul.f32 %v3736, %v4325
        %v4454 = vmul.f32 %v3738, %v4326
        %v4455 = vmul.f32 %v3740, %v4327
        %v4456 = vmul.f32 %v3742, %v4328
        %v4457 = vmul.f32 %v3744, %v4329
        %v4458 = vmul.f32 %v3746, %v4330
        %v4459 = vmul.f32 %v3748, %v4331
        %v4460 = vmul.f32 %v3750, %v4332
        %v4461 = vmul.f32 %v3752, %v4333
        %v4462 = vmul.f32 %v3754, %v4334
        %v4463 = vmul.f32 %v3756, %v4335
        %v4464 = vmul.f32 %v3758, %v4336
        %v4465 = vmul.f32 %v3760, %v4337
        %v4466 = vmul.f32 %v3762, %v4338
        %v4467 = vmul.f32 %v3764, %v4339
        %v4468 = vmul.f32 %v3766, %v4340
        %v4469 = vmul.f32 %v3768, %v4341
        %v4470 = vmul.f32 %v3770, %v4342
        %v4471 = vmul.f32 %v3772, %v4343
        %v4472 = vmul.f32 %v3774, %v4344
        %v4473 = vmul.f32 %v3776, %v4345
        %v4474 = vmul.f32 %v3778, %v4346
        %v4475 = vmul.f32 %v3780, %v4347
        %v4476 = vmul.f32 %v3782, %v4348
        %v4477 = vmul.f32 %v3784, %v4349
        %v4478 = vmul.f32 %v3786, %v4350
        %v4479 = vmul.f32 %v3788, %v4351
        %v4480 = vmul.f32 %v3790, %v4352
        %v4481 = vmul.f32 %v3792, %v4353
        %v4482 = vmul.f32 %v3794, %v4354
        %v4483 = vmul.f32 %v3796, %v4355
        %v4484 = vmul.f32 %v3798, %v4356
        %v4485 = vmul.f32 %v3800, %v4357
        %v4486 = vmul.f32 %v3802, %v4358
        %v4487 = vmul.f32 %v3804, %v4359
        %v4488 = vmul.f32 %v3806, %v4360
        %v4489 = vmul.f32 %v3808, %v4361
        %v4490 = vmul.f32 %v3810, %v4362
        %v4491 = vmul.f32 %v3812, %v4363
        %v4492 = vmul.f32 %v3814, %v4364
        %v4493 = vmul.f32 %v3816, %v4365
        %v4494 = vmul.f32 %v3818, %v4366
        %v4495 = vmul.f32 %v3820, %v4367
        %v4496 = vmul.f32 %v3822, %v4368
        %v4497 = vmul.f32 %v3824, %v4369
        %v4498 = vmul.f32 %v3826, %v4370
        %v4499 = vmul.f32 %v3828, %v4371
        %v4500 = vmul.f32 %v3830, %v4372
        %v4501 = vmul.f32 %v3832, %v4373
        %v4502 = vmul.f32 %v3834, %v4374
        %v4503 = vmul.f32 %v3836, %v4375
        %v4504 = vmul.f32 %v3838, %v4376
        %v4505 = vmul.f32 %v3840, %v4377
        %v4506 = vmul.f32 %v3842, %v4378
        %v4507 = vmul.f32 %v3844, %v4379
        %v4508 = vmul.f32 %v3846, %v4380
        %v4509 = vmul.f32 %v3848, %v4381
        %v4510 = vmul.f32 %v3850, %v4382
        %v4511 = vmul.f32 %v3852, %v4383
        %v4512 = vmul.f32 %v3854, %v4384
        %v4513 = vmul.f32 %v3856, %v4385
        %v4514 = vmul.f32 %v3858, %v4386
        %v4515 = vmul.f32 %v3860, %v4387
        %v4516 = vmul.f32 %v3862, %v4388
        %v4517 = vmul.f32 %v3864, %v4389
        %v4518 = vmul.f32 %v3866, %v4390
        %v4519 = vmul.f32 %v3868, %v4391
        %v4520 = vmul.f32 %v3870, %v4392
        %v4521 = vmul.f32 %v3872, %v4393
        %v4522 = vmul.f32 %v3874, %v4394
        %v4523 = vmul.f32 %v3876, %v4395
        %v4524 = vmul.f32 %v3878, %v4396
        %v4525 = vmul.f32 %v3880, %v4397
        %v4526 = vmul.f32 %v3882, %v4398
        %v4527 = vmul.f32 %v3884, %v4399
        %v4528 = vmul.f32 %v3886, %v4400
        %v4529 = vmul.f32 %v3888, %v4401
        %v4530 = vmul.f32 %v3890, %v4402
        %v4531 = vpack.c.bf16 %v4404, %v4403
        %v4532 = vpack.c.bf16 %v4406, %v4405
        %v4533 = vpack.c.bf16 %v4408, %v4407
        %v4534 = vpack.c.bf16 %v4410, %v4409
        %v4535 = vpack.c.bf16 %v4412, %v4411
        %v4536 = vpack.c.bf16 %v4414, %v4413
        %v4537 = vpack.c.bf16 %v4416, %v4415
        %v4538 = vpack.c.bf16 %v4418, %v4417
        %v4539 = vpack.c.bf16 %v4420, %v4419
        %v4540 = vpack.c.bf16 %v4422, %v4421
        %v4541 = vpack.c.bf16 %v4424, %v4423
        %v4542 = vpack.c.bf16 %v4426, %v4425
        %v4543 = vpack.c.bf16 %v4428, %v4427
        %v4544 = vpack.c.bf16 %v4430, %v4429
        %v4545 = vpack.c.bf16 %v4432, %v4431
        %v4546 = vpack.c.bf16 %v4434, %v4433
        %v4547 = vpack.c.bf16 %v4436, %v4435
        %v4548 = vpack.c.bf16 %v4438, %v4437
        %v4549 = vpack.c.bf16 %v4440, %v4439
        %v4550 = vpack.c.bf16 %v4442, %v4441
        %v4551 = vpack.c.bf16 %v4444, %v4443
        %v4552 = vpack.c.bf16 %v4446, %v4445
        %v4553 = vpack.c.bf16 %v4448, %v4447
        %v4554 = vpack.c.bf16 %v4450, %v4449
        %v4555 = vpack.c.bf16 %v4452, %v4451
        %v4556 = vpack.c.bf16 %v4454, %v4453
        %v4557 = vpack.c.bf16 %v4456, %v4455
        %v4558 = vpack.c.bf16 %v4458, %v4457
        %v4559 = vpack.c.bf16 %v4460, %v4459
        %v4560 = vpack.c.bf16 %v4462, %v4461
        %v4561 = vpack.c.bf16 %v4464, %v4463
        %v4562 = vpack.c.bf16 %v4466, %v4465
        %v4563 = vpack.c.bf16 %v4468, %v4467
        %v4564 = vpack.c.bf16 %v4470, %v4469
        %v4565 = vpack.c.bf16 %v4472, %v4471
        %v4566 = vpack.c.bf16 %v4474, %v4473
        %v4567 = vpack.c.bf16 %v4476, %v4475
        %v4568 = vpack.c.bf16 %v4478, %v4477
        %v4569 = vpack.c.bf16 %v4480, %v4479
        %v4570 = vpack.c.bf16 %v4482, %v4481
        %v4571 = vpack.c.bf16 %v4484, %v4483
        %v4572 = vpack.c.bf16 %v4486, %v4485
        %v4573 = vpack.c.bf16 %v4488, %v4487
        %v4574 = vpack.c.bf16 %v4490, %v4489
        %v4575 = vpack.c.bf16 %v4492, %v4491
        %v4576 = vpack.c.bf16 %v4494, %v4493
        %v4577 = vpack.c.bf16 %v4496, %v4495
        %v4578 = vpack.c.bf16 %v4498, %v4497
        %v4579 = vpack.c.bf16 %v4500, %v4499
        %v4580 = vpack.c.bf16 %v4502, %v4501
        %v4581 = vpack.c.bf16 %v4504, %v4503
        %v4582 = vpack.c.bf16 %v4506, %v4505
        %v4583 = vpack.c.bf16 %v4508, %v4507
        %v4584 = vpack.c.bf16 %v4510, %v4509
        %v4585 = vpack.c.bf16 %v4512, %v4511
        %v4586 = vpack.c.bf16 %v4514, %v4513
        %v4587 = vpack.c.bf16 %v4516, %v4515
        %v4588 = vpack.c.bf16 %v4518, %v4517
        %v4589 = vpack.c.bf16 %v4520, %v4519
        %v4590 = vpack.c.bf16 %v4522, %v4521
        %v4591 = vpack.c.bf16 %v4524, %v4523
        %v4592 = vpack.c.bf16 %v4526, %v4525
        %v4593 = vpack.c.bf16 %v4528, %v4527
        %v4594 = vpack.c.bf16 %v4530, %v4529
        %4595 = vrot.lane.b32.xlu0 %v1441, 64
        %v4596 = vpop.permute.xlu0 %4595
        %4597 = vrot.lane.b32.xlu0 %v1442, 64
        %v4598 = vpop.permute.xlu0 %4597
        %4599 = vrot.lane.b32.xlu0 %v1443, 64
        %v4600 = vpop.permute.xlu0 %4599
        %4601 = vrot.lane.b32.xlu0 %v1444, 64
        %v4602 = vpop.permute.xlu0 %4601
        %v4608 = vsel %vm3122, %v4531, 0
        %v4611 = vsel %vm3122, %v4532, 0
        %v4614 = vsel %vm3122, %v4533, 0
        %v4617 = vsel %vm3122, %v4534, 0
        %4619 = vmatprep.subr.bf16.mxu0 0
        %4620 = vmatpush1.bf16.msra.mxu0 %v4596
        %4621 = vmatprep.subr.bf16.mxu0 0
        %4622 = vmatpush1.bf16.msra.mxu0 %v4598
        %4623 = vmatprep.subr.bf16.mxu0 0
        %4624 = vmatpush1.bf16.msra.mxu0 %v4600
        %4625 = vmatprep.subr.bf16.mxu0 0
        %4626 = vmatpush1.bf16.msra.mxu0 %v4602
        %4627 = vmatprep.subr.bf16.mxu0 0
        %4628 = vmatpush1.bf16.msra.mxu0 0
        %4629 = vmatprep.subr.bf16.mxu0 0
        %4630 = vmatpush1.bf16.msra.mxu0 0
        %4631 = vmatprep.subr.bf16.mxu0 0
        %4632 = vmatpush1.bf16.msra.mxu0 0
        %4633 = vmatprep.subr.bf16.mxu0 0
        %4634 = vmatpush1.bf16.msra.mxu0 0
        %4635 = vmatprep.subr.bf16.mxu0 0
        %4636 = vmatpush1.bf16.msra.mxu0 0
        %4637 = vmatprep.subr.bf16.mxu0 0
        %4638 = vmatpush1.bf16.msra.mxu0 0
        %4639 = vmatprep.subr.bf16.mxu0 0
        %4640 = vmatpush1.bf16.msra.mxu0 0
        %4641 = vmatprep.subr.bf16.mxu0 0
        %4642 = vmatpush1.bf16.msra.mxu0 0
        %4643 = vmatprep.subr.bf16.mxu0 0
        %4644 = vmatpush1.bf16.msra.mxu0 0
        %4645 = vmatprep.subr.bf16.mxu0 0
        %4646 = vmatpush1.bf16.msra.mxu0 0
        %4647 = vmatprep.subr.bf16.mxu0 0
        %4648 = vmatpush1.bf16.msra.mxu0 0
        %4649 = vmatprep.subr.bf16.mxu0 0
        %4650 = vmatpush1.bf16.msra.mxu0 0
        %4651 = vmatprep.mubr.bf16.mxu0 0
        %4652 = vmatmul.mubr.bf16.gmra.mrb[0].mxu0 %v4608
        %v4653 = vpop.f32.mrb[0].mxu0
        %v4654 = vadd.f32 0.0, %v4653
        %v4655 = vpop.f32.mrb[0].mxu0
        %v4656 = vpop.f32.mrb[0].mxu0
        %v4657 = vadd.f32 0.0, %v4656
        %v4658 = vpop.f32.mrb[0].mxu0
        %4659 = vmatprep.mubr.bf16.mxu0 0
        %4660 = vmatmul.mubr.bf16.gmra.mrb[0].mxu0 %v4611
        %v4661 = vpop.f32.mrb[0].mxu0
        %v4662 = vadd.f32 0.0, %v4661
        %v4663 = vpop.f32.mrb[0].mxu0
        %v4664 = vpop.f32.mrb[0].mxu0
        %v4665 = vadd.f32 0.0, %v4664
        %v4666 = vpop.f32.mrb[0].mxu0
        %4667 = vmatprep.mubr.bf16.mxu0 0
        %4668 = vmatmul.mubr.bf16.gmra.mrb[0].mxu0 %v4614
        %v4669 = vpop.f32.mrb[0].mxu0
        %v4670 = vadd.f32 0.0, %v4669
        %v4671 = vpop.f32.mrb[0].mxu0
        %v4672 = vpop.f32.mrb[0].mxu0
        %v4673 = vadd.f32 0.0, %v4672
        %v4674 = vpop.f32.mrb[0].mxu0
        %4675 = vmatprep.mubr.bf16.mxu0 0
        %4676 = vmatmul.mubr.bf16.gmra.mrb[0].mxu0 %v4617
        %v4677 = vpop.f32.mrb[0].mxu0
        %v4678 = vadd.f32 0.0, %v4677
        %v4679 = vpop.f32.mrb[0].mxu0
        %v4680 = vpop.f32.mrb[0].mxu0
        %v4681 = vadd.f32 0.0, %v4680
        %v4682 = vpop.f32.mrb[0].mxu0
        %4683 = vdwg.mxu0
        %4684 = vrot.lane.b32.xlu0 %v1445, 64
        %v4685 = vpop.permute.xlu0 %4684
        %4686 = vrot.lane.b32.xlu0 %v1446, 64
        %v4687 = vpop.permute.xlu0 %4686
        %4688 = vrot.lane.b32.xlu0 %v1447, 64
        %v4689 = vpop.permute.xlu0 %4688
        %4690 = vrot.lane.b32.xlu0 %v1448, 64
        %v4691 = vpop.permute.xlu0 %4690
        %v4697 = vsel %vm3122, %v4535, 0
        %v4700 = vsel %vm3122, %v4536, 0
        %v4703 = vsel %vm3122, %v4537, 0
        %v4706 = vsel %vm3122, %v4538, 0
        %4708 = vmatprep.subr.bf16.mxu0 0
        %4709 = vmatpush1.bf16.msra.mxu0 %v4685
        %4710 = vmatprep.subr.bf16.mxu0 0
        %4711 = vmatpush1.bf16.msra.mxu0 %v4687
        %4712 = vmatprep.subr.bf16.mxu0 0
        %4713 = vmatpush1.bf16.msra.mxu0 %v4689
        %4714 = vmatprep.subr.bf16.mxu0 0
        %4715 = vmatpush1.bf16.msra.mxu0 %v4691
        %4716 = vmatprep.subr.bf16.mxu0 0
        %4717 = vmatpush1.bf16.msra.mxu0 0
        %4718 = vmatprep.subr.bf16.mxu0 0
        %4719 = vmatpush1.bf16.msra.mxu0 0
        %4720 = vmatprep.subr.bf16.mxu0 0
        %4721 = vmatpush1.bf16.msra.mxu0 0
        %4722 = vmatprep.subr.bf16.mxu0 0
        %4723 = vmatpush1.bf16.msra.mxu0 0
        %4724 = vmatprep.subr.bf16.mxu0 0
        %4725 = vmatpush1.bf16.msra.mxu0 0
        %4726 = vmatprep.subr.bf16.mxu0 0
        %4727 = vmatpush1.bf16.msra.mxu0 0
        %4728 = vmatprep.subr.bf16.mxu0 0
        %4729 = vmatpush1.bf16.msra.mxu0 0
        %4730 = vmatprep.subr.bf16.mxu0 0
        %4731 = vmatpush1.bf16.msra.mxu0 0
        %4732 = vmatprep.subr.bf16.mxu0 0
        %4733 = vmatpush1.bf16.msra.mxu0 0
        %4734 = vmatprep.subr.bf16.mxu0 0
        %4735 = vmatpush1.bf16.msra.mxu0 0
        %4736 = vmatprep.subr.bf16.mxu0 0
        %4737 = vmatpush1.bf16.msra.mxu0 0
        %4738 = vmatprep.subr.bf16.mxu0 0
        %4739 = vmatpush1.bf16.msra.mxu0 0
        %4740 = vmatprep.mubr.bf16.mxu0 0
        %4741 = vmatmul.mubr.bf16.gmra.mrb[0].mxu0 %v4697
        %v4742 = vpop.f32.mrb[0].mxu0
        %v4743 = vadd.f32 0.0, %v4742
        %v4744 = vpop.f32.mrb[0].mxu0
        %v4745 = vpop.f32.mrb[0].mxu0
        %v4746 = vadd.f32 0.0, %v4745
        %v4747 = vpop.f32.mrb[0].mxu0
        %4748 = vmatprep.mubr.bf16.mxu0 0
        %4749 = vmatmul.mubr.bf16.gmra.mrb[0].mxu0 %v4700
        %v4750 = vpop.f32.mrb[0].mxu0
        %v4751 = vadd.f32 0.0, %v4750
        %v4752 = vpop.f32.mrb[0].mxu0
        %v4753 = vpop.f32.mrb[0].mxu0
        %v4754 = vadd.f32 0.0, %v4753
        %v4755 = vpop.f32.mrb[0].mxu0
        %4756 = vmatprep.mubr.bf16.mxu0 0
        %4757 = vmatmul.mubr.bf16.gmra.mrb[0].mxu0 %v4703
        %v4758 = vpop.f32.mrb[0].mxu0
        %v4759 = vadd.f32 0.0, %v4758
        %v4760 = vpop.f32.mrb[0].mxu0
        %v4761 = vpop.f32.mrb[0].mxu0
        %v4762 = vadd.f32 0.0, %v4761
        %v4763 = vpop.f32.mrb[0].mxu0
        %4764 = vmatprep.mubr.bf16.mxu0 0
        %4765 = vmatmul.mubr.bf16.gmra.mrb[0].mxu0 %v4706
        %v4766 = vpop.f32.mrb[0].mxu0
        %v4767 = vadd.f32 0.0, %v4766
        %v4768 = vpop.f32.mrb[0].mxu0
        %v4769 = vpop.f32.mrb[0].mxu0
        %v4770 = vadd.f32 0.0, %v4769
        %v4771 = vpop.f32.mrb[0].mxu0
        %4772 = vdwg.mxu0
        %4773 = vrot.lane.b32.xlu0 %v1449, 64
        %v4774 = vpop.permute.xlu0 %4773
        %4775 = vrot.lane.b32.xlu0 %v1450, 64
        %v4776 = vpop.permute.xlu0 %4775
        %4777 = vrot.lane.b32.xlu0 %v1451, 64
        %v4778 = vpop.permute.xlu0 %4777
        %4779 = vrot.lane.b32.xlu0 %v1452, 64
        %v4780 = vpop.permute.xlu0 %4779
        %v4786 = vsel %vm3122, %v4539, 0
        %v4789 = vsel %vm3122, %v4540, 0
        %v4792 = vsel %vm3122, %v4541, 0
        %v4795 = vsel %vm3122, %v4542, 0
        %4797 = vmatprep.subr.bf16.mxu0 0
        %4798 = vmatpush1.bf16.msra.mxu0 %v4774
        %4799 = vmatprep.subr.bf16.mxu0 0
        %4800 = vmatpush1.bf16.msra.mxu0 %v4776
        %4801 = vmatprep.subr.bf16.mxu0 0
        %4802 = vmatpush1.bf16.msra.mxu0 %v4778
        %4803 = vmatprep.subr.bf16.mxu0 0
        %4804 = vmatpush1.bf16.msra.mxu0 %v4780
        %4805 = vmatprep.subr.bf16.mxu0 0
        %4806 = vmatpush1.bf16.msra.mxu0 0
        %4807 = vmatprep.subr.bf16.mxu0 0
        %4808 = vmatpush1.bf16.msra.mxu0 0
        %4809 = vmatprep.subr.bf16.mxu0 0
        %4810 = vmatpush1.bf16.msra.mxu0 0
        %4811 = vmatprep.subr.bf16.mxu0 0
        %4812 = vmatpush1.bf16.msra.mxu0 0
        %4813 = vmatprep.subr.bf16.mxu0 0
        %4814 = vmatpush1.bf16.msra.mxu0 0
        %4815 = vmatprep.subr.bf16.mxu0 0
        %4816 = vmatpush1.bf16.msra.mxu0 0
        %4817 = vmatprep.subr.bf16.mxu0 0
        %4818 = vmatpush1.bf16.msra.mxu0 0
        %4819 = vmatprep.subr.bf16.mxu0 0
        %4820 = vmatpush1.bf16.msra.mxu0 0
        %4821 = vmatprep.subr.bf16.mxu0 0
        %4822 = vmatpush1.bf16.msra.mxu0 0
        %4823 = vmatprep.subr.bf16.mxu0 0
        %4824 = vmatpush1.bf16.msra.mxu0 0
        %4825 = vmatprep.subr.bf16.mxu0 0
        %4826 = vmatpush1.bf16.msra.mxu0 0
        %4827 = vmatprep.subr.bf16.mxu0 0
        %4828 = vmatpush1.bf16.msra.mxu0 0
        %4829 = vmatprep.mubr.bf16.mxu0 0
        %4830 = vmatmul.mubr.bf16.gmra.mrb[0].mxu0 %v4786
        %v4831 = vpop.f32.mrb[0].mxu0
        %v4832 = vadd.f32 0.0, %v4831
        %v4833 = vpop.f32.mrb[0].mxu0
        %v4834 = vpop.f32.mrb[0].mxu0
        %v4835 = vadd.f32 0.0, %v4834
        %v4836 = vpop.f32.mrb[0].mxu0
        %4837 = vmatprep.mubr.bf16.mxu0 0
        %4838 = vmatmul.mubr.bf16.gmra.mrb[0].mxu0 %v4789
        %v4839 = vpop.f32.mrb[0].mxu0
        %v4840 = vadd.f32 0.0, %v4839
        %v4841 = vpop.f32.mrb[0].mxu0
        %v4842 = vpop.f32.mrb[0].mxu0
        %v4843 = vadd.f32 0.0, %v4842
        %v4844 = vpop.f32.mrb[0].mxu0
        %4845 = vmatprep.mubr.bf16.mxu0 0
        %4846 = vmatmul.mubr.bf16.gmra.mrb[0].mxu0 %v4792
        %v4847 = vpop.f32.mrb[0].mxu0
        %v4848 = vadd.f32 0.0, %v4847
        %v4849 = vpop.f32.mrb[0].mxu0
        %v4850 = vpop.f32.mrb[0].mxu0
        %v4851 = vadd.f32 0.0, %v4850
        %v4852 = vpop.f32.mrb[0].mxu0
        %4853 = vmatprep.mubr.bf16.mxu0 0
        %4854 = vmatmul.mubr.bf16.gmra.mrb[0].mxu0 %v4795
        %v4855 = vpop.f32.mrb[0].mxu0
        %v4856 = vadd.f32 0.0, %v4855
        %v4857 = vpop.f32.mrb[0].mxu0
        %v4858 = vpop.f32.mrb[0].mxu0
        %v4859 = vadd.f32 0.0, %v4858
        %v4860 = vpop.f32.mrb[0].mxu0
        %4861 = vdwg.mxu0
        %4862 = vrot.lane.b32.xlu0 %v1453, 64
        %v4863 = vpop.permute.xlu0 %4862
        %4864 = vrot.lane.b32.xlu0 %v1454, 64
        %v4865 = vpop.permute.xlu0 %4864
        %4866 = vrot.lane.b32.xlu0 %v1455, 64
        %v4867 = vpop.permute.xlu0 %4866
        %4868 = vrot.lane.b32.xlu0 %v1456, 64
        %v4869 = vpop.permute.xlu0 %4868
        %v4875 = vsel %vm3122, %v4543, 0
        %v4878 = vsel %vm3122, %v4544, 0
        %v4881 = vsel %vm3122, %v4545, 0
        %v4884 = vsel %vm3122, %v4546, 0
        %4886 = vmatprep.subr.bf16.mxu0 0
        %4887 = vmatpush1.bf16.msra.mxu0 %v4863
        %4888 = vmatprep.subr.bf16.mxu0 0
        %4889 = vmatpush1.bf16.msra.mxu0 %v4865
        %4890 = vmatprep.subr.bf16.mxu0 0
        %4891 = vmatpush1.bf16.msra.mxu0 %v4867
        %4892 = vmatprep.subr.bf16.mxu0 0
        %4893 = vmatpush1.bf16.msra.mxu0 %v4869
        %4894 = vmatprep.subr.bf16.mxu0 0
        %4895 = vmatpush1.bf16.msra.mxu0 0
        %4896 = vmatprep.subr.bf16.mxu0 0
        %4897 = vmatpush1.bf16.msra.mxu0 0
        %4898 = vmatprep.subr.bf16.mxu0 0
        %4899 = vmatpush1.bf16.msra.mxu0 0
        %4900 = vmatprep.subr.bf16.mxu0 0
        %4901 = vmatpush1.bf16.msra.mxu0 0
        %4902 = vmatprep.subr.bf16.mxu0 0
        %4903 = vmatpush1.bf16.msra.mxu0 0
        %4904 = vmatprep.subr.bf16.mxu0 0
        %4905 = vmatpush1.bf16.msra.mxu0 0
        %4906 = vmatprep.subr.bf16.mxu0 0
        %4907 = vmatpush1.bf16.msra.mxu0 0
        %4908 = vmatprep.subr.bf16.mxu0 0
        %4909 = vmatpush1.bf16.msra.mxu0 0
        %4910 = vmatprep.subr.bf16.mxu0 0
        %4911 = vmatpush1.bf16.msra.mxu0 0
        %4912 = vmatprep.subr.bf16.mxu0 0
        %4913 = vmatpush1.bf16.msra.mxu0 0
        %4914 = vmatprep.subr.bf16.mxu0 0
        %4915 = vmatpush1.bf16.msra.mxu0 0
        %4916 = vmatprep.subr.bf16.mxu0 0
        %4917 = vmatpush1.bf16.msra.mxu0 0
        %4918 = vmatprep.mubr.bf16.mxu0 0
        %4919 = vmatmul.mubr.bf16.gmra.mrb[0].mxu0 %v4875
        %v4920 = vpop.f32.mrb[0].mxu0
        %v4921 = vadd.f32 0.0, %v4920
        %v4922 = vpop.f32.mrb[0].mxu0
        %v4923 = vpop.f32.mrb[0].mxu0
        %v4924 = vadd.f32 0.0, %v4923
        %v4925 = vpop.f32.mrb[0].mxu0
        %4926 = vmatprep.mubr.bf16.mxu0 0
        %4927 = vmatmul.mubr.bf16.gmra.mrb[0].mxu0 %v4878
        %v4928 = vpop.f32.mrb[0].mxu0
        %v4929 = vadd.f32 0.0, %v4928
        %v4930 = vpop.f32.mrb[0].mxu0
        %v4931 = vpop.f32.mrb[0].mxu0
        %v4932 = vadd.f32 0.0, %v4931
        %v4933 = vpop.f32.mrb[0].mxu0
        %4934 = vmatprep.mubr.bf16.mxu0 0
        %4935 = vmatmul.mubr.bf16.gmra.mrb[0].mxu0 %v4881
        %v4936 = vpop.f32.mrb[0].mxu0
        %v4937 = vadd.f32 0.0, %v4936
        %v4938 = vpop.f32.mrb[0].mxu0
        %v4939 = vpop.f32.mrb[0].mxu0
        %v4940 = vadd.f32 0.0, %v4939
        %v4941 = vpop.f32.mrb[0].mxu0
        %4942 = vmatprep.mubr.bf16.mxu0 0
        %4943 = vmatmul.mubr.bf16.gmra.mrb[0].mxu0 %v4884
        %v4944 = vpop.f32.mrb[0].mxu0
        %v4945 = vadd.f32 0.0, %v4944
        %v4946 = vpop.f32.mrb[0].mxu0
        %v4947 = vpop.f32.mrb[0].mxu0
        %v4948 = vadd.f32 0.0, %v4947
        %v4949 = vpop.f32.mrb[0].mxu0
        %4950 = vdwg.mxu0
        %4951 = vrot.lane.b32.xlu0 %v1457, 64
        %v4952 = vpop.permute.xlu0 %4951
        %4953 = vrot.lane.b32.xlu0 %v1458, 64
        %v4954 = vpop.permute.xlu0 %4953
        %4955 = vrot.lane.b32.xlu0 %v1459, 64
        %v4956 = vpop.permute.xlu0 %4955
        %4957 = vrot.lane.b32.xlu0 %v1460, 64
        %v4958 = vpop.permute.xlu0 %4957
        %v4964 = vsel %vm3122, %v4547, 0
        %v4967 = vsel %vm3122, %v4548, 0
        %v4970 = vsel %vm3122, %v4549, 0
        %v4973 = vsel %vm3122, %v4550, 0
        %4975 = vmatprep.subr.bf16.mxu0 0
        %4976 = vmatpush1.bf16.msra.mxu0 %v4952
        %4977 = vmatprep.subr.bf16.mxu0 0
        %4978 = vmatpush1.bf16.msra.mxu0 %v4954
        %4979 = vmatprep.subr.bf16.mxu0 0
        %4980 = vmatpush1.bf16.msra.mxu0 %v4956
        %4981 = vmatprep.subr.bf16.mxu0 0
        %4982 = vmatpush1.bf16.msra.mxu0 %v4958
        %4983 = vmatprep.subr.bf16.mxu0 0
        %4984 = vmatpush1.bf16.msra.mxu0 0
        %4985 = vmatprep.subr.bf16.mxu0 0
        %4986 = vmatpush1.bf16.msra.mxu0 0
        %4987 = vmatprep.subr.bf16.mxu0 0
        %4988 = vmatpush1.bf16.msra.mxu0 0
        %4989 = vmatprep.subr.bf16.mxu0 0
        %4990 = vmatpush1.bf16.msra.mxu0 0
        %4991 = vmatprep.subr.bf16.mxu0 0
        %4992 = vmatpush1.bf16.msra.mxu0 0
        %4993 = vmatprep.subr.bf16.mxu0 0
        %4994 = vmatpush1.bf16.msra.mxu0 0
        %4995 = vmatprep.subr.bf16.mxu0 0
        %4996 = vmatpush1.bf16.msra.mxu0 0
        %4997 = vmatprep.subr.bf16.mxu0 0
        %4998 = vmatpush1.bf16.msra.mxu0 0
        %4999 = vmatprep.subr.bf16.mxu0 0
        %5000 = vmatpush1.bf16.msra.mxu0 0
        %5001 = vmatprep.subr.bf16.mxu0 0
        %5002 = vmatpush1.bf16.msra.mxu0 0
        %5003 = vmatprep.subr.bf16.mxu0 0
        %5004 = vmatpush1.bf16.msra.mxu0 0
        %5005 = vmatprep.subr.bf16.mxu0 0
        %5006 = vmatpush1.bf16.msra.mxu0 0
        %5007 = vmatprep.mubr.bf16.mxu0 0
        %5008 = vmatmul.mubr.bf16.gmra.mrb[0].mxu0 %v4964
        %v5009 = vpop.f32.mrb[0].mxu0
        %v5010 = vadd.f32 0.0, %v5009
        %v5011 = vpop.f32.mrb[0].mxu0
        %v5012 = vpop.f32.mrb[0].mxu0
        %v5013 = vadd.f32 0.0, %v5012
        %v5014 = vpop.f32.mrb[0].mxu0
        %5015 = vmatprep.mubr.bf16.mxu0 0
        %5016 = vmatmul.mubr.bf16.gmra.mrb[0].mxu0 %v4967
        %v5017 = vpop.f32.mrb[0].mxu0
        %v5018 = vadd.f32 0.0, %v5017
        %v5019 = vpop.f32.mrb[0].mxu0
        %v5020 = vpop.f32.mrb[0].mxu0
        %v5021 = vadd.f32 0.0, %v5020
        %v5022 = vpop.f32.mrb[0].mxu0
        %5023 = vmatprep.mubr.bf16.mxu0 0
        %5024 = vmatmul.mubr.bf16.gmra.mrb[0].mxu0 %v4970
        %v5025 = vpop.f32.mrb[0].mxu0
        %v5026 = vadd.f32 0.0, %v5025
        %v5027 = vpop.f32.mrb[0].mxu0
        %v5028 = vpop.f32.mrb[0].mxu0
        %v5029 = vadd.f32 0.0, %v5028
        %v5030 = vpop.f32.mrb[0].mxu0
        %5031 = vmatprep.mubr.bf16.mxu0 0
        %5032 = vmatmul.mubr.bf16.gmra.mrb[0].mxu0 %v4973
        %v5033 = vpop.f32.mrb[0].mxu0
        %v5034 = vadd.f32 0.0, %v5033
        %v5035 = vpop.f32.mrb[0].mxu0
        %v5036 = vpop.f32.mrb[0].mxu0
        %v5037 = vadd.f32 0.0, %v5036
        %v5038 = vpop.f32.mrb[0].mxu0
        %5039 = vdwg.mxu0
        %5040 = vrot.lane.b32.xlu0 %v1461, 64
        %v5041 = vpop.permute.xlu0 %5040
        %5042 = vrot.lane.b32.xlu0 %v1462, 64
        %v5043 = vpop.permute.xlu0 %5042
        %5044 = vrot.lane.b32.xlu0 %v1463, 64
        %v5045 = vpop.permute.xlu0 %5044
        %5046 = vrot.lane.b32.xlu0 %v1464, 64
        %v5047 = vpop.permute.xlu0 %5046
        %v5053 = vsel %vm3122, %v4551, 0
        %v5056 = vsel %vm3122, %v4552, 0
        %v5059 = vsel %vm3122, %v4553, 0
        %v5062 = vsel %vm3122, %v4554, 0
        %5064 = vmatprep.subr.bf16.mxu0 0
        %5065 = vmatpush1.bf16.msra.mxu0 %v5041
        %5066 = vmatprep.subr.bf16.mxu0 0
        %5067 = vmatpush1.bf16.msra.mxu0 %v5043
        %5068 = vmatprep.subr.bf16.mxu0 0
        %5069 = vmatpush1.bf16.msra.mxu0 %v5045
        %5070 = vmatprep.subr.bf16.mxu0 0
        %5071 = vmatpush1.bf16.msra.mxu0 %v5047
        %5072 = vmatprep.subr.bf16.mxu0 0
        %5073 = vmatpush1.bf16.msra.mxu0 0
        %5074 = vmatprep.subr.bf16.mxu0 0
        %5075 = vmatpush1.bf16.msra.mxu0 0
        %5076 = vmatprep.subr.bf16.mxu0 0
        %5077 = vmatpush1.bf16.msra.mxu0 0
        %5078 = vmatprep.subr.bf16.mxu0 0
        %5079 = vmatpush1.bf16.msra.mxu0 0
        %5080 = vmatprep.subr.bf16.mxu0 0
        %5081 = vmatpush1.bf16.msra.mxu0 0
        %5082 = vmatprep.subr.bf16.mxu0 0
        %5083 = vmatpush1.bf16.msra.mxu0 0
        %5084 = vmatprep.subr.bf16.mxu0 0
        %5085 = vmatpush1.bf16.msra.mxu0 0
        %5086 = vmatprep.subr.bf16.mxu0 0
        %5087 = vmatpush1.bf16.msra.mxu0 0
        %5088 = vmatprep.subr.bf16.mxu0 0
        %5089 = vmatpush1.bf16.msra.mxu0 0
        %5090 = vmatprep.subr.bf16.mxu0 0
        %5091 = vmatpush1.bf16.msra.mxu0 0
        %5092 = vmatprep.subr.bf16.mxu0 0
        %5093 = vmatpush1.bf16.msra.mxu0 0
        %5094 = vmatprep.subr.bf16.mxu0 0
        %5095 = vmatpush1.bf16.msra.mxu0 0
        %5096 = vmatprep.mubr.bf16.mxu0 0
        %5097 = vmatmul.mubr.bf16.gmra.mrb[0].mxu0 %v5053
        %v5098 = vpop.f32.mrb[0].mxu0
        %v5099 = vadd.f32 0.0, %v5098
        %v5100 = vpop.f32.mrb[0].mxu0
        %v5101 = vpop.f32.mrb[0].mxu0
        %v5102 = vadd.f32 0.0, %v5101
        %v5103 = vpop.f32.mrb[0].mxu0
        %5104 = vmatprep.mubr.bf16.mxu0 0
        %5105 = vmatmul.mubr.bf16.gmra.mrb[0].mxu0 %v5056
        %v5106 = vpop.f32.mrb[0].mxu0
        %v5107 = vadd.f32 0.0, %v5106
        %v5108 = vpop.f32.mrb[0].mxu0
        %v5109 = vpop.f32.mrb[0].mxu0
        %v5110 = vadd.f32 0.0, %v5109
        %v5111 = vpop.f32.mrb[0].mxu0
        %5112 = vmatprep.mubr.bf16.mxu0 0
        %5113 = vmatmul.mubr.bf16.gmra.mrb[0].mxu0 %v5059
        %v5114 = vpop.f32.mrb[0].mxu0
        %v5115 = vadd.f32 0.0, %v5114
        %v5116 = vpop.f32.mrb[0].mxu0
        %v5117 = vpop.f32.mrb[0].mxu0
        %v5118 = vadd.f32 0.0, %v5117
        %v5119 = vpop.f32.mrb[0].mxu0
        %5120 = vmatprep.mubr.bf16.mxu0 0
        %5121 = vmatmul.mubr.bf16.gmra.mrb[0].mxu0 %v5062
        %v5122 = vpop.f32.mrb[0].mxu0
        %v5123 = vadd.f32 0.0, %v5122
        %v5124 = vpop.f32.mrb[0].mxu0
        %v5125 = vpop.f32.mrb[0].mxu0
        %v5126 = vadd.f32 0.0, %v5125
        %v5127 = vpop.f32.mrb[0].mxu0
        %5128 = vdwg.mxu0
        %5129 = vrot.lane.b32.xlu0 %v1465, 64
        %v5130 = vpop.permute.xlu0 %5129
        %5131 = vrot.lane.b32.xlu0 %v1466, 64
        %v5132 = vpop.permute.xlu0 %5131
        %5133 = vrot.lane.b32.xlu0 %v1467, 64
        %v5134 = vpop.permute.xlu0 %5133
        %5135 = vrot.lane.b32.xlu0 %v1468, 64
        %v5136 = vpop.permute.xlu0 %5135
        %v5142 = vsel %vm3122, %v4555, 0
        %v5145 = vsel %vm3122, %v4556, 0
        %v5148 = vsel %vm3122, %v4557, 0
        %v5151 = vsel %vm3122, %v4558, 0
        %5153 = vmatprep.subr.bf16.mxu0 0
        %5154 = vmatpush1.bf16.msra.mxu0 %v5130
        %5155 = vmatprep.subr.bf16.mxu0 0
        %5156 = vmatpush1.bf16.msra.mxu0 %v5132
        %5157 = vmatprep.subr.bf16.mxu0 0
        %5158 = vmatpush1.bf16.msra.mxu0 %v5134
        %5159 = vmatprep.subr.bf16.mxu0 0
        %5160 = vmatpush1.bf16.msra.mxu0 %v5136
        %5161 = vmatprep.subr.bf16.mxu0 0
        %5162 = vmatpush1.bf16.msra.mxu0 0
        %5163 = vmatprep.subr.bf16.mxu0 0
        %5164 = vmatpush1.bf16.msra.mxu0 0
        %5165 = vmatprep.subr.bf16.mxu0 0
        %5166 = vmatpush1.bf16.msra.mxu0 0
        %5167 = vmatprep.subr.bf16.mxu0 0
        %5168 = vmatpush1.bf16.msra.mxu0 0
        %5169 = vmatprep.subr.bf16.mxu0 0
        %5170 = vmatpush1.bf16.msra.mxu0 0
        %5171 = vmatprep.subr.bf16.mxu0 0
        %5172 = vmatpush1.bf16.msra.mxu0 0
        %5173 = vmatprep.subr.bf16.mxu0 0
        %5174 = vmatpush1.bf16.msra.mxu0 0
        %5175 = vmatprep.subr.bf16.mxu0 0
        %5176 = vmatpush1.bf16.msra.mxu0 0
        %5177 = vmatprep.subr.bf16.mxu0 0
        %5178 = vmatpush1.bf16.msra.mxu0 0
        %5179 = vmatprep.subr.bf16.mxu0 0
        %5180 = vmatpush1.bf16.msra.mxu0 0
        %5181 = vmatprep.subr.bf16.mxu0 0
        %5182 = vmatpush1.bf16.msra.mxu0 0
        %5183 = vmatprep.subr.bf16.mxu0 0
        %5184 = vmatpush1.bf16.msra.mxu0 0
        %5185 = vmatprep.mubr.bf16.mxu0 0
        %5186 = vmatmul.mubr.bf16.gmra.mrb[0].mxu0 %v5142
        %v5187 = vpop.f32.mrb[0].mxu0
        %v5188 = vadd.f32 0.0, %v5187
        %v5189 = vpop.f32.mrb[0].mxu0
        %v5190 = vpop.f32.mrb[0].mxu0
        %v5191 = vadd.f32 0.0, %v5190
        %v5192 = vpop.f32.mrb[0].mxu0
        %5193 = vmatprep.mubr.bf16.mxu0 0
        %5194 = vmatmul.mubr.bf16.gmra.mrb[0].mxu0 %v5145
        %v5195 = vpop.f32.mrb[0].mxu0
        %v5196 = vadd.f32 0.0, %v5195
        %v5197 = vpop.f32.mrb[0].mxu0
        %v5198 = vpop.f32.mrb[0].mxu0
        %v5199 = vadd.f32 0.0, %v5198
        %v5200 = vpop.f32.mrb[0].mxu0
        %5201 = vmatprep.mubr.bf16.mxu0 0
        %5202 = vmatmul.mubr.bf16.gmra.mrb[0].mxu0 %v5148
        %v5203 = vpop.f32.mrb[0].mxu0
        %v5204 = vadd.f32 0.0, %v5203
        %v5205 = vpop.f32.mrb[0].mxu0
        %v5206 = vpop.f32.mrb[0].mxu0
        %v5207 = vadd.f32 0.0, %v5206
        %v5208 = vpop.f32.mrb[0].mxu0
        %5209 = vmatprep.mubr.bf16.mxu0 0
        %5210 = vmatmul.mubr.bf16.gmra.mrb[0].mxu0 %v5151
        %v5211 = vpop.f32.mrb[0].mxu0
        %v5212 = vadd.f32 0.0, %v5211
        %v5213 = vpop.f32.mrb[0].mxu0
        %v5214 = vpop.f32.mrb[0].mxu0
        %v5215 = vadd.f32 0.0, %v5214
        %v5216 = vpop.f32.mrb[0].mxu0
        %5217 = vdwg.mxu0
        %5218 = vrot.lane.b32.xlu0 %v1469, 64
        %v5219 = vpop.permute.xlu0 %5218
        %5220 = vrot.lane.b32.xlu0 %v1470, 64
        %v5221 = vpop.permute.xlu0 %5220
        %5222 = vrot.lane.b32.xlu0 %v1471, 64
        %v5223 = vpop.permute.xlu0 %5222
        %5224 = vrot.lane.b32.xlu0 %v1472, 64
        %v5225 = vpop.permute.xlu0 %5224
        %v5231 = vsel %vm3122, %v4559, 0
        %v5234 = vsel %vm3122, %v4560, 0
        %v5237 = vsel %vm3122, %v4561, 0
        %v5240 = vsel %vm3122, %v4562, 0
        %5242 = vmatprep.subr.bf16.mxu0 0
        %5243 = vmatpush1.bf16.msra.mxu0 %v5219
        %5244 = vmatprep.subr.bf16.mxu0 0
        %5245 = vmatpush1.bf16.msra.mxu0 %v5221
        %5246 = vmatprep.subr.bf16.mxu0 0
        %5247 = vmatpush1.bf16.msra.mxu0 %v5223
        %5248 = vmatprep.subr.bf16.mxu0 0
        %5249 = vmatpush1.bf16.msra.mxu0 %v5225
        %5250 = vmatprep.subr.bf16.mxu0 0
        %5251 = vmatpush1.bf16.msra.mxu0 0
        %5252 = vmatprep.subr.bf16.mxu0 0
        %5253 = vmatpush1.bf16.msra.mxu0 0
        %5254 = vmatprep.subr.bf16.mxu0 0
        %5255 = vmatpush1.bf16.msra.mxu0 0
        %5256 = vmatprep.subr.bf16.mxu0 0
        %5257 = vmatpush1.bf16.msra.mxu0 0
        %5258 = vmatprep.subr.bf16.mxu0 0
        %5259 = vmatpush1.bf16.msra.mxu0 0
        %5260 = vmatprep.subr.bf16.mxu0 0
        %5261 = vmatpush1.bf16.msra.mxu0 0
        %5262 = vmatprep.subr.bf16.mxu0 0
        %5263 = vmatpush1.bf16.msra.mxu0 0
        %5264 = vmatprep.subr.bf16.mxu0 0
        %5265 = vmatpush1.bf16.msra.mxu0 0
        %5266 = vmatprep.subr.bf16.mxu0 0
        %5267 = vmatpush1.bf16.msra.mxu0 0
        %5268 = vmatprep.subr.bf16.mxu0 0
        %5269 = vmatpush1.bf16.msra.mxu0 0
        %5270 = vmatprep.subr.bf16.mxu0 0
        %5271 = vmatpush1.bf16.msra.mxu0 0
        %5272 = vmatprep.subr.bf16.mxu0 0
        %5273 = vmatpush1.bf16.msra.mxu0 0
        %5274 = vmatprep.mubr.bf16.mxu0 0
        %5275 = vmatmul.mubr.bf16.gmra.mrb[0].mxu0 %v5231
        %v5276 = vpop.f32.mrb[0].mxu0
        %v5277 = vadd.f32 0.0, %v5276
        %v5278 = vpop.f32.mrb[0].mxu0
        %v5279 = vpop.f32.mrb[0].mxu0
        %v5280 = vadd.f32 0.0, %v5279
        %v5281 = vpop.f32.mrb[0].mxu0
        %5282 = vmatprep.mubr.bf16.mxu0 0
        %5283 = vmatmul.mubr.bf16.gmra.mrb[0].mxu0 %v5234
        %v5284 = vpop.f32.mrb[0].mxu0
        %v5285 = vadd.f32 0.0, %v5284
        %v5286 = vpop.f32.mrb[0].mxu0
        %v5287 = vpop.f32.mrb[0].mxu0
        %v5288 = vadd.f32 0.0, %v5287
        %v5289 = vpop.f32.mrb[0].mxu0
        %5290 = vmatprep.mubr.bf16.mxu0 0
        %5291 = vmatmul.mubr.bf16.gmra.mrb[0].mxu0 %v5237
        %v5292 = vpop.f32.mrb[0].mxu0
        %v5293 = vadd.f32 0.0, %v5292
        %v5294 = vpop.f32.mrb[0].mxu0
        %v5295 = vpop.f32.mrb[0].mxu0
        %v5296 = vadd.f32 0.0, %v5295
        %v5297 = vpop.f32.mrb[0].mxu0
        %5298 = vmatprep.mubr.bf16.mxu0 0
        %5299 = vmatmul.mubr.bf16.gmra.mrb[0].mxu0 %v5240
        %v5300 = vpop.f32.mrb[0].mxu0
        %v5301 = vadd.f32 0.0, %v5300
        %v5302 = vpop.f32.mrb[0].mxu0
        %v5303 = vpop.f32.mrb[0].mxu0
        %v5304 = vadd.f32 0.0, %v5303
        %v5305 = vpop.f32.mrb[0].mxu0
        %5306 = vdwg.mxu0
        %5307 = vrot.lane.b32.xlu0 %v1473, 64
        %v5308 = vpop.permute.xlu0 %5307
        %5309 = vrot.lane.b32.xlu0 %v1474, 64
        %v5310 = vpop.permute.xlu0 %5309
        %5311 = vrot.lane.b32.xlu0 %v1475, 64
        %v5312 = vpop.permute.xlu0 %5311
        %5313 = vrot.lane.b32.xlu0 %v1476, 64
        %v5314 = vpop.permute.xlu0 %5313
        %v5320 = vsel %vm3122, %v4563, 0
        %v5323 = vsel %vm3122, %v4564, 0
        %v5326 = vsel %vm3122, %v4565, 0
        %v5329 = vsel %vm3122, %v4566, 0
        %5331 = vmatprep.subr.bf16.mxu0 0
        %5332 = vmatpush1.bf16.msra.mxu0 %v5308
        %5333 = vmatprep.subr.bf16.mxu0 0
        %5334 = vmatpush1.bf16.msra.mxu0 %v5310
        %5335 = vmatprep.subr.bf16.mxu0 0
        %5336 = vmatpush1.bf16.msra.mxu0 %v5312
        %5337 = vmatprep.subr.bf16.mxu0 0
        %5338 = vmatpush1.bf16.msra.mxu0 %v5314
        %5339 = vmatprep.subr.bf16.mxu0 0
        %5340 = vmatpush1.bf16.msra.mxu0 0
        %5341 = vmatprep.subr.bf16.mxu0 0
        %5342 = vmatpush1.bf16.msra.mxu0 0
        %5343 = vmatprep.subr.bf16.mxu0 0
        %5344 = vmatpush1.bf16.msra.mxu0 0
        %5345 = vmatprep.subr.bf16.mxu0 0
        %5346 = vmatpush1.bf16.msra.mxu0 0
        %5347 = vmatprep.subr.bf16.mxu0 0
        %5348 = vmatpush1.bf16.msra.mxu0 0
        %5349 = vmatprep.subr.bf16.mxu0 0
        %5350 = vmatpush1.bf16.msra.mxu0 0
        %5351 = vmatprep.subr.bf16.mxu0 0
        %5352 = vmatpush1.bf16.msra.mxu0 0
        %5353 = vmatprep.subr.bf16.mxu0 0
        %5354 = vmatpush1.bf16.msra.mxu0 0
        %5355 = vmatprep.subr.bf16.mxu0 0
        %5356 = vmatpush1.bf16.msra.mxu0 0
        %5357 = vmatprep.subr.bf16.mxu0 0
        %5358 = vmatpush1.bf16.msra.mxu0 0
        %5359 = vmatprep.subr.bf16.mxu0 0
        %5360 = vmatpush1.bf16.msra.mxu0 0
        %5361 = vmatprep.subr.bf16.mxu0 0
        %5362 = vmatpush1.bf16.msra.mxu0 0
        %5363 = vmatprep.mubr.bf16.mxu0 0
        %5364 = vmatmul.mubr.bf16.gmra.mrb[0].mxu0 %v5320
        %v5365 = vpop.f32.mrb[0].mxu0
        %v5366 = vadd.f32 0.0, %v5365
        %v5367 = vpop.f32.mrb[0].mxu0
        %v5368 = vpop.f32.mrb[0].mxu0
        %v5369 = vadd.f32 0.0, %v5368
        %v5370 = vpop.f32.mrb[0].mxu0
        %5371 = vmatprep.mubr.bf16.mxu0 0
        %5372 = vmatmul.mubr.bf16.gmra.mrb[0].mxu0 %v5323
        %v5373 = vpop.f32.mrb[0].mxu0
        %v5374 = vadd.f32 0.0, %v5373
        %v5375 = vpop.f32.mrb[0].mxu0
        %v5376 = vpop.f32.mrb[0].mxu0
        %v5377 = vadd.f32 0.0, %v5376
        %v5378 = vpop.f32.mrb[0].mxu0
        %5379 = vmatprep.mubr.bf16.mxu0 0
        %5380 = vmatmul.mubr.bf16.gmra.mrb[0].mxu0 %v5326
        %v5381 = vpop.f32.mrb[0].mxu0
        %v5382 = vadd.f32 0.0, %v5381
        %v5383 = vpop.f32.mrb[0].mxu0
        %v5384 = vpop.f32.mrb[0].mxu0
        %v5385 = vadd.f32 0.0, %v5384
        %v5386 = vpop.f32.mrb[0].mxu0
        %5387 = vmatprep.mubr.bf16.mxu0 0
        %5388 = vmatmul.mubr.bf16.gmra.mrb[0].mxu0 %v5329
        %v5389 = vpop.f32.mrb[0].mxu0
        %v5390 = vadd.f32 0.0, %v5389
        %v5391 = vpop.f32.mrb[0].mxu0
        %v5392 = vpop.f32.mrb[0].mxu0
        %v5393 = vadd.f32 0.0, %v5392
        %v5394 = vpop.f32.mrb[0].mxu0
        %5395 = vdwg.mxu0
        %5396 = vrot.lane.b32.xlu0 %v1477, 64
        %v5397 = vpop.permute.xlu0 %5396
        %5398 = vrot.lane.b32.xlu0 %v1478, 64
        %v5399 = vpop.permute.xlu0 %5398
        %5400 = vrot.lane.b32.xlu0 %v1479, 64
        %v5401 = vpop.permute.xlu0 %5400
        %5402 = vrot.lane.b32.xlu0 %v1480, 64
        %v5403 = vpop.permute.xlu0 %5402
        %v5409 = vsel %vm3122, %v4567, 0
        %v5412 = vsel %vm3122, %v4568, 0
        %v5415 = vsel %vm3122, %v4569, 0
        %v5418 = vsel %vm3122, %v4570, 0
        %5420 = vmatprep.subr.bf16.mxu0 0
        %5421 = vmatpush1.bf16.msra.mxu0 %v5397
        %5422 = vmatprep.subr.bf16.mxu0 0
        %5423 = vmatpush1.bf16.msra.mxu0 %v5399
        %5424 = vmatprep.subr.bf16.mxu0 0
        %5425 = vmatpush1.bf16.msra.mxu0 %v5401
        %5426 = vmatprep.subr.bf16.mxu0 0
        %5427 = vmatpush1.bf16.msra.mxu0 %v5403
        %5428 = vmatprep.subr.bf16.mxu0 0
        %5429 = vmatpush1.bf16.msra.mxu0 0
        %5430 = vmatprep.subr.bf16.mxu0 0
        %5431 = vmatpush1.bf16.msra.mxu0 0
        %5432 = vmatprep.subr.bf16.mxu0 0
        %5433 = vmatpush1.bf16.msra.mxu0 0
        %5434 = vmatprep.subr.bf16.mxu0 0
        %5435 = vmatpush1.bf16.msra.mxu0 0
        %5436 = vmatprep.subr.bf16.mxu0 0
        %5437 = vmatpush1.bf16.msra.mxu0 0
        %5438 = vmatprep.subr.bf16.mxu0 0
        %5439 = vmatpush1.bf16.msra.mxu0 0
        %5440 = vmatprep.subr.bf16.mxu0 0
        %5441 = vmatpush1.bf16.msra.mxu0 0
        %5442 = vmatprep.subr.bf16.mxu0 0
        %5443 = vmatpush1.bf16.msra.mxu0 0
        %5444 = vmatprep.subr.bf16.mxu0 0
        %5445 = vmatpush1.bf16.msra.mxu0 0
        %5446 = vmatprep.subr.bf16.mxu0 0
        %5447 = vmatpush1.bf16.msra.mxu0 0
        %5448 = vmatprep.subr.bf16.mxu0 0
        %5449 = vmatpush1.bf16.msra.mxu0 0
        %5450 = vmatprep.subr.bf16.mxu0 0
        %5451 = vmatpush1.bf16.msra.mxu0 0
        %5452 = vmatprep.mubr.bf16.mxu0 0
        %5453 = vmatmul.mubr.bf16.gmra.mrb[0].mxu0 %v5409
        %v5454 = vpop.f32.mrb[0].mxu0
        %v5455 = vadd.f32 0.0, %v5454
        %v5456 = vpop.f32.mrb[0].mxu0
        %v5457 = vpop.f32.mrb[0].mxu0
        %v5458 = vadd.f32 0.0, %v5457
        %v5459 = vpop.f32.mrb[0].mxu0
        %5460 = vmatprep.mubr.bf16.mxu0 0
        %5461 = vmatmul.mubr.bf16.gmra.mrb[0].mxu0 %v5412
        %v5462 = vpop.f32.mrb[0].mxu0
        %v5463 = vadd.f32 0.0, %v5462
        %v5464 = vpop.f32.mrb[0].mxu0
        %v5465 = vpop.f32.mrb[0].mxu0
        %v5466 = vadd.f32 0.0, %v5465
        %v5467 = vpop.f32.mrb[0].mxu0
        %5468 = vmatprep.mubr.bf16.mxu0 0
        %5469 = vmatmul.mubr.bf16.gmra.mrb[0].mxu0 %v5415
        %v5470 = vpop.f32.mrb[0].mxu0
        %v5471 = vadd.f32 0.0, %v5470
        %v5472 = vpop.f32.mrb[0].mxu0
        %v5473 = vpop.f32.mrb[0].mxu0
        %v5474 = vadd.f32 0.0, %v5473
        %v5475 = vpop.f32.mrb[0].mxu0
        %5476 = vmatprep.mubr.bf16.mxu0 0
        %5477 = vmatmul.mubr.bf16.gmra.mrb[0].mxu0 %v5418
        %v5478 = vpop.f32.mrb[0].mxu0
        %v5479 = vadd.f32 0.0, %v5478
        %v5480 = vpop.f32.mrb[0].mxu0
        %v5481 = vpop.f32.mrb[0].mxu0
        %v5482 = vadd.f32 0.0, %v5481
        %v5483 = vpop.f32.mrb[0].mxu0
        %5484 = vdwg.mxu0
        %5485 = vrot.lane.b32.xlu0 %v1481, 64
        %v5486 = vpop.permute.xlu0 %5485
        %5487 = vrot.lane.b32.xlu0 %v1482, 64
        %v5488 = vpop.permute.xlu0 %5487
        %5489 = vrot.lane.b32.xlu0 %v1483, 64
        %v5490 = vpop.permute.xlu0 %5489
        %5491 = vrot.lane.b32.xlu0 %v1484, 64
        %v5492 = vpop.permute.xlu0 %5491
        %v5498 = vsel %vm3122, %v4571, 0
        %v5501 = vsel %vm3122, %v4572, 0
        %v5504 = vsel %vm3122, %v4573, 0
        %v5507 = vsel %vm3122, %v4574, 0
        %5509 = vmatprep.subr.bf16.mxu0 0
        %5510 = vmatpush1.bf16.msra.mxu0 %v5486
        %5511 = vmatprep.subr.bf16.mxu0 0
        %5512 = vmatpush1.bf16.msra.mxu0 %v5488
        %5513 = vmatprep.subr.bf16.mxu0 0
        %5514 = vmatpush1.bf16.msra.mxu0 %v5490
        %5515 = vmatprep.subr.bf16.mxu0 0
        %5516 = vmatpush1.bf16.msra.mxu0 %v5492
        %5517 = vmatprep.subr.bf16.mxu0 0
        %5518 = vmatpush1.bf16.msra.mxu0 0
        %5519 = vmatprep.subr.bf16.mxu0 0
        %5520 = vmatpush1.bf16.msra.mxu0 0
        %5521 = vmatprep.subr.bf16.mxu0 0
        %5522 = vmatpush1.bf16.msra.mxu0 0
        %5523 = vmatprep.subr.bf16.mxu0 0
        %5524 = vmatpush1.bf16.msra.mxu0 0
        %5525 = vmatprep.subr.bf16.mxu0 0
        %5526 = vmatpush1.bf16.msra.mxu0 0
        %5527 = vmatprep.subr.bf16.mxu0 0
        %5528 = vmatpush1.bf16.msra.mxu0 0
        %5529 = vmatprep.subr.bf16.mxu0 0
        %5530 = vmatpush1.bf16.msra.mxu0 0
        %5531 = vmatprep.subr.bf16.mxu0 0
        %5532 = vmatpush1.bf16.msra.mxu0 0
        %5533 = vmatprep.subr.bf16.mxu0 0
        %5534 = vmatpush1.bf16.msra.mxu0 0
        %5535 = vmatprep.subr.bf16.mxu0 0
        %5536 = vmatpush1.bf16.msra.mxu0 0
        %5537 = vmatprep.subr.bf16.mxu0 0
        %5538 = vmatpush1.bf16.msra.mxu0 0
        %5539 = vmatprep.subr.bf16.mxu0 0
        %5540 = vmatpush1.bf16.msra.mxu0 0
        %5541 = vmatprep.mubr.bf16.mxu0 0
        %5542 = vmatmul.mubr.bf16.gmra.mrb[0].mxu0 %v5498
        %v5543 = vpop.f32.mrb[0].mxu0
        %v5544 = vadd.f32 0.0, %v5543
        %v5545 = vpop.f32.mrb[0].mxu0
        %v5546 = vpop.f32.mrb[0].mxu0
        %v5547 = vadd.f32 0.0, %v5546
        %v5548 = vpop.f32.mrb[0].mxu0
        %5549 = vmatprep.mubr.bf16.mxu0 0
        %5550 = vmatmul.mubr.bf16.gmra.mrb[0].mxu0 %v5501
        %v5551 = vpop.f32.mrb[0].mxu0
        %v5552 = vadd.f32 0.0, %v5551
        %v5553 = vpop.f32.mrb[0].mxu0
        %v5554 = vpop.f32.mrb[0].mxu0
        %v5555 = vadd.f32 0.0, %v5554
        %v5556 = vpop.f32.mrb[0].mxu0
        %5557 = vmatprep.mubr.bf16.mxu0 0
        %5558 = vmatmul.mubr.bf16.gmra.mrb[0].mxu0 %v5504
        %v5559 = vpop.f32.mrb[0].mxu0
        %v5560 = vadd.f32 0.0, %v5559
        %v5561 = vpop.f32.mrb[0].mxu0
        %v5562 = vpop.f32.mrb[0].mxu0
        %v5563 = vadd.f32 0.0, %v5562
        %v5564 = vpop.f32.mrb[0].mxu0
        %5565 = vmatprep.mubr.bf16.mxu0 0
        %5566 = vmatmul.mubr.bf16.gmra.mrb[0].mxu0 %v5507
        %v5567 = vpop.f32.mrb[0].mxu0
        %v5568 = vadd.f32 0.0, %v5567
        %v5569 = vpop.f32.mrb[0].mxu0
        %v5570 = vpop.f32.mrb[0].mxu0
        %v5571 = vadd.f32 0.0, %v5570
        %v5572 = vpop.f32.mrb[0].mxu0
        %5573 = vdwg.mxu0
        %5574 = vrot.lane.b32.xlu0 %v1485, 64
        %v5575 = vpop.permute.xlu0 %5574
        %5576 = vrot.lane.b32.xlu0 %v1486, 64
        %v5577 = vpop.permute.xlu0 %5576
        %5578 = vrot.lane.b32.xlu0 %v1487, 64
        %v5579 = vpop.permute.xlu0 %5578
        %5580 = vrot.lane.b32.xlu0 %v1488, 64
        %v5581 = vpop.permute.xlu0 %5580
        %v5587 = vsel %vm3122, %v4575, 0
        %v5590 = vsel %vm3122, %v4576, 0
        %v5593 = vsel %vm3122, %v4577, 0
        %v5596 = vsel %vm3122, %v4578, 0
        %5598 = vmatprep.subr.bf16.mxu0 0
        %5599 = vmatpush1.bf16.msra.mxu0 %v5575
        %5600 = vmatprep.subr.bf16.mxu0 0
        %5601 = vmatpush1.bf16.msra.mxu0 %v5577
        %5602 = vmatprep.subr.bf16.mxu0 0
        %5603 = vmatpush1.bf16.msra.mxu0 %v5579
        %5604 = vmatprep.subr.bf16.mxu0 0
        %5605 = vmatpush1.bf16.msra.mxu0 %v5581
        %5606 = vmatprep.subr.bf16.mxu0 0
        %5607 = vmatpush1.bf16.msra.mxu0 0
        %5608 = vmatprep.subr.bf16.mxu0 0
        %5609 = vmatpush1.bf16.msra.mxu0 0
        %5610 = vmatprep.subr.bf16.mxu0 0
        %5611 = vmatpush1.bf16.msra.mxu0 0
        %5612 = vmatprep.subr.bf16.mxu0 0
        %5613 = vmatpush1.bf16.msra.mxu0 0
        %5614 = vmatprep.subr.bf16.mxu0 0
        %5615 = vmatpush1.bf16.msra.mxu0 0
        %5616 = vmatprep.subr.bf16.mxu0 0
        %5617 = vmatpush1.bf16.msra.mxu0 0
        %5618 = vmatprep.subr.bf16.mxu0 0
        %5619 = vmatpush1.bf16.msra.mxu0 0
        %5620 = vmatprep.subr.bf16.mxu0 0
        %5621 = vmatpush1.bf16.msra.mxu0 0
        %5622 = vmatprep.subr.bf16.mxu0 0
        %5623 = vmatpush1.bf16.msra.mxu0 0
        %5624 = vmatprep.subr.bf16.mxu0 0
        %5625 = vmatpush1.bf16.msra.mxu0 0
        %5626 = vmatprep.subr.bf16.mxu0 0
        %5627 = vmatpush1.bf16.msra.mxu0 0
        %5628 = vmatprep.subr.bf16.mxu0 0
        %5629 = vmatpush1.bf16.msra.mxu0 0
        %5630 = vmatprep.mubr.bf16.mxu0 0
        %5631 = vmatmul.mubr.bf16.gmra.mrb[0].mxu0 %v5587
        %v5632 = vpop.f32.mrb[0].mxu0
        %v5633 = vadd.f32 0.0, %v5632
        %v5634 = vpop.f32.mrb[0].mxu0
        %v5635 = vpop.f32.mrb[0].mxu0
        %v5636 = vadd.f32 0.0, %v5635
        %v5637 = vpop.f32.mrb[0].mxu0
        %5638 = vmatprep.mubr.bf16.mxu0 0
        %5639 = vmatmul.mubr.bf16.gmra.mrb[0].mxu0 %v5590
        %v5640 = vpop.f32.mrb[0].mxu0
        %v5641 = vadd.f32 0.0, %v5640
        %v5642 = vpop.f32.mrb[0].mxu0
        %v5643 = vpop.f32.mrb[0].mxu0
        %v5644 = vadd.f32 0.0, %v5643
        %v5645 = vpop.f32.mrb[0].mxu0
        %5646 = vmatprep.mubr.bf16.mxu0 0
        %5647 = vmatmul.mubr.bf16.gmra.mrb[0].mxu0 %v5593
        %v5648 = vpop.f32.mrb[0].mxu0
        %v5649 = vadd.f32 0.0, %v5648
        %v5650 = vpop.f32.mrb[0].mxu0
        %v5651 = vpop.f32.mrb[0].mxu0
        %v5652 = vadd.f32 0.0, %v5651
        %v5653 = vpop.f32.mrb[0].mxu0
        %5654 = vmatprep.mubr.bf16.mxu0 0
        %5655 = vmatmul.mubr.bf16.gmra.mrb[0].mxu0 %v5596
        %v5656 = vpop.f32.mrb[0].mxu0
        %v5657 = vadd.f32 0.0, %v5656
        %v5658 = vpop.f32.mrb[0].mxu0
        %v5659 = vpop.f32.mrb[0].mxu0
        %v5660 = vadd.f32 0.0, %v5659
        %v5661 = vpop.f32.mrb[0].mxu0
        %5662 = vdwg.mxu0
        %5663 = vrot.lane.b32.xlu0 %v1489, 64
        %v5664 = vpop.permute.xlu0 %5663
        %5665 = vrot.lane.b32.xlu0 %v1490, 64
        %v5666 = vpop.permute.xlu0 %5665
        %5667 = vrot.lane.b32.xlu0 %v1491, 64
        %v5668 = vpop.permute.xlu0 %5667
        %5669 = vrot.lane.b32.xlu0 %v1492, 64
        %v5670 = vpop.permute.xlu0 %5669
        %v5676 = vsel %vm3122, %v4579, 0
        %v5679 = vsel %vm3122, %v4580, 0
        %v5682 = vsel %vm3122, %v4581, 0
        %v5685 = vsel %vm3122, %v4582, 0
        %5687 = vmatprep.subr.bf16.mxu0 0
        %5688 = vmatpush1.bf16.msra.mxu0 %v5664
        %5689 = vmatprep.subr.bf16.mxu0 0
        %5690 = vmatpush1.bf16.msra.mxu0 %v5666
        %5691 = vmatprep.subr.bf16.mxu0 0
        %5692 = vmatpush1.bf16.msra.mxu0 %v5668
        %5693 = vmatprep.subr.bf16.mxu0 0
        %5694 = vmatpush1.bf16.msra.mxu0 %v5670
        %5695 = vmatprep.subr.bf16.mxu0 0
        %5696 = vmatpush1.bf16.msra.mxu0 0
        %5697 = vmatprep.subr.bf16.mxu0 0
        %5698 = vmatpush1.bf16.msra.mxu0 0
        %5699 = vmatprep.subr.bf16.mxu0 0
        %5700 = vmatpush1.bf16.msra.mxu0 0
        %5701 = vmatprep.subr.bf16.mxu0 0
        %5702 = vmatpush1.bf16.msra.mxu0 0
        %5703 = vmatprep.subr.bf16.mxu0 0
        %5704 = vmatpush1.bf16.msra.mxu0 0
        %5705 = vmatprep.subr.bf16.mxu0 0
        %5706 = vmatpush1.bf16.msra.mxu0 0
        %5707 = vmatprep.subr.bf16.mxu0 0
        %5708 = vmatpush1.bf16.msra.mxu0 0
        %5709 = vmatprep.subr.bf16.mxu0 0
        %5710 = vmatpush1.bf16.msra.mxu0 0
        %5711 = vmatprep.subr.bf16.mxu0 0
        %5712 = vmatpush1.bf16.msra.mxu0 0
        %5713 = vmatprep.subr.bf16.mxu0 0
        %5714 = vmatpush1.bf16.msra.mxu0 0
        %5715 = vmatprep.subr.bf16.mxu0 0
        %5716 = vmatpush1.bf16.msra.mxu0 0
        %5717 = vmatprep.subr.bf16.mxu0 0
        %5718 = vmatpush1.bf16.msra.mxu0 0
        %5719 = vmatprep.mubr.bf16.mxu0 0
        %5720 = vmatmul.mubr.bf16.gmra.mrb[0].mxu0 %v5676
        %v5721 = vpop.f32.mrb[0].mxu0
        %v5722 = vadd.f32 0.0, %v5721
        %v5723 = vpop.f32.mrb[0].mxu0
        %v5724 = vpop.f32.mrb[0].mxu0
        %v5725 = vadd.f32 0.0, %v5724
        %v5726 = vpop.f32.mrb[0].mxu0
        %5727 = vmatprep.mubr.bf16.mxu0 0
        %5728 = vmatmul.mubr.bf16.gmra.mrb[0].mxu0 %v5679
        %v5729 = vpop.f32.mrb[0].mxu0
        %v5730 = vadd.f32 0.0, %v5729
        %v5731 = vpop.f32.mrb[0].mxu0
        %v5732 = vpop.f32.mrb[0].mxu0
        %v5733 = vadd.f32 0.0, %v5732
        %v5734 = vpop.f32.mrb[0].mxu0
        %5735 = vmatprep.mubr.bf16.mxu0 0
        %5736 = vmatmul.mubr.bf16.gmra.mrb[0].mxu0 %v5682
        %v5737 = vpop.f32.mrb[0].mxu0
        %v5738 = vadd.f32 0.0, %v5737
        %v5739 = vpop.f32.mrb[0].mxu0
        %v5740 = vpop.f32.mrb[0].mxu0
        %v5741 = vadd.f32 0.0, %v5740
        %v5742 = vpop.f32.mrb[0].mxu0
        %5743 = vmatprep.mubr.bf16.mxu0 0
        %5744 = vmatmul.mubr.bf16.gmra.mrb[0].mxu0 %v5685
        %v5745 = vpop.f32.mrb[0].mxu0
        %v5746 = vadd.f32 0.0, %v5745
        %v5747 = vpop.f32.mrb[0].mxu0
        %v5748 = vpop.f32.mrb[0].mxu0
        %v5749 = vadd.f32 0.0, %v5748
        %v5750 = vpop.f32.mrb[0].mxu0
        %5751 = vdwg.mxu0
        %5752 = vrot.lane.b32.xlu0 %v1493, 64
        %v5753 = vpop.permute.xlu0 %5752
        %5754 = vrot.lane.b32.xlu0 %v1494, 64
        %v5755 = vpop.permute.xlu0 %5754
        %5756 = vrot.lane.b32.xlu0 %v1495, 64
        %v5757 = vpop.permute.xlu0 %5756
        %5758 = vrot.lane.b32.xlu0 %v1496, 64
        %v5759 = vpop.permute.xlu0 %5758
        %v5765 = vsel %vm3122, %v4583, 0
        %v5768 = vsel %vm3122, %v4584, 0
        %v5771 = vsel %vm3122, %v4585, 0
        %v5774 = vsel %vm3122, %v4586, 0
        %5776 = vmatprep.subr.bf16.mxu0 0
        %5777 = vmatpush1.bf16.msra.mxu0 %v5753
        %5778 = vmatprep.subr.bf16.mxu0 0
        %5779 = vmatpush1.bf16.msra.mxu0 %v5755
        %5780 = vmatprep.subr.bf16.mxu0 0
        %5781 = vmatpush1.bf16.msra.mxu0 %v5757
        %5782 = vmatprep.subr.bf16.mxu0 0
        %5783 = vmatpush1.bf16.msra.mxu0 %v5759
        %5784 = vmatprep.subr.bf16.mxu0 0
        %5785 = vmatpush1.bf16.msra.mxu0 0
        %5786 = vmatprep.subr.bf16.mxu0 0
        %5787 = vmatpush1.bf16.msra.mxu0 0
        %5788 = vmatprep.subr.bf16.mxu0 0
        %5789 = vmatpush1.bf16.msra.mxu0 0
        %5790 = vmatprep.subr.bf16.mxu0 0
        %5791 = vmatpush1.bf16.msra.mxu0 0
        %5792 = vmatprep.subr.bf16.mxu0 0
        %5793 = vmatpush1.bf16.msra.mxu0 0
        %5794 = vmatprep.subr.bf16.mxu0 0
        %5795 = vmatpush1.bf16.msra.mxu0 0
        %5796 = vmatprep.subr.bf16.mxu0 0
        %5797 = vmatpush1.bf16.msra.mxu0 0
        %5798 = vmatprep.subr.bf16.mxu0 0
        %5799 = vmatpush1.bf16.msra.mxu0 0
        %5800 = vmatprep.subr.bf16.mxu0 0
        %5801 = vmatpush1.bf16.msra.mxu0 0
        %5802 = vmatprep.subr.bf16.mxu0 0
        %5803 = vmatpush1.bf16.msra.mxu0 0
        %5804 = vmatprep.subr.bf16.mxu0 0
        %5805 = vmatpush1.bf16.msra.mxu0 0
        %5806 = vmatprep.subr.bf16.mxu0 0
        %5807 = vmatpush1.bf16.msra.mxu0 0
        %5808 = vmatprep.mubr.bf16.mxu0 0
        %5809 = vmatmul.mubr.bf16.gmra.mrb[0].mxu0 %v5765
        %v5810 = vpop.f32.mrb[0].mxu0
        %v5811 = vadd.f32 0.0, %v5810
        %v5812 = vpop.f32.mrb[0].mxu0
        %v5813 = vpop.f32.mrb[0].mxu0
        %v5814 = vadd.f32 0.0, %v5813
        %v5815 = vpop.f32.mrb[0].mxu0
        %5816 = vmatprep.mubr.bf16.mxu0 0
        %5817 = vmatmul.mubr.bf16.gmra.mrb[0].mxu0 %v5768
        %v5818 = vpop.f32.mrb[0].mxu0
        %v5819 = vadd.f32 0.0, %v5818
        %v5820 = vpop.f32.mrb[0].mxu0
        %v5821 = vpop.f32.mrb[0].mxu0
        %v5822 = vadd.f32 0.0, %v5821
        %v5823 = vpop.f32.mrb[0].mxu0
        %5824 = vmatprep.mubr.bf16.mxu0 0
        %5825 = vmatmul.mubr.bf16.gmra.mrb[0].mxu0 %v5771
        %v5826 = vpop.f32.mrb[0].mxu0
        %v5827 = vadd.f32 0.0, %v5826
        %v5828 = vpop.f32.mrb[0].mxu0
        %v5829 = vpop.f32.mrb[0].mxu0
        %v5830 = vadd.f32 0.0, %v5829
        %v5831 = vpop.f32.mrb[0].mxu0
        %5832 = vmatprep.mubr.bf16.mxu0 0
        %5833 = vmatmul.mubr.bf16.gmra.mrb[0].mxu0 %v5774
        %v5834 = vpop.f32.mrb[0].mxu0
        %v5835 = vadd.f32 0.0, %v5834
        %v5836 = vpop.f32.mrb[0].mxu0
        %v5837 = vpop.f32.mrb[0].mxu0
        %v5838 = vadd.f32 0.0, %v5837
        %v5839 = vpop.f32.mrb[0].mxu0
        %5840 = vdwg.mxu0
        %5841 = vrot.lane.b32.xlu0 %v1497, 64
        %v5842 = vpop.permute.xlu0 %5841
        %5843 = vrot.lane.b32.xlu0 %v1498, 64
        %v5844 = vpop.permute.xlu0 %5843
        %5845 = vrot.lane.b32.xlu0 %v1499, 64
        %v5846 = vpop.permute.xlu0 %5845
        %5847 = vrot.lane.b32.xlu0 %v1500, 64
        %v5848 = vpop.permute.xlu0 %5847
        %v5854 = vsel %vm3122, %v4587, 0
        %v5857 = vsel %vm3122, %v4588, 0
        %v5860 = vsel %vm3122, %v4589, 0
        %v5863 = vsel %vm3122, %v4590, 0
        %5865 = vmatprep.subr.bf16.mxu0 0
        %5866 = vmatpush1.bf16.msra.mxu0 %v5842
        %5867 = vmatprep.subr.bf16.mxu0 0
        %5868 = vmatpush1.bf16.msra.mxu0 %v5844
        %5869 = vmatprep.subr.bf16.mxu0 0
        %5870 = vmatpush1.bf16.msra.mxu0 %v5846
        %5871 = vmatprep.subr.bf16.mxu0 0
        %5872 = vmatpush1.bf16.msra.mxu0 %v5848
        %5873 = vmatprep.subr.bf16.mxu0 0
        %5874 = vmatpush1.bf16.msra.mxu0 0
        %5875 = vmatprep.subr.bf16.mxu0 0
        %5876 = vmatpush1.bf16.msra.mxu0 0
        %5877 = vmatprep.subr.bf16.mxu0 0
        %5878 = vmatpush1.bf16.msra.mxu0 0
        %5879 = vmatprep.subr.bf16.mxu0 0
        %5880 = vmatpush1.bf16.msra.mxu0 0
        %5881 = vmatprep.subr.bf16.mxu0 0
        %5882 = vmatpush1.bf16.msra.mxu0 0
        %5883 = vmatprep.subr.bf16.mxu0 0
        %5884 = vmatpush1.bf16.msra.mxu0 0
        %5885 = vmatprep.subr.bf16.mxu0 0
        %5886 = vmatpush1.bf16.msra.mxu0 0
        %5887 = vmatprep.subr.bf16.mxu0 0
        %5888 = vmatpush1.bf16.msra.mxu0 0
        %5889 = vmatprep.subr.bf16.mxu0 0
        %5890 = vmatpush1.bf16.msra.mxu0 0
        %5891 = vmatprep.subr.bf16.mxu0 0
        %5892 = vmatpush1.bf16.msra.mxu0 0
        %5893 = vmatprep.subr.bf16.mxu0 0
        %5894 = vmatpush1.bf16.msra.mxu0 0
        %5895 = vmatprep.subr.bf16.mxu0 0
        %5896 = vmatpush1.bf16.msra.mxu0 0
        %5897 = vmatprep.mubr.bf16.mxu0 0
        %5898 = vmatmul.mubr.bf16.gmra.mrb[0].mxu0 %v5854
        %v5899 = vpop.f32.mrb[0].mxu0
        %v5900 = vadd.f32 0.0, %v5899
        %v5901 = vpop.f32.mrb[0].mxu0
        %v5902 = vpop.f32.mrb[0].mxu0
        %v5903 = vadd.f32 0.0, %v5902
        %v5904 = vpop.f32.mrb[0].mxu0
        %5905 = vmatprep.mubr.bf16.mxu0 0
        %5906 = vmatmul.mubr.bf16.gmra.mrb[0].mxu0 %v5857
        %v5907 = vpop.f32.mrb[0].mxu0
        %v5908 = vadd.f32 0.0, %v5907
        %v5909 = vpop.f32.mrb[0].mxu0
        %v5910 = vpop.f32.mrb[0].mxu0
        %v5911 = vadd.f32 0.0, %v5910
        %v5912 = vpop.f32.mrb[0].mxu0
        %5913 = vmatprep.mubr.bf16.mxu0 0
        %5914 = vmatmul.mubr.bf16.gmra.mrb[0].mxu0 %v5860
        %v5915 = vpop.f32.mrb[0].mxu0
        %v5916 = vadd.f32 0.0, %v5915
        %v5917 = vpop.f32.mrb[0].mxu0
        %v5918 = vpop.f32.mrb[0].mxu0
        %v5919 = vadd.f32 0.0, %v5918
        %v5920 = vpop.f32.mrb[0].mxu0
        %5921 = vmatprep.mubr.bf16.mxu0 0
        %5922 = vmatmul.mubr.bf16.gmra.mrb[0].mxu0 %v5863
        %v5923 = vpop.f32.mrb[0].mxu0
        %v5924 = vadd.f32 0.0, %v5923
        %v5925 = vpop.f32.mrb[0].mxu0
        %v5926 = vpop.f32.mrb[0].mxu0
        %v5927 = vadd.f32 0.0, %v5926
        %v5928 = vpop.f32.mrb[0].mxu0
        %5929 = vdwg.mxu0
        %5930 = vrot.lane.b32.xlu0 %v1501, 64
        %v5931 = vpop.permute.xlu0 %5930
        %5932 = vrot.lane.b32.xlu0 %v1502, 64
        %v5933 = vpop.permute.xlu0 %5932
        %5934 = vrot.lane.b32.xlu0 %v1503, 64
        %v5935 = vpop.permute.xlu0 %5934
        %5936 = vrot.lane.b32.xlu0 %v1504, 64
        %v5937 = vpop.permute.xlu0 %5936
        %v5943 = vsel %vm3122, %v4591, 0
        %v5946 = vsel %vm3122, %v4592, 0
        %v5949 = vsel %vm3122, %v4593, 0
        %v5952 = vsel %vm3122, %v4594, 0
        %5954 = vmatprep.subr.bf16.mxu0 0
        %5955 = vmatpush1.bf16.msra.mxu0 %v5931
        %5956 = vmatprep.subr.bf16.mxu0 0
        %5957 = vmatpush1.bf16.msra.mxu0 %v5933
        %5958 = vmatprep.subr.bf16.mxu0 0
        %5959 = vmatpush1.bf16.msra.mxu0 %v5935
        %5960 = vmatprep.subr.bf16.mxu0 0
        %5961 = vmatpush1.bf16.msra.mxu0 %v5937
        %5962 = vmatprep.subr.bf16.mxu0 0
        %5963 = vmatpush1.bf16.msra.mxu0 0
        %5964 = vmatprep.subr.bf16.mxu0 0
        %5965 = vmatpush1.bf16.msra.mxu0 0
        %5966 = vmatprep.subr.bf16.mxu0 0
        %5967 = vmatpush1.bf16.msra.mxu0 0
        %5968 = vmatprep.subr.bf16.mxu0 0
        %5969 = vmatpush1.bf16.msra.mxu0 0
        %5970 = vmatprep.subr.bf16.mxu0 0
        %5971 = vmatpush1.bf16.msra.mxu0 0
        %5972 = vmatprep.subr.bf16.mxu0 0
        %5973 = vmatpush1.bf16.msra.mxu0 0
        %5974 = vmatprep.subr.bf16.mxu0 0
        %5975 = vmatpush1.bf16.msra.mxu0 0
        %5976 = vmatprep.subr.bf16.mxu0 0
        %5977 = vmatpush1.bf16.msra.mxu0 0
        %5978 = vmatprep.subr.bf16.mxu0 0
        %5979 = vmatpush1.bf16.msra.mxu0 0
        %5980 = vmatprep.subr.bf16.mxu0 0
        %5981 = vmatpush1.bf16.msra.mxu0 0
        %5982 = vmatprep.subr.bf16.mxu0 0
        %5983 = vmatpush1.bf16.msra.mxu0 0
        %5984 = vmatprep.subr.bf16.mxu0 0
        %5985 = vmatpush1.bf16.msra.mxu0 0
        %5986 = vmatprep.mubr.bf16.mxu0 0
        %5987 = vmatmul.mubr.bf16.gmra.mrb[0].mxu0 %v5943
        %v5988 = vpop.f32.mrb[0].mxu0
        %v5989 = vadd.f32 0.0, %v5988
        %v5990 = vpop.f32.mrb[0].mxu0
        %v5991 = vpop.f32.mrb[0].mxu0
        %v5992 = vadd.f32 0.0, %v5991
        %v5993 = vpop.f32.mrb[0].mxu0
        %5994 = vmatprep.mubr.bf16.mxu0 0
        %5995 = vmatmul.mubr.bf16.gmra.mrb[0].mxu0 %v5946
        %v5996 = vpop.f32.mrb[0].mxu0
        %v5997 = vadd.f32 0.0, %v5996
        %v5998 = vpop.f32.mrb[0].mxu0
        %v5999 = vpop.f32.mrb[0].mxu0
        %v6000 = vadd.f32 0.0, %v5999
        %v6001 = vpop.f32.mrb[0].mxu0
        %6002 = vmatprep.mubr.bf16.mxu0 0
        %6003 = vmatmul.mubr.bf16.gmra.mrb[0].mxu0 %v5949
        %v6004 = vpop.f32.mrb[0].mxu0
        %v6005 = vadd.f32 0.0, %v6004
        %v6006 = vpop.f32.mrb[0].mxu0
        %v6007 = vpop.f32.mrb[0].mxu0
        %v6008 = vadd.f32 0.0, %v6007
        %v6009 = vpop.f32.mrb[0].mxu0
        %6010 = vmatprep.mubr.bf16.mxu0 0
        %6011 = vmatmul.mubr.bf16.gmra.mrb[0].mxu0 %v5952
        %v6012 = vpop.f32.mrb[0].mxu0
        %v6013 = vadd.f32 0.0, %v6012
        %v6014 = vpop.f32.mrb[0].mxu0
        %v6015 = vpop.f32.mrb[0].mxu0
        %v6016 = vadd.f32 0.0, %v6015
        %v6017 = vpop.f32.mrb[0].mxu0
        %6018 = vdwg.mxu0
        %6051 = vrot.lane.b32.xlu0 %v5010, 8
        %v6052 = vpop.permute.xlu0 %6051
        %6053 = vrot.lane.b32.xlu0 %v5013, 8
        %v6054 = vpop.permute.xlu0 %6053
        %6055 = vrot.lane.b32.xlu0 %v5018, 8
        %v6056 = vpop.permute.xlu0 %6055
        %6057 = vrot.lane.b32.xlu0 %v5021, 8
        %v6058 = vpop.permute.xlu0 %6057
        %6059 = vrot.lane.b32.xlu0 %v5026, 8
        %v6060 = vpop.permute.xlu0 %6059
        %6061 = vrot.lane.b32.xlu0 %v5029, 8
        %v6062 = vpop.permute.xlu0 %6061
        %6063 = vrot.lane.b32.xlu0 %v5034, 8
        %v6064 = vpop.permute.xlu0 %6063
        %6065 = vrot.lane.b32.xlu0 %v5037, 8
        %v6066 = vpop.permute.xlu0 %6065
        %6067 = vrot.lane.b32.xlu0 %v5099, 8
        %v6068 = vpop.permute.xlu0 %6067
        %6069 = vrot.lane.b32.xlu0 %v5102, 8
        %v6070 = vpop.permute.xlu0 %6069
        %6071 = vrot.lane.b32.xlu0 %v5107, 8
        %v6072 = vpop.permute.xlu0 %6071
        %6073 = vrot.lane.b32.xlu0 %v5110, 8
        %v6074 = vpop.permute.xlu0 %6073
        %6075 = vrot.lane.b32.xlu0 %v5115, 8
        %v6076 = vpop.permute.xlu0 %6075
        %6077 = vrot.lane.b32.xlu0 %v5118, 8
        %v6078 = vpop.permute.xlu0 %6077
        %6079 = vrot.lane.b32.xlu0 %v5123, 8
        %v6080 = vpop.permute.xlu0 %6079
        %6081 = vrot.lane.b32.xlu0 %v5126, 8
        %v6082 = vpop.permute.xlu0 %6081
        %6083 = vrot.lane.b32.xlu0 %v5188, 8
        %v6084 = vpop.permute.xlu0 %6083
        %6085 = vrot.lane.b32.xlu0 %v5191, 8
        %v6086 = vpop.permute.xlu0 %6085
        %6087 = vrot.lane.b32.xlu0 %v5196, 8
        %v6088 = vpop.permute.xlu0 %6087
        %6089 = vrot.lane.b32.xlu0 %v5199, 8
        %v6090 = vpop.permute.xlu0 %6089
        %6091 = vrot.lane.b32.xlu0 %v5204, 8
        %v6092 = vpop.permute.xlu0 %6091
        %6093 = vrot.lane.b32.xlu0 %v5207, 8
        %v6094 = vpop.permute.xlu0 %6093
        %6095 = vrot.lane.b32.xlu0 %v5212, 8
        %v6096 = vpop.permute.xlu0 %6095
        %6097 = vrot.lane.b32.xlu0 %v5215, 8
        %v6098 = vpop.permute.xlu0 %6097
        %6099 = vrot.lane.b32.xlu0 %v5277, 8
        %v6100 = vpop.permute.xlu0 %6099
        %6101 = vrot.lane.b32.xlu0 %v5280, 8
        %v6102 = vpop.permute.xlu0 %6101
        %6103 = vrot.lane.b32.xlu0 %v5285, 8
        %v6104 = vpop.permute.xlu0 %6103
        %6105 = vrot.lane.b32.xlu0 %v5288, 8
        %v6106 = vpop.permute.xlu0 %6105
        %6107 = vrot.lane.b32.xlu0 %v5293, 8
        %v6108 = vpop.permute.xlu0 %6107
        %6109 = vrot.lane.b32.xlu0 %v5296, 8
        %v6110 = vpop.permute.xlu0 %6109
        %6111 = vrot.lane.b32.xlu0 %v5301, 8
        %v6112 = vpop.permute.xlu0 %6111
        %6113 = vrot.lane.b32.xlu0 %v5304, 8
        %v6114 = vpop.permute.xlu0 %6113
        %6179 = vrot.lane.b32.xlu0 %v5366, 16
        %v6180 = vpop.permute.xlu0 %6179
        %6181 = vrot.lane.b32.xlu0 %v5369, 16
        %v6182 = vpop.permute.xlu0 %6181
        %6183 = vrot.lane.b32.xlu0 %v5374, 16
        %v6184 = vpop.permute.xlu0 %6183
        %6185 = vrot.lane.b32.xlu0 %v5377, 16
        %v6186 = vpop.permute.xlu0 %6185
        %6187 = vrot.lane.b32.xlu0 %v5382, 16
        %v6188 = vpop.permute.xlu0 %6187
        %6189 = vrot.lane.b32.xlu0 %v5385, 16
        %v6190 = vpop.permute.xlu0 %6189
        %6191 = vrot.lane.b32.xlu0 %v5390, 16
        %v6192 = vpop.permute.xlu0 %6191
        %6193 = vrot.lane.b32.xlu0 %v5393, 16
        %v6194 = vpop.permute.xlu0 %6193
        %6195 = vrot.lane.b32.xlu0 %v5455, 16
        %v6196 = vpop.permute.xlu0 %6195
        %6197 = vrot.lane.b32.xlu0 %v5458, 16
        %v6198 = vpop.permute.xlu0 %6197
        %6199 = vrot.lane.b32.xlu0 %v5463, 16
        %v6200 = vpop.permute.xlu0 %6199
        %6201 = vrot.lane.b32.xlu0 %v5466, 16
        %v6202 = vpop.permute.xlu0 %6201
        %6203 = vrot.lane.b32.xlu0 %v5471, 16
        %v6204 = vpop.permute.xlu0 %6203
        %6205 = vrot.lane.b32.xlu0 %v5474, 16
        %v6206 = vpop.permute.xlu0 %6205
        %6207 = vrot.lane.b32.xlu0 %v5479, 16
        %v6208 = vpop.permute.xlu0 %6207
        %6209 = vrot.lane.b32.xlu0 %v5482, 16
        %v6210 = vpop.permute.xlu0 %6209
        %6211 = vrot.lane.b32.xlu0 %v5544, 16
        %v6212 = vpop.permute.xlu0 %6211
        %6213 = vrot.lane.b32.xlu0 %v5547, 16
        %v6214 = vpop.permute.xlu0 %6213
        %6215 = vrot.lane.b32.xlu0 %v5552, 16
        %v6216 = vpop.permute.xlu0 %6215
        %6217 = vrot.lane.b32.xlu0 %v5555, 16
        %v6218 = vpop.permute.xlu0 %6217
        %6219 = vrot.lane.b32.xlu0 %v5560, 16
        %v6220 = vpop.permute.xlu0 %6219
        %6221 = vrot.lane.b32.xlu0 %v5563, 16
        %v6222 = vpop.permute.xlu0 %6221
        %6223 = vrot.lane.b32.xlu0 %v5568, 16
        %v6224 = vpop.permute.xlu0 %6223
        %6225 = vrot.lane.b32.xlu0 %v5571, 16
        %v6226 = vpop.permute.xlu0 %6225
        %6227 = vrot.lane.b32.xlu0 %v5633, 16
        %v6228 = vpop.permute.xlu0 %6227
        %6229 = vrot.lane.b32.xlu0 %v5636, 16
        %v6230 = vpop.permute.xlu0 %6229
        %6231 = vrot.lane.b32.xlu0 %v5641, 16
        %v6232 = vpop.permute.xlu0 %6231
        %6233 = vrot.lane.b32.xlu0 %v5644, 16
        %v6234 = vpop.permute.xlu0 %6233
        %6235 = vrot.lane.b32.xlu0 %v5649, 16
        %v6236 = vpop.permute.xlu0 %6235
        %6237 = vrot.lane.b32.xlu0 %v5652, 16
        %v6238 = vpop.permute.xlu0 %6237
        %6239 = vrot.lane.b32.xlu0 %v5657, 16
        %v6240 = vpop.permute.xlu0 %6239
        %6241 = vrot.lane.b32.xlu0 %v5660, 16
        %v6242 = vpop.permute.xlu0 %6241
        %6307 = vrot.lane.b32.xlu0 %v5722, 24
        %v6308 = vpop.permute.xlu0 %6307
        %6309 = vrot.lane.b32.xlu0 %v5725, 24
        %v6310 = vpop.permute.xlu0 %6309
        %6311 = vrot.lane.b32.xlu0 %v5730, 24
        %v6312 = vpop.permute.xlu0 %6311
        %6313 = vrot.lane.b32.xlu0 %v5733, 24
        %v6314 = vpop.permute.xlu0 %6313
        %6315 = vrot.lane.b32.xlu0 %v5738, 24
        %v6316 = vpop.permute.xlu0 %6315
        %6317 = vrot.lane.b32.xlu0 %v5741, 24
        %v6318 = vpop.permute.xlu0 %6317
        %6319 = vrot.lane.b32.xlu0 %v5746, 24
        %v6320 = vpop.permute.xlu0 %6319
        %6321 = vrot.lane.b32.xlu0 %v5749, 24
        %v6322 = vpop.permute.xlu0 %6321
        %6323 = vrot.lane.b32.xlu0 %v5811, 24
        %v6324 = vpop.permute.xlu0 %6323
        %6325 = vrot.lane.b32.xlu0 %v5814, 24
        %v6326 = vpop.permute.xlu0 %6325
        %6327 = vrot.lane.b32.xlu0 %v5819, 24
        %v6328 = vpop.permute.xlu0 %6327
        %6329 = vrot.lane.b32.xlu0 %v5822, 24
        %v6330 = vpop.permute.xlu0 %6329
        %6331 = vrot.lane.b32.xlu0 %v5827, 24
        %v6332 = vpop.permute.xlu0 %6331
        %6333 = vrot.lane.b32.xlu0 %v5830, 24
        %v6334 = vpop.permute.xlu0 %6333
        %6335 = vrot.lane.b32.xlu0 %v5835, 24
        %v6336 = vpop.permute.xlu0 %6335
        %6337 = vrot.lane.b32.xlu0 %v5838, 24
        %v6338 = vpop.permute.xlu0 %6337
        %6339 = vrot.lane.b32.xlu0 %v5900, 24
        %v6340 = vpop.permute.xlu0 %6339
        %6341 = vrot.lane.b32.xlu0 %v5903, 24
        %v6342 = vpop.permute.xlu0 %6341
        %6343 = vrot.lane.b32.xlu0 %v5908, 24
        %v6344 = vpop.permute.xlu0 %6343
        %6345 = vrot.lane.b32.xlu0 %v5911, 24
        %v6346 = vpop.permute.xlu0 %6345
        %6347 = vrot.lane.b32.xlu0 %v5916, 24
        %v6348 = vpop.permute.xlu0 %6347
        %6349 = vrot.lane.b32.xlu0 %v5919, 24
        %v6350 = vpop.permute.xlu0 %6349
        %6351 = vrot.lane.b32.xlu0 %v5924, 24
        %v6352 = vpop.permute.xlu0 %6351
        %6353 = vrot.lane.b32.xlu0 %v5927, 24
        %v6354 = vpop.permute.xlu0 %6353
        %6355 = vrot.lane.b32.xlu0 %v5989, 24
        %v6356 = vpop.permute.xlu0 %6355
        %6357 = vrot.lane.b32.xlu0 %v5992, 24
        %v6358 = vpop.permute.xlu0 %6357
        %6359 = vrot.lane.b32.xlu0 %v5997, 24
        %v6360 = vpop.permute.xlu0 %6359
        %6361 = vrot.lane.b32.xlu0 %v6000, 24
        %v6362 = vpop.permute.xlu0 %6361
        %6363 = vrot.lane.b32.xlu0 %v6005, 24
        %v6364 = vpop.permute.xlu0 %6363
        %6365 = vrot.lane.b32.xlu0 %v6008, 24
        %v6366 = vpop.permute.xlu0 %6365
        %6367 = vrot.lane.b32.xlu0 %v6013, 24
        %v6368 = vpop.permute.xlu0 %6367
        %6369 = vrot.lane.b32.xlu0 %v6016, 24
        %v6370 = vpop.permute.xlu0 %6369
        %v6403 = vsel %vm1517, %v4654, %v6052
        %v6404 = vsel %vm1517, %v4657, %v6054
        %v6405 = vsel %vm1517, %v4662, %v6056
        %v6406 = vsel %vm1517, %v4665, %v6058
        %v6407 = vsel %vm1517, %v4670, %v6060
        %v6408 = vsel %vm1517, %v4673, %v6062
        %v6409 = vsel %vm1517, %v4678, %v6064
        %v6410 = vsel %vm1517, %v4681, %v6066
        %v6411 = vsel %vm1517, %v4743, %v6068
        %v6412 = vsel %vm1517, %v4746, %v6070
        %v6413 = vsel %vm1517, %v4751, %v6072
        %v6414 = vsel %vm1517, %v4754, %v6074
        %v6415 = vsel %vm1517, %v4759, %v6076
        %v6416 = vsel %vm1517, %v4762, %v6078
        %v6417 = vsel %vm1517, %v4767, %v6080
        %v6418 = vsel %vm1517, %v4770, %v6082
        %v6419 = vsel %vm1517, %v4832, %v6084
        %v6420 = vsel %vm1517, %v4835, %v6086
        %v6421 = vsel %vm1517, %v4840, %v6088
        %v6422 = vsel %vm1517, %v4843, %v6090
        %v6423 = vsel %vm1517, %v4848, %v6092
        %v6424 = vsel %vm1517, %v4851, %v6094
        %v6425 = vsel %vm1517, %v4856, %v6096
        %v6426 = vsel %vm1517, %v4859, %v6098
        %v6427 = vsel %vm1517, %v4921, %v6100
        %v6428 = vsel %vm1517, %v4924, %v6102
        %v6429 = vsel %vm1517, %v4929, %v6104
        %v6430 = vsel %vm1517, %v4932, %v6106
        %v6431 = vsel %vm1517, %v4937, %v6108
        %v6432 = vsel %vm1517, %v4940, %v6110
        %v6433 = vsel %vm1517, %v4945, %v6112
        %v6434 = vsel %vm1517, %v4948, %v6114
        %vm6435 = vcmask 130048
        %v6436 = vsel %vm6435, %v6403, %v6180
        %v6437 = vsel %vm6435, %v6404, %v6182
        %v6438 = vsel %vm6435, %v6405, %v6184
        %v6439 = vsel %vm6435, %v6406, %v6186
        %v6440 = vsel %vm6435, %v6407, %v6188
        %v6441 = vsel %vm6435, %v6408, %v6190
        %v6442 = vsel %vm6435, %v6409, %v6192
        %v6443 = vsel %vm6435, %v6410, %v6194
        %v6444 = vsel %vm6435, %v6411, %v6196
        %v6445 = vsel %vm6435, %v6412, %v6198
        %v6446 = vsel %vm6435, %v6413, %v6200
        %v6447 = vsel %vm6435, %v6414, %v6202
        %v6448 = vsel %vm6435, %v6415, %v6204
        %v6449 = vsel %vm6435, %v6416, %v6206
        %v6450 = vsel %vm6435, %v6417, %v6208
        %v6451 = vsel %vm6435, %v6418, %v6210
        %v6452 = vsel %vm6435, %v6419, %v6212
        %v6453 = vsel %vm6435, %v6420, %v6214
        %v6454 = vsel %vm6435, %v6421, %v6216
        %v6455 = vsel %vm6435, %v6422, %v6218
        %v6456 = vsel %vm6435, %v6423, %v6220
        %v6457 = vsel %vm6435, %v6424, %v6222
        %v6458 = vsel %vm6435, %v6425, %v6224
        %v6459 = vsel %vm6435, %v6426, %v6226
        %v6460 = vsel %vm6435, %v6427, %v6228
        %v6461 = vsel %vm6435, %v6428, %v6230
        %v6462 = vsel %vm6435, %v6429, %v6232
        %v6463 = vsel %vm6435, %v6430, %v6234
        %v6464 = vsel %vm6435, %v6431, %v6236
        %v6465 = vsel %vm6435, %v6432, %v6238
        %v6466 = vsel %vm6435, %v6433, %v6240
        %v6467 = vsel %vm6435, %v6434, %v6242
        %vm6468 = vcmask 195584
        %v6469 = vsel %vm6468, %v6436, %v6308
        %v6470 = vsel %vm6468, %v6437, %v6310
        %v6471 = vsel %vm6468, %v6438, %v6312
        %v6472 = vsel %vm6468, %v6439, %v6314
        %v6473 = vsel %vm6468, %v6440, %v6316
        %v6474 = vsel %vm6468, %v6441, %v6318
        %v6475 = vsel %vm6468, %v6442, %v6320
        %v6476 = vsel %vm6468, %v6443, %v6322
        %v6477 = vsel %vm6468, %v6444, %v6324
        %v6478 = vsel %vm6468, %v6445, %v6326
        %v6479 = vsel %vm6468, %v6446, %v6328
        %v6480 = vsel %vm6468, %v6447, %v6330
        %v6481 = vsel %vm6468, %v6448, %v6332
        %v6482 = vsel %vm6468, %v6449, %v6334
        %v6483 = vsel %vm6468, %v6450, %v6336
        %v6484 = vsel %vm6468, %v6451, %v6338
        %v6485 = vsel %vm6468, %v6452, %v6340
        %v6486 = vsel %vm6468, %v6453, %v6342
        %v6487 = vsel %vm6468, %v6454, %v6344
        %v6488 = vsel %vm6468, %v6455, %v6346
        %v6489 = vsel %vm6468, %v6456, %v6348
        %v6490 = vsel %vm6468, %v6457, %v6350
        %v6491 = vsel %vm6468, %v6458, %v6352
        %v6492 = vsel %vm6468, %v6459, %v6354
        %v6493 = vsel %vm6468, %v6460, %v6356
        %v6494 = vsel %vm6468, %v6461, %v6358
        %v6495 = vsel %vm6468, %v6462, %v6360
        %v6496 = vsel %vm6468, %v6463, %v6362
        %v6497 = vsel %vm6468, %v6464, %v6364
        %v6498 = vsel %vm6468, %v6465, %v6366
        %v6499 = vsel %vm6468, %v6466, %v6368
        %v6500 = vsel %vm6468, %v6467, %v6370
        %v6501 = vpack.c.bf16 %v6470, %v6469
        %v6502 = vpack.c.bf16 %v6472, %v6471
        %v6503 = vpack.c.bf16 %v6474, %v6473
        %v6504 = vpack.c.bf16 %v6476, %v6475
        %v6505 = vpack.c.bf16 %v6478, %v6477
        %v6506 = vpack.c.bf16 %v6480, %v6479
        %v6507 = vpack.c.bf16 %v6482, %v6481
        %v6508 = vpack.c.bf16 %v6484, %v6483
        %v6509 = vpack.c.bf16 %v6486, %v6485
        %v6510 = vpack.c.bf16 %v6488, %v6487
        %v6511 = vpack.c.bf16 %v6490, %v6489
        %v6512 = vpack.c.bf16 %v6492, %v6491
        %v6513 = vpack.c.bf16 %v6494, %v6493
        %v6514 = vpack.c.bf16 %v6496, %v6495
        %v6515 = vpack.c.bf16 %v6498, %v6497
        %v6516 = vpack.c.bf16 %v6500, %v6499
        %v6517 = vld [vmem:[%s5] sm:$0xf]
        %v6518 = vld [vmem:[%s5 + $0x4] sm:$0xf]
        %v6519 = vld [vmem:[%s5 + $0x8] sm:$0xf]
        %v6520 = vld [vmem:[%s5 + $0xc] sm:$0xf]
        %v6521 = vld [vmem:[%s6] sm:$0x1]
        %v6523 = vlaneseq
        %v6524 = vshrl.u32 %v6523, 7
        %v6525 = vsub.s32 0, %v6524
        %v6526 = vrot.slane %v6521, %v6525
        %v6532 = vunpack.c.l.b16 %v6517
        %v6533 = vunpack.c.l.b16 %v6518
        %v6534 = vunpack.c.l.b16 %v6519
        %v6535 = vunpack.c.l.b16 %v6520
        %v6536 = vpack.c.b16 %v6533, %v6532
        %v6537 = vpack.c.b16 %v6535, %v6534
        %v6541 = vsel %vm377, %v6501, 0
        %v6544 = vsel %vm377, %v6502, 0
        %v6547 = vsel %vm377, %v6503, 0
        %v6550 = vsel %vm377, %v6504, 0
        %v6553 = vsel %vm377, %v6505, 0
        %v6556 = vsel %vm377, %v6506, 0
        %v6559 = vsel %vm377, %v6507, 0
        %v6562 = vsel %vm377, %v6508, 0
        %v6565 = vsel %vm377, %v6509, 0
        %v6568 = vsel %vm377, %v6510, 0
        %v6571 = vsel %vm377, %v6511, 0
        %v6574 = vsel %vm377, %v6512, 0
        %v6577 = vsel %vm377, %v6513, 0
        %v6580 = vsel %vm377, %v6514, 0
        %v6583 = vsel %vm377, %v6515, 0
        %v6586 = vsel %vm377, %v6516, 0
        %6588 = vmatprep.subr.bf16.mxu0 0
        %6589 = vmatpush1.bf16.msra.mxu0 %v6536
        %6590 = vmatprep.subr.bf16.mxu0 0
        %6591 = vmatpush1.bf16.msra.mxu0 %v6537
        %6592 = vmatprep.subr.bf16.mxu0 0
        %6593 = vmatpush1.bf16.msra.mxu0 0
        %6594 = vmatprep.subr.bf16.mxu0 0
        %6595 = vmatpush1.bf16.msra.mxu0 0
        %6596 = vmatprep.subr.bf16.mxu0 0
        %6597 = vmatpush1.bf16.msra.mxu0 0
        %6598 = vmatprep.subr.bf16.mxu0 0
        %6599 = vmatpush1.bf16.msra.mxu0 0
        %6600 = vmatprep.subr.bf16.mxu0 0
        %6601 = vmatpush1.bf16.msra.mxu0 0
        %6602 = vmatprep.subr.bf16.mxu0 0
        %6603 = vmatpush1.bf16.msra.mxu0 0
        %6604 = vmatprep.subr.bf16.mxu0 0
        %6605 = vmatpush1.bf16.msra.mxu0 0
        %6606 = vmatprep.subr.bf16.mxu0 0
        %6607 = vmatpush1.bf16.msra.mxu0 0
        %6608 = vmatprep.subr.bf16.mxu0 0
        %6609 = vmatpush1.bf16.msra.mxu0 0
        %6610 = vmatprep.subr.bf16.mxu0 0
        %6611 = vmatpush1.bf16.msra.mxu0 0
        %6612 = vmatprep.subr.bf16.mxu0 0
        %6613 = vmatpush1.bf16.msra.mxu0 0
        %6614 = vmatprep.subr.bf16.mxu0 0
        %6615 = vmatpush1.bf16.msra.mxu0 0
        %6616 = vmatprep.subr.bf16.mxu0 0
        %6617 = vmatpush1.bf16.msra.mxu0 0
        %6618 = vmatprep.subr.bf16.mxu0 0
        %6619 = vmatpush1.bf16.msra.mxu0 0
        %6620 = vmatprep.mubr.bf16.mxu0 0
        %6621 = vmatmul.mubr.bf16.gmra.mrb[0].mxu0 %v6541
        %v6622 = vpop.f32.mrb[0].mxu0
        %v6623 = vadd.f32 %v6526, %v6622
        %v6624 = vpop.f32.mrb[0].mxu0
        %v6625 = vpop.f32.mrb[0].mxu0
        %v6626 = vadd.f32 %v6526, %v6625
        %v6627 = vpop.f32.mrb[0].mxu0
        %6628 = vmatprep.mubr.bf16.mxu0 0
        %6629 = vmatmul.mubr.bf16.gmra.mrb[0].mxu0 %v6544
        %v6630 = vpop.f32.mrb[0].mxu0
        %v6631 = vadd.f32 %v6526, %v6630
        %v6632 = vpop.f32.mrb[0].mxu0
        %v6633 = vpop.f32.mrb[0].mxu0
        %v6634 = vadd.f32 %v6526, %v6633
        %v6635 = vpop.f32.mrb[0].mxu0
        %6636 = vmatprep.mubr.bf16.mxu0 0
        %6637 = vmatmul.mubr.bf16.gmra.mrb[0].mxu0 %v6547
        %v6638 = vpop.f32.mrb[0].mxu0
        %v6639 = vadd.f32 %v6526, %v6638
        %v6640 = vpop.f32.mrb[0].mxu0
        %v6641 = vpop.f32.mrb[0].mxu0
        %v6642 = vadd.f32 %v6526, %v6641
        %v6643 = vpop.f32.mrb[0].mxu0
        %6644 = vmatprep.mubr.bf16.mxu0 0
        %6645 = vmatmul.mubr.bf16.gmra.mrb[0].mxu0 %v6550
        %v6646 = vpop.f32.mrb[0].mxu0
        %v6647 = vadd.f32 %v6526, %v6646
        %v6648 = vpop.f32.mrb[0].mxu0
        %v6649 = vpop.f32.mrb[0].mxu0
        %v6650 = vadd.f32 %v6526, %v6649
        %v6651 = vpop.f32.mrb[0].mxu0
        %6652 = vmatprep.mubr.bf16.mxu0 0
        %6653 = vmatmul.mubr.bf16.gmra.mrb[0].mxu0 %v6553
        %v6654 = vpop.f32.mrb[0].mxu0
        %v6655 = vadd.f32 %v6526, %v6654
        %v6656 = vpop.f32.mrb[0].mxu0
        %v6657 = vpop.f32.mrb[0].mxu0
        %v6658 = vadd.f32 %v6526, %v6657
        %v6659 = vpop.f32.mrb[0].mxu0
        %6660 = vmatprep.mubr.bf16.mxu0 0
        %6661 = vmatmul.mubr.bf16.gmra.mrb[0].mxu0 %v6556
        %v6662 = vpop.f32.mrb[0].mxu0
        %v6663 = vadd.f32 %v6526, %v6662
        %v6664 = vpop.f32.mrb[0].mxu0
        %v6665 = vpop.f32.mrb[0].mxu0
        %v6666 = vadd.f32 %v6526, %v6665
        %v6667 = vpop.f32.mrb[0].mxu0
        %6668 = vmatprep.mubr.bf16.mxu0 0
        %6669 = vmatmul.mubr.bf16.gmra.mrb[0].mxu0 %v6559
        %v6670 = vpop.f32.mrb[0].mxu0
        %v6671 = vadd.f32 %v6526, %v6670
        %v6672 = vpop.f32.mrb[0].mxu0
        %v6673 = vpop.f32.mrb[0].mxu0
        %v6674 = vadd.f32 %v6526, %v6673
        %v6675 = vpop.f32.mrb[0].mxu0
        %6676 = vmatprep.mubr.bf16.mxu0 0
        %6677 = vmatmul.mubr.bf16.gmra.mrb[0].mxu0 %v6562
        %v6678 = vpop.f32.mrb[0].mxu0
        %v6679 = vadd.f32 %v6526, %v6678
        %v6680 = vpop.f32.mrb[0].mxu0
        %v6681 = vpop.f32.mrb[0].mxu0
        %v6682 = vadd.f32 %v6526, %v6681
        %v6683 = vpop.f32.mrb[0].mxu0
        %6684 = vmatprep.mubr.bf16.mxu0 0
        %6685 = vmatmul.mubr.bf16.gmra.mrb[0].mxu0 %v6565
        %v6686 = vpop.f32.mrb[0].mxu0
        %v6687 = vadd.f32 %v6526, %v6686
        %v6688 = vpop.f32.mrb[0].mxu0
        %v6689 = vpop.f32.mrb[0].mxu0
        %v6690 = vadd.f32 %v6526, %v6689
        %v6691 = vpop.f32.mrb[0].mxu0
        %6692 = vmatprep.mubr.bf16.mxu0 0
        %6693 = vmatmul.mubr.bf16.gmra.mrb[0].mxu0 %v6568
        %v6694 = vpop.f32.mrb[0].mxu0
        %v6695 = vadd.f32 %v6526, %v6694
        %v6696 = vpop.f32.mrb[0].mxu0
        %v6697 = vpop.f32.mrb[0].mxu0
        %v6698 = vadd.f32 %v6526, %v6697
        %v6699 = vpop.f32.mrb[0].mxu0
        %6700 = vmatprep.mubr.bf16.mxu0 0
        %6701 = vmatmul.mubr.bf16.gmra.mrb[0].mxu0 %v6571
        %v6702 = vpop.f32.mrb[0].mxu0
        %v6703 = vadd.f32 %v6526, %v6702
        %v6704 = vpop.f32.mrb[0].mxu0
        %v6705 = vpop.f32.mrb[0].mxu0
        %v6706 = vadd.f32 %v6526, %v6705
        %v6707 = vpop.f32.mrb[0].mxu0
        %6708 = vmatprep.mubr.bf16.mxu0 0
        %6709 = vmatmul.mubr.bf16.gmra.mrb[0].mxu0 %v6574
        %v6710 = vpop.f32.mrb[0].mxu0
        %v6711 = vadd.f32 %v6526, %v6710
        %v6712 = vpop.f32.mrb[0].mxu0
        %v6713 = vpop.f32.mrb[0].mxu0
        %v6714 = vadd.f32 %v6526, %v6713
        %v6715 = vpop.f32.mrb[0].mxu0
        %6716 = vmatprep.mubr.bf16.mxu0 0
        %6717 = vmatmul.mubr.bf16.gmra.mrb[0].mxu0 %v6577
        %v6718 = vpop.f32.mrb[0].mxu0
        %v6719 = vadd.f32 %v6526, %v6718
        %v6720 = vpop.f32.mrb[0].mxu0
        %v6721 = vpop.f32.mrb[0].mxu0
        %v6722 = vadd.f32 %v6526, %v6721
        %v6723 = vpop.f32.mrb[0].mxu0
        %6724 = vmatprep.mubr.bf16.mxu0 0
        %6725 = vmatmul.mubr.bf16.gmra.mrb[0].mxu0 %v6580
        %v6726 = vpop.f32.mrb[0].mxu0
        %v6727 = vadd.f32 %v6526, %v6726
        %v6728 = vpop.f32.mrb[0].mxu0
        %v6729 = vpop.f32.mrb[0].mxu0
        %v6730 = vadd.f32 %v6526, %v6729
        %v6731 = vpop.f32.mrb[0].mxu0
        %6732 = vmatprep.mubr.bf16.mxu0 0
        %6733 = vmatmul.mubr.bf16.gmra.mrb[0].mxu0 %v6583
        %v6734 = vpop.f32.mrb[0].mxu0
        %v6735 = vadd.f32 %v6526, %v6734
        %v6736 = vpop.f32.mrb[0].mxu0
        %v6737 = vpop.f32.mrb[0].mxu0
        %v6738 = vadd.f32 %v6526, %v6737
        %v6739 = vpop.f32.mrb[0].mxu0
        %6740 = vmatprep.mubr.bf16.mxu0 0
        %6741 = vmatmul.mubr.bf16.gmra.mrb[0].mxu0 %v6586
        %v6742 = vpop.f32.mrb[0].mxu0
        %v6743 = vadd.f32 %v6526, %v6742
        %v6744 = vpop.f32.mrb[0].mxu0
        %v6745 = vpop.f32.mrb[0].mxu0
        %v6746 = vadd.f32 %v6526, %v6745
        %v6747 = vpop.f32.mrb[0].mxu0
        %6748 = vdwg.mxu0
        %6749 = vst.msk [vmem:[%s341] sm:$0xff] %vm377, %v6623
        %6750 = vst.msk [vmem:[%s341 + $0x8] sm:$0xff] %vm377, %v6626
        %6751 = vst.msk [vmem:[%s341 + $0x10] sm:$0xff] %vm377, %v6631
        %6752 = vst.msk [vmem:[%s341 + $0x18] sm:$0xff] %vm377, %v6634
        %6753 = vst.msk [vmem:[%s341 + $0x20] sm:$0xff] %vm377, %v6639
        %6754 = vst.msk [vmem:[%s341 + $0x28] sm:$0xff] %vm377, %v6642
        %6755 = vst.msk [vmem:[%s341 + $0x30] sm:$0xff] %vm377, %v6647
        %6756 = vst.msk [vmem:[%s341 + $0x38] sm:$0xff] %vm377, %v6650
        %6757 = vst.msk [vmem:[%s341 + $0x40] sm:$0xff] %vm377, %v6655
        %6758 = vst.msk [vmem:[%s341 + $0x48] sm:$0xff] %vm377, %v6658
        %6759 = vst.msk [vmem:[%s341 + $0x50] sm:$0xff] %vm377, %v6663
        %6760 = vst.msk [vmem:[%s341 + $0x58] sm:$0xff] %vm377, %v6666
        %6761 = vst.msk [vmem:[%s341 + $0x60] sm:$0xff] %vm377, %v6671
        %6762 = vst.msk [vmem:[%s341 + $0x68] sm:$0xff] %vm377, %v6674
        %6763 = vst.msk [vmem:[%s341 + $0x70] sm:$0xff] %vm377, %v6679
        %6764 = vst.msk [vmem:[%s341 + $0x78] sm:$0xff] %vm377, %v6682
        %6765 = vst.msk [vmem:[%s341 + $0x80] sm:$0xff] %vm377, %v6687
        %6766 = vst.msk [vmem:[%s341 + $0x88] sm:$0xff] %vm377, %v6690
        %6767 = vst.msk [vmem:[%s341 + $0x90] sm:$0xff] %vm377, %v6695
        %6768 = vst.msk [vmem:[%s341 + $0x98] sm:$0xff] %vm377, %v6698
        %6769 = vst.msk [vmem:[%s341 + $0xa0] sm:$0xff] %vm377, %v6703
        %6770 = vst.msk [vmem:[%s341 + $0xa8] sm:$0xff] %vm377, %v6706
        %6771 = vst.msk [vmem:[%s341 + $0xb0] sm:$0xff] %vm377, %v6711
        %6772 = vst.msk [vmem:[%s341 + $0xb8] sm:$0xff] %vm377, %v6714
        %6773 = vst.msk [vmem:[%s341 + $0xc0] sm:$0xff] %vm377, %v6719
        %6774 = vst.msk [vmem:[%s341 + $0xc8] sm:$0xff] %vm377, %v6722
        %6775 = vst.msk [vmem:[%s341 + $0xd0] sm:$0xff] %vm377, %v6727
        %6776 = vst.msk [vmem:[%s341 + $0xd8] sm:$0xff] %vm377, %v6730
        %6777 = vst.msk [vmem:[%s341 + $0xe0] sm:$0xff] %vm377, %v6735
        %6778 = vst.msk [vmem:[%s341 + $0xe8] sm:$0xff] %vm377, %v6738
        %6779 = vst.msk [vmem:[%s341 + $0xf0] sm:$0xff] %vm377, %v6743
        %6780 = vst.msk [vmem:[%s341 + $0xf8] sm:$0xff] %vm377, %v6746
        %s6781 = sand.u32 %s201, 1
        %s6782 = scalar_lea.sflag [#allocation4], %s6781
        %s6783 = sand.u32 %s201, 1
        %s6784 = smul.addr %s6783, 256
        %s6785 = scalar_lea.vmem [#allocation8], %s6784
        // Predicated region
        $region61: #{tpu_custom_call.1} parent=47 // pred_check
          %p6786 = pneg %p211
        $region62: #{tpu_custom_call.1} parent=47 // pred_check_branch
          %6788 = sbr.rel (%p6786) target = $region64
        $region63: #{tpu_custom_call.1} parent=47 // pred_region
          %s6789 = smul.u32 32, %s29
          %s6791 = ssub.s32 4096, 4096
          %6792 = vsyncadd %s6782, %s6791
          %s6793 = smul.addr %s6789, 2
          %s6794 = sadd.s32 %s30, %s6793
          %s6795 = smul.addr %s6794, 128
          %s6796 = scalar_lea.hbm %s7, %s6795
          %s6797 = sshll.u32 %s6785, 4
          %s6798 = int_to_ptr.vmem [resolvable:$true] %s6797
          %6803 = dma.vmem_to_hbm [thread:$0]  %s6798, 4096, %s6796, %s6782, 128, 256, 8
        $region64: #{tpu_custom_call.1} parent=47 // pred_fallthru
          _
      $region48: #{tpu_custom_call.1} parent=5 // pred_fallthru
        _
      %p6804 = scmp.le.s32.totalorder 2, %s20
      // Predicated region
      $region65: #{tpu_custom_call.1} parent=5 // pred_check
        %p6805 = pneg %p6804
      $region66: #{tpu_custom_call.1} parent=5 // pred_check_branch
        %6807 = sbr.rel (%p6805) target = $region68
      $region67: #{tpu_custom_call.1} parent=5 // pred_region
        %s6808 = ssub.s32 %s20, 2
        // Predicated region
        $region69: #{tpu_custom_call.1} parent=67 // pred_check
          %p6809 = pneg %p217
        $region70: #{tpu_custom_call.1} parent=67 // pred_check_branch
          %6811 = sbr.rel (%p6809) target = $region72
        $region71: #{tpu_custom_call.1} parent=67 // pred_region
          %s6812 = sand.u32 %s202, 1
          %s6813 = scalar_lea.sflag [#allocation4], %s6812
          %s6814 = sand.u32 %s202, 1
          %s6815 = smul.addr %s6814, 256
          %s6816 = scalar_lea.vmem [#allocation8], %s6815
          %6817 = dma.done %s6813, 4096
        $region72: #{tpu_custom_call.1} parent=67 // pred_fallthru
          _
      $region68: #{tpu_custom_call.1} parent=5 // pred_fallthru
        _
    $region6: #{tpu_custom_call.1} parent=1 // loop_footer
      %s24 = sadd.s32 1, %s20
    $region7: #{tpu_custom_call.1} parent=1 // loop_footer_branch
      %19 = sbr.rel target = $region3
    $region8: #{tpu_custom_call.1} parent=1 // loop_exit
      _
    %6818 = vsyncpa [#allocation3], 1
    %s6819 = scalar_lea.sflag [#allocation3], 1
    %6820 = vsyncpa %s6819, 1
    %6821 = vsyncpa [#allocation6], 1
    %6822 = vsyncpa [#allocation4], 1
    %s6823 = scalar_lea.sflag [#allocation4], 1
    %6824 = vsyncpa %s6823, 1

</llo_original>
